<compile_context>
chip_gen: v7x
topology: tpu7x:2x2x1
jax: 0.10.0
libtpu: 0.0.40
codegen_flags: <defaults>
</compile_context>

<pallas_src>
import math

import jax
import jax.numpy as jnp
from jax.experimental import pallas as pl
from jax.experimental.pallas import tpu as pltpu


def transformer_block(x, params, num_heads, batch_tile=None):
    """x: (B, S, D) float32.  params: PyTorch-layout weights of `Block`."""
    (Wq, bq, Wk, bk, Wv, bv, g1, be1, W1, b1, W2, b2, g2, be2) = params
    B, S, D = x.shape
    H = num_heads
    Dh = D // H
    Dff = W1.shape[0]
    scale = 1.0 / math.sqrt(Dh)
    eps = 1e-5  # PyTorch nn.LayerNorm default

    # Batch elements fused per grid step: small S -> fuse several batches so the
    # QKV/FFN matmuls present ~128 rows to the MXU; large S -> one batch per step
    # so the grid stays "parallel" across TensorCores (v7x).
    if batch_tile is None:
        batch_tile = max(1, min(B, max(1, 128 // S)))
        while B % batch_tile:
            batch_tile -= 1
    bt = batch_tile
    Tm = bt * S                    # matmul rows per grid step
    grid = (B // bt,)

    # ---- host-side weight packing (tiny, one-time) -------------------------
    # nn.Linear: y = x @ W.T + b  ->  pre-transpose.  Fold 1/sqrt(Dh) into the Q
    # columns + bq.  Matmul weights in bf16 (MXU-native); biases / LN params f32.
    Wqkv = jnp.concatenate([Wq.T * scale, Wk.T, Wv.T], axis=1).astype(jnp.bfloat16)  # (D, 3D)
    bqkv = jnp.concatenate([bq * scale, bk, bv]).reshape(1, 3 * D).astype(jnp.float32)
    W1t = W1.T.astype(jnp.bfloat16)                       # (D, Dff)
    W2t = W2.T.astype(jnp.bfloat16)                       # (Dff, D)
    b1r = b1.reshape(1, Dff).astype(jnp.float32)
    b2r = b2.reshape(1, D).astype(jnp.float32)
    g1r, be1r = g1.reshape(1, D), be1.reshape(1, D)
    g2r, be2r = g2.reshape(1, D), be2.reshape(1, D)

    # Flatten tokens: lane/sublane-dense (B*S, D) slabs for input and output.
    x2d = x.reshape(B * S, D)

    def kernel(x_ref, wqkv_ref, bqkv_ref, g1_ref, be1_ref,
               w1_ref, b1_ref, w2_ref, b2_ref, g2_ref, be2_ref,
               o_ref, attn_ref):
        xb = x_ref[...]                                    # (Tm, D) f32

        # Fused QKV projection over all bt*S rows: bf16 operands, f32 accumulate.
        qkv = jnp.dot(xb.astype(jnp.bfloat16), wqkv_ref[...],
                      preferred_element_type=jnp.float32) + bqkv_ref[...]   # (Tm, 3D)

        # Per-(sub-batch, head) attention; softmax stats in f32; each head's
        # normalized output is written straight into the (Tm, D) scratch slab.
        for b in range(bt):
            r0 = b * S
            for h in range(H):
                c0 = h * Dh
                qh = qkv[r0:r0 + S, c0:c0 + Dh].astype(jnp.bfloat16)
                kh = qkv[r0:r0 + S, D + c0:D + c0 + Dh].astype(jnp.bfloat16)
                vh = qkv[r0:r0 + S, 2 * D + c0:2 * D + c0 + Dh].astype(jnp.bfloat16)
                # scores = qh @ kh.T  (1/sqrt(Dh) already folded into Q weights)
                s = jax.lax.dot_general(qh, kh, (((1,), (1,)), ((), ())),
                                        preferred_element_type=jnp.float32)  # (S, S)
                m = jnp.max(s, axis=-1, keepdims=True)
                e = jnp.exp(s - m)                          # f32
                denom = jnp.sum(e, axis=-1, keepdims=True)
                oh = jnp.dot(e.astype(jnp.bfloat16), vh,
                             preferred_element_type=jnp.float32)             # (S, Dh)
                # normalize after PV: EUP reciprocal (free slot), S*Dh VPU muls
                attn_ref[r0:r0 + S, c0:c0 + Dh] = oh * pl.reciprocal(denom, approx=True)

        attn = attn_ref[...]                                # (Tm, D) f32

        def layer_norm(t, g, be):
            mu = jnp.mean(t, axis=-1, keepdims=True)
            var = jnp.mean(jnp.square(t - mu), axis=-1, keepdims=True)
            return (t - mu) * jax.lax.rsqrt(var + eps) * g + be

        # AddNorm1 (f32)
        y = layer_norm(attn + xb, g1_ref[...], be1_ref[...])                 # (Tm, D)

        # PositionWiseFFN: bf16 matmul operands, f32 accumulate / bias / relu
        h1 = jnp.dot(y.astype(jnp.bfloat16), w1_ref[...],
                     preferred_element_type=jnp.float32) + b1_ref[...]
        h1 = jnp.maximum(h1, 0.0)                                            # (Tm, Dff)
        f = jnp.dot(h1.astype(jnp.bfloat16), w2_ref[...],
                    preferred_element_type=jnp.float32) + b2_ref[...]

        # AddNorm2 -> single lane/sublane-dense (Tm, D) store
        o_ref[...] = layer_norm(f + y, g2_ref[...], be2_ref[...]).astype(o_ref.dtype)

    # ---- advisory cost estimate ---------------------------------------------
    flops = int(2 * B * S * D * 3 * D            # fused QKV projection
                + 4 * B * H * S * S * Dh         # scores + PV
                + 4 * B * S * D * Dff)           # FFN
    transcendentals = int(B * H * S * S + 2 * B * S)        # exp + rsqrt
    bytes_accessed = int(4 * 2 * B * S * D                   # x + out (f32)
                         + 2 * (Wqkv.size + W1t.size + W2t.size)   # bf16 weights
                         + 4 * (bqkv.size + b1r.size + b2r.size + 4 * D))
    cost = pl.CostEstimate(flops=flops, transcendentals=transcendentals,
                           bytes_accessed=bytes_accessed)

    # ---- explicit scoped-VMEM budget (working set + headroom, per-chip cap) --
    weight_bytes = 2 * 2 * (Wqkv.size + W1t.size + W2t.size)       # bf16, <=2 bufs
    io_bytes = 2 * 2 * 4 * Tm * D                                   # x/out tiles, 2 bufs
    act_bytes = 4 * (Tm * 3 * D + Tm * Dff + 2 * S * S + Tm * D)    # qkv, h1, scores, scratch
    small_bytes = 2 * 4 * (3 * D + Dff + 5 * D)                     # biases + LN params
    working = weight_bytes + io_bytes + act_bytes + small_bytes
    try:
        phys_vmem = pltpu.get_tpu_info().vmem_capacity_bytes        # 128 MiB v5e/v6e, 64 MiB v7x
    except Exception:
        phys_vmem = 64 << 20                                        # conservative (v7x)
    vmem_limit = int(min(max(4 * working, 32 << 20), int(phys_vmem * 0.75)))

    out_shape = jax.ShapeDtypeStruct((B * S, D), x.dtype)

    def run(weight_pipeline_mode):
        def resident(shape):
            # full-extent block, constant index map -> DMA'd once, stays in VMEM
            return pl.BlockSpec(shape, lambda i: (0, 0),
                                pipeline_mode=weight_pipeline_mode)

        in_specs = [
            pl.BlockSpec((Tm, D), lambda i: (i, 0)),        # x rows
            resident((D, 3 * D)), resident((1, 3 * D)),     # fused QKV W (bf16), b
            resident((1, D)), resident((1, D)),             # LN1 gamma, beta
            resident((D, Dff)), resident((1, Dff)),         # FFN W1 (bf16), b1
            resident((Dff, D)), resident((1, D)),           # FFN W2 (bf16), b2
            resident((1, D)), resident((1, D)),             # LN2 gamma, beta
        ]
        out_specs = pl.BlockSpec((Tm, D), lambda i: (i, 0))

        return pl.pallas_call(
            kernel,
            out_shape=out_shape,
            grid_spec=pltpu.PrefetchScalarGridSpec(
                num_scalar_prefetch=0,
                grid=grid,
                in_specs=in_specs,
                out_specs=out_specs,
                scratch_shapes=[pltpu.VMEM((Tm, D), jnp.float32)],
            ),
            compiler_params=pltpu.CompilerParams(
                dimension_semantics=("parallel",),
                vmem_limit_bytes=vmem_limit),
            cost_estimate=cost,
        )(x2d, Wqkv, bqkv, g1r, be1r, W1t, b1r, W2t, b2r, g2r, be2r)

    try:
        # Weights never change across the grid -> single-buffer them.
        out2d = run(pl.Buffered(1))
        jax.block_until_ready(out2d)
    except Exception:
        # Fallback if this JAX build rejects buffer_count=1: default double-buffer.
        out2d = run(None)

    return out2d.reshape(B, S, D)


def _block_reference(x, params, num_heads):
    """Pure-JAX f32 reference mirroring the PyTorch Block.forward exactly."""
    (Wq, bq, Wk, bk, Wv, bv, g1, be1, W1, b1, W2, b2, g2, be2) = params
    B, S, D = x.shape
    H = num_heads
    Dh = D // H

    def lin(W, b, t):
        return t @ W.T + b

    def tqkv(t):  # transpose_qkv
        t = t.reshape(B, S, H, Dh).transpose(0, 2, 1, 3)
        return t.reshape(B * H, S, Dh)

    q, k, v = tqkv(lin(Wq, bq, x)), tqkv(lin(Wk, bk, x)), tqkv(lin(Wv, bv, x))
    scores = jnp.einsum("bqd,bkd->bqk", q, k) / math.sqrt(Dh)
    attn = jax.nn.softmax(scores, axis=-1)
    o = jnp.einsum("bqk,bkd->bqd", attn, v)
    o = o.reshape(B, H, S, Dh).transpose(0, 2, 1, 3).reshape(B, S, D)  # transpose_output

    def ln(t, g, b, eps=1e-5):
        mu = t.mean(-1, keepdims=True)
        var = ((t - mu) ** 2).mean(-1, keepdims=True)
        return (t - mu) / jnp.sqrt(var + eps) * g + b

    y = ln(o + x, g1, be1)                                  # AddNorm1
    f = jnp.maximum(y @ W1.T + b1, 0.0) @ W2.T + b2         # FFN
    return ln(f + y, g2, be2)                               # AddNorm2


if __name__ == "__main__":
    # Small shapes consistent with Block(input_dim=32, output_dim=32, num_heads=4)
    B, S, D, H = 2, 8, 32, 4
    Dff = 4 * D

    key = jax.random.PRNGKey(0)
    ks = jax.random.split(key, 15)
    x = jax.random.normal(ks[0], (B, S, D), dtype=jnp.float32)

    def lin_init(kw, kb, out_dim, in_dim):
        bound = 1.0 / math.sqrt(in_dim)
        W = jax.random.uniform(kw, (out_dim, in_dim), jnp.float32, -bound, bound)
        b = jax.random.uniform(kb, (out_dim,), jnp.float32, -bound, bound)
        return W, b

    Wq, bq = lin_init(ks[1], ks[2], D, D)
    Wk, bk = lin_init(ks[3], ks[4], D, D)
    Wv, bv = lin_init(ks[5], ks[6], D, D)
    W1, b1 = lin_init(ks[7], ks[8], Dff, D)
    W2, b2 = lin_init(ks[9], ks[10], D, Dff)
    # non-trivial LayerNorm affine params to exercise them
    g1 = 1.0 + 0.1 * jax.random.normal(ks[11], (D,), jnp.float32)
    be1 = 0.1 * jax.random.normal(ks[12], (D,), jnp.float32)
    g2 = 1.0 + 0.1 * jax.random.normal(ks[13], (D,), jnp.float32)
    be2 = 0.1 * jax.random.normal(ks[14], (D,), jnp.float32)
    # Note: W_o of MultiHeadAttention is never used in the PyTorch forward.

    params = (Wq, bq, Wk, bk, Wv, bv, g1, be1, W1, b1, W2, b2, g2, be2)

    out = transformer_block(x, params, H)
    out = jax.block_until_ready(out)

    ref = _block_reference(x, params, H)
    assert out.shape == (B, S, D)
    # Tolerance reflects bf16 MXU operands (f32 accumulation, f32 softmax/LN stats)
    # plus the EUP approximate reciprocal in the softmax denominator.
    assert jnp.allclose(out, ref, atol=5e-2, rtol=5e-2), "mismatch vs reference"

    print("KERNEL_OK")
</pallas_src>

<mosaic_0001>
module attributes {stable_mosaic.version = 11 : i64} {
  func.func @kernel(%arg0: i32, %arg1: memref<16x32xf32, #tpu.memory_space<vmem>>, %arg2: memref<32x96xbf16, #tpu.memory_space<vmem>>, %arg3: memref<1x96xf32, #tpu.memory_space<vmem>>, %arg4: memref<1x32xf32, #tpu.memory_space<vmem>>, %arg5: memref<1x32xf32, #tpu.memory_space<vmem>>, %arg6: memref<32x128xbf16, #tpu.memory_space<vmem>>, %arg7: memref<1x128xf32, #tpu.memory_space<vmem>>, %arg8: memref<128x32xbf16, #tpu.memory_space<vmem>>, %arg9: memref<1x32xf32, #tpu.memory_space<vmem>>, %arg10: memref<1x32xf32, #tpu.memory_space<vmem>>, %arg11: memref<1x32xf32, #tpu.memory_space<vmem>>, %arg12: memref<16x32xf32, #tpu.memory_space<vmem>>, %arg13: memref<16x32xf32, #tpu.memory_space<vmem>>) attributes {dimension_semantics = [#tpu.dimension_semantics<parallel>], iteration_bounds = array<i64: 1>, scalar_prefetch = 0 : i64, scratch_operands = 1 : i64, tpu.core_type = #tpu.core_type<tc>, window_params = [{transform_indices = @transform_0, window_bounds = array<i64: 16, 32>}, {pipeline_mode = #tpu.pipeline_mode<synchronous>, transform_indices = @transform_1, window_bounds = array<i64: 32, 96>}, {pipeline_mode = #tpu.pipeline_mode<synchronous>, transform_indices = @transform_2, window_bounds = array<i64: 1, 96>}, {pipeline_mode = #tpu.pipeline_mode<synchronous>, transform_indices = @transform_3, window_bounds = array<i64: 1, 32>}, {pipeline_mode = #tpu.pipeline_mode<synchronous>, transform_indices = @transform_4, window_bounds = array<i64: 1, 32>}, {pipeline_mode = #tpu.pipeline_mode<synchronous>, transform_indices = @transform_5, window_bounds = array<i64: 32, 128>}, {pipeline_mode = #tpu.pipeline_mode<synchronous>, transform_indices = @transform_6, window_bounds = array<i64: 1, 128>}, {pipeline_mode = #tpu.pipeline_mode<synchronous>, transform_indices = @transform_7, window_bounds = array<i64: 128, 32>}, {pipeline_mode = #tpu.pipeline_mode<synchronous>, transform_indices = @transform_8, window_bounds = array<i64: 1, 32>}, {pipeline_mode = #tpu.pipeline_mode<synchronous>, transform_indices = @transform_9, window_bounds = array<i64: 1, 32>}, {pipeline_mode = #tpu.pipeline_mode<synchronous>, transform_indices = @transform_10, window_bounds = array<i64: 1, 32>}, {transform_indices = @transform_11, window_bounds = array<i64: 16, 32>}]} {
    %c0 = arith.constant 0 : index
    %c0_0 = arith.constant 0 : index
    %0 = vector.load %arg1[%c0, %c0_0] : memref<16x32xf32, #tpu.memory_space<vmem>>, vector<16x32xf32>
    %1 = arith.truncf %0 : vector<16x32xf32> to vector<16x32xbf16>
    %c0_1 = arith.constant 0 : index
    %c0_2 = arith.constant 0 : index
    %2 = vector.load %arg2[%c0_1, %c0_2] : memref<32x96xbf16, #tpu.memory_space<vmem>>, vector<32x96xbf16>
    %cst = arith.constant dense<0.000000e+00> : vector<16x96xf32>
    %3 = tpu.matmul %1, %2, %cst {dimension_numbers = #tpu.dot_dimension_numbers<[1], [0], [0], [1], [0, 0, 1, 1], [], []>} : vector<16x32xbf16>, vector<32x96xbf16>, vector<16x96xf32> -> vector<16x96xf32>
    %c0_3 = arith.constant 0 : index
    %c0_4 = arith.constant 0 : index
    %4 = vector.load %arg3[%c0_3, %c0_4] : memref<1x96xf32, #tpu.memory_space<vmem>>, vector<1x96xf32>
    %5 = vector.broadcast %4 : vector<1x96xf32> to vector<16x96xf32>
    %6 = arith.addf %3, %5 : vector<16x96xf32>
    %7 = vector.extract_strided_slice %6 {offsets = [0, 0], sizes = [8, 8], strides = [1, 1]} : vector<16x96xf32> to vector<8x8xf32>
    %8 = arith.truncf %7 : vector<8x8xf32> to vector<8x8xbf16>
    %9 = vector.extract_strided_slice %6 {offsets = [0, 32], sizes = [8, 8], strides = [1, 1]} : vector<16x96xf32> to vector<8x8xf32>
    %10 = arith.truncf %9 : vector<8x8xf32> to vector<8x8xbf16>
    %11 = vector.extract_strided_slice %6 {offsets = [0, 64], sizes = [8, 8], strides = [1, 1]} : vector<16x96xf32> to vector<8x8xf32>
    %12 = arith.truncf %11 : vector<8x8xf32> to vector<8x8xbf16>
    %cst_5 = arith.constant dense<0.000000e+00> : vector<8x8xf32>
    %13 = tpu.matmul %8, %10, %cst_5 {dimension_numbers = #tpu.dot_dimension_numbers<[1], [1], [0], [0], [0, 0, 1, 0], [], []>} : vector<8x8xbf16>, vector<8x8xbf16>, vector<8x8xf32> -> vector<8x8xf32>
    %cst_6 = arith.constant dense<0xFF800000> : vector<8xf32>
    %14 = vector.multi_reduction <maximumf>, %13, %cst_6 [1] : vector<8x8xf32> to vector<8xf32>
    %15 = vector.shape_cast %14 : vector<8xf32> to vector<8x1xf32>
    %16 = vector.broadcast %15 : vector<8x1xf32> to vector<8x8xf32>
    %17 = arith.subf %13, %16 : vector<8x8xf32>
    %18 = math.exp %17 : vector<8x8xf32>
    %cst_7 = arith.constant dense<0.000000e+00> : vector<8xf32>
    %19 = vector.multi_reduction <add>, %18, %cst_7 [1] : vector<8x8xf32> to vector<8xf32>
    %20 = vector.shape_cast %19 : vector<8xf32> to vector<8x1xf32>
    %21 = arith.truncf %18 : vector<8x8xf32> to vector<8x8xbf16>
    %cst_8 = arith.constant dense<0.000000e+00> : vector<8x8xf32>
    %22 = tpu.matmul %21, %12, %cst_8 {dimension_numbers = #tpu.dot_dimension_numbers<[1], [0], [0], [1], [0, 0, 1, 1], [], []>} : vector<8x8xbf16>, vector<8x8xbf16>, vector<8x8xf32> -> vector<8x8xf32>
    %23 = tpu.reciprocal %20 {approx = true} : vector<8x1xf32> -> vector<8x1xf32>
    %24 = vector.broadcast %23 : vector<8x1xf32> to vector<8x8xf32>
    %25 = arith.mulf %22, %24 : vector<8x8xf32>
    %c0_9 = arith.constant 0 : index
    %c0_10 = arith.constant 0 : index
    %26 = vector.load %arg13[%c0_9, %c0_10] : memref<16x32xf32, #tpu.memory_space<vmem>>, vector<8x8xf32>
    tpu.vector_store %arg13[%c0_9, %c0_10], %25 {strides = array<i32>} : memref<16x32xf32, #tpu.memory_space<vmem>>, vector<8x8xf32>,
    %27 = vector.extract_strided_slice %6 {offsets = [0, 8], sizes = [8, 8], strides = [1, 1]} : vector<16x96xf32> to vector<8x8xf32>
    %28 = arith.truncf %27 : vector<8x8xf32> to vector<8x8xbf16>
    %29 = vector.extract_strided_slice %6 {offsets = [0, 40], sizes = [8, 8], strides = [1, 1]} : vector<16x96xf32> to vector<8x8xf32>
    %30 = arith.truncf %29 : vector<8x8xf32> to vector<8x8xbf16>
    %31 = vector.extract_strided_slice %6 {offsets = [0, 72], sizes = [8, 8], strides = [1, 1]} : vector<16x96xf32> to vector<8x8xf32>
    %32 = arith.truncf %31 : vector<8x8xf32> to vector<8x8xbf16>
    %cst_11 = arith.constant dense<0.000000e+00> : vector<8x8xf32>
    %33 = tpu.matmul %28, %30, %cst_11 {dimension_numbers = #tpu.dot_dimension_numbers<[1], [1], [0], [0], [0, 0, 1, 0], [], []>} : vector<8x8xbf16>, vector<8x8xbf16>, vector<8x8xf32> -> vector<8x8xf32>
    %cst_12 = arith.constant dense<0xFF800000> : vector<8xf32>
    %34 = vector.multi_reduction <maximumf>, %33, %cst_12 [1] : vector<8x8xf32> to vector<8xf32>
    %35 = vector.shape_cast %34 : vector<8xf32> to vector<8x1xf32>
    %36 = vector.broadcast %35 : vector<8x1xf32> to vector<8x8xf32>
    %37 = arith.subf %33, %36 : vector<8x8xf32>
    %38 = math.exp %37 : vector<8x8xf32>
    %cst_13 = arith.constant dense<0.000000e+00> : vector<8xf32>
    %39 = vector.multi_reduction <add>, %38, %cst_13 [1] : vector<8x8xf32> to vector<8xf32>
    %40 = vector.shape_cast %39 : vector<8xf32> to vector<8x1xf32>
    %41 = arith.truncf %38 : vector<8x8xf32> to vector<8x8xbf16>
    %cst_14 = arith.constant dense<0.000000e+00> : vector<8x8xf32>
    %42 = tpu.matmul %41, %32, %cst_14 {dimension_numbers = #tpu.dot_dimension_numbers<[1], [0], [0], [1], [0, 0, 1, 1], [], []>} : vector<8x8xbf16>, vector<8x8xbf16>, vector<8x8xf32> -> vector<8x8xf32>
    %43 = tpu.reciprocal %40 {approx = true} : vector<8x1xf32> -> vector<8x1xf32>
    %44 = vector.broadcast %43 : vector<8x1xf32> to vector<8x8xf32>
    %45 = arith.mulf %42, %44 : vector<8x8xf32>
    %c0_15 = arith.constant 0 : index
    %c8 = arith.constant 8 : index
    %46 = vector.load %arg13[%c0_15, %c8] : memref<16x32xf32, #tpu.memory_space<vmem>>, vector<8x8xf32>
    tpu.vector_store %arg13[%c0_15, %c8], %45 {strides = array<i32>} : memref<16x32xf32, #tpu.memory_space<vmem>>, vector<8x8xf32>,
    %47 = vector.extract_strided_slice %6 {offsets = [0, 16], sizes = [8, 8], strides = [1, 1]} : vector<16x96xf32> to vector<8x8xf32>
    %48 = arith.truncf %47 : vector<8x8xf32> to vector<8x8xbf16>
    %49 = vector.extract_strided_slice %6 {offsets = [0, 48], sizes = [8, 8], strides = [1, 1]} : vector<16x96xf32> to vector<8x8xf32>
    %50 = arith.truncf %49 : vector<8x8xf32> to vector<8x8xbf16>
    %51 = vector.extract_strided_slice %6 {offsets = [0, 80], sizes = [8, 8], strides = [1, 1]} : vector<16x96xf32> to vector<8x8xf32>
    %52 = arith.truncf %51 : vector<8x8xf32> to vector<8x8xbf16>
    %cst_16 = arith.constant dense<0.000000e+00> : vector<8x8xf32>
    %53 = tpu.matmul %48, %50, %cst_16 {dimension_numbers = #tpu.dot_dimension_numbers<[1], [1], [0], [0], [0, 0, 1, 0], [], []>} : vector<8x8xbf16>, vector<8x8xbf16>, vector<8x8xf32> -> vector<8x8xf32>
    %cst_17 = arith.constant dense<0xFF800000> : vector<8xf32>
    %54 = vector.multi_reduction <maximumf>, %53, %cst_17 [1] : vector<8x8xf32> to vector<8xf32>
    %55 = vector.shape_cast %54 : vector<8xf32> to vector<8x1xf32>
    %56 = vector.broadcast %55 : vector<8x1xf32> to vector<8x8xf32>
    %57 = arith.subf %53, %56 : vector<8x8xf32>
    %58 = math.exp %57 : vector<8x8xf32>
    %cst_18 = arith.constant dense<0.000000e+00> : vector<8xf32>
    %59 = vector.multi_reduction <add>, %58, %cst_18 [1] : vector<8x8xf32> to vector<8xf32>
    %60 = vector.shape_cast %59 : vector<8xf32> to vector<8x1xf32>
    %61 = arith.truncf %58 : vector<8x8xf32> to vector<8x8xbf16>
    %cst_19 = arith.constant dense<0.000000e+00> : vector<8x8xf32>
    %62 = tpu.matmul %61, %52, %cst_19 {dimension_numbers = #tpu.dot_dimension_numbers<[1], [0], [0], [1], [0, 0, 1, 1], [], []>} : vector<8x8xbf16>, vector<8x8xbf16>, vector<8x8xf32> -> vector<8x8xf32>
    %63 = tpu.reciprocal %60 {approx = true} : vector<8x1xf32> -> vector<8x1xf32>
    %64 = vector.broadcast %63 : vector<8x1xf32> to vector<8x8xf32>
    %65 = arith.mulf %62, %64 : vector<8x8xf32>
    %c0_20 = arith.constant 0 : index
    %c16 = arith.constant 16 : index
    %66 = vector.load %arg13[%c0_20, %c16] : memref<16x32xf32, #tpu.memory_space<vmem>>, vector<8x8xf32>
    tpu.vector_store %arg13[%c0_20, %c16], %65 {strides = array<i32>} : memref<16x32xf32, #tpu.memory_space<vmem>>, vector<8x8xf32>,
    %67 = vector.extract_strided_slice %6 {offsets = [0, 24], sizes = [8, 8], strides = [1, 1]} : vector<16x96xf32> to vector<8x8xf32>
    %68 = arith.truncf %67 : vector<8x8xf32> to vector<8x8xbf16>
    %69 = vector.extract_strided_slice %6 {offsets = [0, 56], sizes = [8, 8], strides = [1, 1]} : vector<16x96xf32> to vector<8x8xf32>
    %70 = arith.truncf %69 : vector<8x8xf32> to vector<8x8xbf16>
    %71 = vector.extract_strided_slice %6 {offsets = [0, 88], sizes = [8, 8], strides = [1, 1]} : vector<16x96xf32> to vector<8x8xf32>
    %72 = arith.truncf %71 : vector<8x8xf32> to vector<8x8xbf16>
    %cst_21 = arith.constant dense<0.000000e+00> : vector<8x8xf32>
    %73 = tpu.matmul %68, %70, %cst_21 {dimension_numbers = #tpu.dot_dimension_numbers<[1], [1], [0], [0], [0, 0, 1, 0], [], []>} : vector<8x8xbf16>, vector<8x8xbf16>, vector<8x8xf32> -> vector<8x8xf32>
    %cst_22 = arith.constant dense<0xFF800000> : vector<8xf32>
    %74 = vector.multi_reduction <maximumf>, %73, %cst_22 [1] : vector<8x8xf32> to vector<8xf32>
    %75 = vector.shape_cast %74 : vector<8xf32> to vector<8x1xf32>
    %76 = vector.broadcast %75 : vector<8x1xf32> to vector<8x8xf32>
    %77 = arith.subf %73, %76 : vector<8x8xf32>
    %78 = math.exp %77 : vector<8x8xf32>
    %cst_23 = arith.constant dense<0.000000e+00> : vector<8xf32>
    %79 = vector.multi_reduction <add>, %78, %cst_23 [1] : vector<8x8xf32> to vector<8xf32>
    %80 = vector.shape_cast %79 : vector<8xf32> to vector<8x1xf32>
    %81 = arith.truncf %78 : vector<8x8xf32> to vector<8x8xbf16>
    %cst_24 = arith.constant dense<0.000000e+00> : vector<8x8xf32>
    %82 = tpu.matmul %81, %72, %cst_24 {dimension_numbers = #tpu.dot_dimension_numbers<[1], [0], [0], [1], [0, 0, 1, 1], [], []>} : vector<8x8xbf16>, vector<8x8xbf16>, vector<8x8xf32> -> vector<8x8xf32>
    %83 = tpu.reciprocal %80 {approx = true} : vector<8x1xf32> -> vector<8x1xf32>
    %84 = vector.broadcast %83 : vector<8x1xf32> to vector<8x8xf32>
    %85 = arith.mulf %82, %84 : vector<8x8xf32>
    %c0_25 = arith.constant 0 : index
    %c24 = arith.constant 24 : index
    %86 = vector.load %arg13[%c0_25, %c24] : memref<16x32xf32, #tpu.memory_space<vmem>>, vector<8x8xf32>
    tpu.vector_store %arg13[%c0_25, %c24], %85 {strides = array<i32>} : memref<16x32xf32, #tpu.memory_space<vmem>>, vector<8x8xf32>,
    %87 = vector.extract_strided_slice %6 {offsets = [8, 0], sizes = [8, 8], strides = [1, 1]} : vector<16x96xf32> to vector<8x8xf32>
    %88 = arith.truncf %87 : vector<8x8xf32> to vector<8x8xbf16>
    %89 = vector.extract_strided_slice %6 {offsets = [8, 32], sizes = [8, 8], strides = [1, 1]} : vector<16x96xf32> to vector<8x8xf32>
    %90 = arith.truncf %89 : vector<8x8xf32> to vector<8x8xbf16>
    %91 = vector.extract_strided_slice %6 {offsets = [8, 64], sizes = [8, 8], strides = [1, 1]} : vector<16x96xf32> to vector<8x8xf32>
    %92 = arith.truncf %91 : vector<8x8xf32> to vector<8x8xbf16>
    %cst_26 = arith.constant dense<0.000000e+00> : vector<8x8xf32>
    %93 = tpu.matmul %88, %90, %cst_26 {dimension_numbers = #tpu.dot_dimension_numbers<[1], [1], [0], [0], [0, 0, 1, 0], [], []>} : vector<8x8xbf16>, vector<8x8xbf16>, vector<8x8xf32> -> vector<8x8xf32>
    %cst_27 = arith.constant dense<0xFF800000> : vector<8xf32>
    %94 = vector.multi_reduction <maximumf>, %93, %cst_27 [1] : vector<8x8xf32> to vector<8xf32>
    %95 = vector.shape_cast %94 : vector<8xf32> to vector<8x1xf32>
    %96 = vector.broadcast %95 : vector<8x1xf32> to vector<8x8xf32>
    %97 = arith.subf %93, %96 : vector<8x8xf32>
    %98 = math.exp %97 : vector<8x8xf32>
    %cst_28 = arith.constant dense<0.000000e+00> : vector<8xf32>
    %99 = vector.multi_reduction <add>, %98, %cst_28 [1] : vector<8x8xf32> to vector<8xf32>
    %100 = vector.shape_cast %99 : vector<8xf32> to vector<8x1xf32>
    %101 = arith.truncf %98 : vector<8x8xf32> to vector<8x8xbf16>
    %cst_29 = arith.constant dense<0.000000e+00> : vector<8x8xf32>
    %102 = tpu.matmul %101, %92, %cst_29 {dimension_numbers = #tpu.dot_dimension_numbers<[1], [0], [0], [1], [0, 0, 1, 1], [], []>} : vector<8x8xbf16>, vector<8x8xbf16>, vector<8x8xf32> -> vector<8x8xf32>
    %103 = tpu.reciprocal %100 {approx = true} : vector<8x1xf32> -> vector<8x1xf32>
    %104 = vector.broadcast %103 : vector<8x1xf32> to vector<8x8xf32>
    %105 = arith.mulf %102, %104 : vector<8x8xf32>
    %c8_30 = arith.constant 8 : index
    %c0_31 = arith.constant 0 : index
    %106 = vector.load %arg13[%c8_30, %c0_31] : memref<16x32xf32, #tpu.memory_space<vmem>>, vector<8x8xf32>
    tpu.vector_store %arg13[%c8_30, %c0_31], %105 {strides = array<i32>} : memref<16x32xf32, #tpu.memory_space<vmem>>, vector<8x8xf32>,
    %107 = vector.extract_strided_slice %6 {offsets = [8, 8], sizes = [8, 8], strides = [1, 1]} : vector<16x96xf32> to vector<8x8xf32>
    %108 = arith.truncf %107 : vector<8x8xf32> to vector<8x8xbf16>
    %109 = vector.extract_strided_slice %6 {offsets = [8, 40], sizes = [8, 8], strides = [1, 1]} : vector<16x96xf32> to vector<8x8xf32>
    %110 = arith.truncf %109 : vector<8x8xf32> to vector<8x8xbf16>
    %111 = vector.extract_strided_slice %6 {offsets = [8, 72], sizes = [8, 8], strides = [1, 1]} : vector<16x96xf32> to vector<8x8xf32>
    %112 = arith.truncf %111 : vector<8x8xf32> to vector<8x8xbf16>
    %cst_32 = arith.constant dense<0.000000e+00> : vector<8x8xf32>
    %113 = tpu.matmul %108, %110, %cst_32 {dimension_numbers = #tpu.dot_dimension_numbers<[1], [1], [0], [0], [0, 0, 1, 0], [], []>} : vector<8x8xbf16>, vector<8x8xbf16>, vector<8x8xf32> -> vector<8x8xf32>
    %cst_33 = arith.constant dense<0xFF800000> : vector<8xf32>
    %114 = vector.multi_reduction <maximumf>, %113, %cst_33 [1] : vector<8x8xf32> to vector<8xf32>
    %115 = vector.shape_cast %114 : vector<8xf32> to vector<8x1xf32>
    %116 = vector.broadcast %115 : vector<8x1xf32> to vector<8x8xf32>
    %117 = arith.subf %113, %116 : vector<8x8xf32>
    %118 = math.exp %117 : vector<8x8xf32>
    %cst_34 = arith.constant dense<0.000000e+00> : vector<8xf32>
    %119 = vector.multi_reduction <add>, %118, %cst_34 [1] : vector<8x8xf32> to vector<8xf32>
    %120 = vector.shape_cast %119 : vector<8xf32> to vector<8x1xf32>
    %121 = arith.truncf %118 : vector<8x8xf32> to vector<8x8xbf16>
    %cst_35 = arith.constant dense<0.000000e+00> : vector<8x8xf32>
    %122 = tpu.matmul %121, %112, %cst_35 {dimension_numbers = #tpu.dot_dimension_numbers<[1], [0], [0], [1], [0, 0, 1, 1], [], []>} : vector<8x8xbf16>, vector<8x8xbf16>, vector<8x8xf32> -> vector<8x8xf32>
    %123 = tpu.reciprocal %120 {approx = true} : vector<8x1xf32> -> vector<8x1xf32>
    %124 = vector.broadcast %123 : vector<8x1xf32> to vector<8x8xf32>
    %125 = arith.mulf %122, %124 : vector<8x8xf32>
    %c8_36 = arith.constant 8 : index
    %c8_37 = arith.constant 8 : index
    %126 = vector.load %arg13[%c8_36, %c8_37] : memref<16x32xf32, #tpu.memory_space<vmem>>, vector<8x8xf32>
    tpu.vector_store %arg13[%c8_36, %c8_37], %125 {strides = array<i32>} : memref<16x32xf32, #tpu.memory_space<vmem>>, vector<8x8xf32>,
    %127 = vector.extract_strided_slice %6 {offsets = [8, 16], sizes = [8, 8], strides = [1, 1]} : vector<16x96xf32> to vector<8x8xf32>
    %128 = arith.truncf %127 : vector<8x8xf32> to vector<8x8xbf16>
    %129 = vector.extract_strided_slice %6 {offsets = [8, 48], sizes = [8, 8], strides = [1, 1]} : vector<16x96xf32> to vector<8x8xf32>
    %130 = arith.truncf %129 : vector<8x8xf32> to vector<8x8xbf16>
    %131 = vector.extract_strided_slice %6 {offsets = [8, 80], sizes = [8, 8], strides = [1, 1]} : vector<16x96xf32> to vector<8x8xf32>
    %132 = arith.truncf %131 : vector<8x8xf32> to vector<8x8xbf16>
    %cst_38 = arith.constant dense<0.000000e+00> : vector<8x8xf32>
    %133 = tpu.matmul %128, %130, %cst_38 {dimension_numbers = #tpu.dot_dimension_numbers<[1], [1], [0], [0], [0, 0, 1, 0], [], []>} : vector<8x8xbf16>, vector<8x8xbf16>, vector<8x8xf32> -> vector<8x8xf32>
    %cst_39 = arith.constant dense<0xFF800000> : vector<8xf32>
    %134 = vector.multi_reduction <maximumf>, %133, %cst_39 [1] : vector<8x8xf32> to vector<8xf32>
    %135 = vector.shape_cast %134 : vector<8xf32> to vector<8x1xf32>
    %136 = vector.broadcast %135 : vector<8x1xf32> to vector<8x8xf32>
    %137 = arith.subf %133, %136 : vector<8x8xf32>
    %138 = math.exp %137 : vector<8x8xf32>
    %cst_40 = arith.constant dense<0.000000e+00> : vector<8xf32>
    %139 = vector.multi_reduction <add>, %138, %cst_40 [1] : vector<8x8xf32> to vector<8xf32>
    %140 = vector.shape_cast %139 : vector<8xf32> to vector<8x1xf32>
    %141 = arith.truncf %138 : vector<8x8xf32> to vector<8x8xbf16>
    %cst_41 = arith.constant dense<0.000000e+00> : vector<8x8xf32>
    %142 = tpu.matmul %141, %132, %cst_41 {dimension_numbers = #tpu.dot_dimension_numbers<[1], [0], [0], [1], [0, 0, 1, 1], [], []>} : vector<8x8xbf16>, vector<8x8xbf16>, vector<8x8xf32> -> vector<8x8xf32>
    %143 = tpu.reciprocal %140 {approx = true} : vector<8x1xf32> -> vector<8x1xf32>
    %144 = vector.broadcast %143 : vector<8x1xf32> to vector<8x8xf32>
    %145 = arith.mulf %142, %144 : vector<8x8xf32>
    %c8_42 = arith.constant 8 : index
    %c16_43 = arith.constant 16 : index
    %146 = vector.load %arg13[%c8_42, %c16_43] : memref<16x32xf32, #tpu.memory_space<vmem>>, vector<8x8xf32>
    tpu.vector_store %arg13[%c8_42, %c16_43], %145 {strides = array<i32>} : memref<16x32xf32, #tpu.memory_space<vmem>>, vector<8x8xf32>,
    %147 = vector.extract_strided_slice %6 {offsets = [8, 24], sizes = [8, 8], strides = [1, 1]} : vector<16x96xf32> to vector<8x8xf32>
    %148 = arith.truncf %147 : vector<8x8xf32> to vector<8x8xbf16>
    %149 = vector.extract_strided_slice %6 {offsets = [8, 56], sizes = [8, 8], strides = [1, 1]} : vector<16x96xf32> to vector<8x8xf32>
    %150 = arith.truncf %149 : vector<8x8xf32> to vector<8x8xbf16>
    %151 = vector.extract_strided_slice %6 {offsets = [8, 88], sizes = [8, 8], strides = [1, 1]} : vector<16x96xf32> to vector<8x8xf32>
    %152 = arith.truncf %151 : vector<8x8xf32> to vector<8x8xbf16>
    %cst_44 = arith.constant dense<0.000000e+00> : vector<8x8xf32>
    %153 = tpu.matmul %148, %150, %cst_44 {dimension_numbers = #tpu.dot_dimension_numbers<[1], [1], [0], [0], [0, 0, 1, 0], [], []>} : vector<8x8xbf16>, vector<8x8xbf16>, vector<8x8xf32> -> vector<8x8xf32>
    %cst_45 = arith.constant dense<0xFF800000> : vector<8xf32>
    %154 = vector.multi_reduction <maximumf>, %153, %cst_45 [1] : vector<8x8xf32> to vector<8xf32>
    %155 = vector.shape_cast %154 : vector<8xf32> to vector<8x1xf32>
    %156 = vector.broadcast %155 : vector<8x1xf32> to vector<8x8xf32>
    %157 = arith.subf %153, %156 : vector<8x8xf32>
    %158 = math.exp %157 : vector<8x8xf32>
    %cst_46 = arith.constant dense<0.000000e+00> : vector<8xf32>
    %159 = vector.multi_reduction <add>, %158, %cst_46 [1] : vector<8x8xf32> to vector<8xf32>
    %160 = vector.shape_cast %159 : vector<8xf32> to vector<8x1xf32>
    %161 = arith.truncf %158 : vector<8x8xf32> to vector<8x8xbf16>
    %cst_47 = arith.constant dense<0.000000e+00> : vector<8x8xf32>
    %162 = tpu.matmul %161, %152, %cst_47 {dimension_numbers = #tpu.dot_dimension_numbers<[1], [0], [0], [1], [0, 0, 1, 1], [], []>} : vector<8x8xbf16>, vector<8x8xbf16>, vector<8x8xf32> -> vector<8x8xf32>
    %163 = tpu.reciprocal %160 {approx = true} : vector<8x1xf32> -> vector<8x1xf32>
    %164 = vector.broadcast %163 : vector<8x1xf32> to vector<8x8xf32>
    %165 = arith.mulf %162, %164 : vector<8x8xf32>
    %c8_48 = arith.constant 8 : index
    %c24_49 = arith.constant 24 : index
    %166 = vector.load %arg13[%c8_48, %c24_49] : memref<16x32xf32, #tpu.memory_space<vmem>>, vector<8x8xf32>
    tpu.vector_store %arg13[%c8_48, %c24_49], %165 {strides = array<i32>} : memref<16x32xf32, #tpu.memory_space<vmem>>, vector<8x8xf32>,
    %c0_50 = arith.constant 0 : index
    %c0_51 = arith.constant 0 : index
    %167 = vector.load %arg13[%c0_50, %c0_51] : memref<16x32xf32, #tpu.memory_space<vmem>>, vector<16x32xf32>
    %168 = arith.addf %167, %0 : vector<16x32xf32>
    %c0_52 = arith.constant 0 : index
    %c0_53 = arith.constant 0 : index
    %169 = vector.load %arg4[%c0_52, %c0_53] : memref<1x32xf32, #tpu.memory_space<vmem>>, vector<1x32xf32>
    %c0_54 = arith.constant 0 : index
    %c0_55 = arith.constant 0 : index
    %170 = vector.load %arg5[%c0_54, %c0_55] : memref<1x32xf32, #tpu.memory_space<vmem>>, vector<1x32xf32>
    %cst_56 = arith.constant dense<0.000000e+00> : vector<16xf32>
    %171 = vector.multi_reduction <add>, %168, %cst_56 [1] : vector<16x32xf32> to vector<16xf32>
    %172 = vector.shape_cast %171 : vector<16xf32> to vector<16x1xf32>
    %cst_57 = arith.constant 3.200000e+01 : f32
    %173 = vector.broadcast %cst_57 : f32 to vector<16x1xf32>
    %174 = arith.divf %172, %173 : vector<16x1xf32>
    %175 = vector.broadcast %174 : vector<16x1xf32> to vector<16x32xf32>
    %176 = arith.subf %168, %175 : vector<16x32xf32>
    %177 = arith.mulf %176, %176 : vector<16x32xf32>
    %cst_58 = arith.constant dense<0.000000e+00> : vector<16xf32>
    %178 = vector.multi_reduction <add>, %177, %cst_58 [1] : vector<16x32xf32> to vector<16xf32>
    %179 = vector.shape_cast %178 : vector<16xf32> to vector<16x1xf32>
    %cst_59 = arith.constant 3.200000e+01 : f32
    %180 = vector.broadcast %cst_59 : f32 to vector<16x1xf32>
    %181 = arith.divf %179, %180 : vector<16x1xf32>
    %182 = vector.broadcast %174 : vector<16x1xf32> to vector<16x32xf32>
    %183 = arith.subf %168, %182 : vector<16x32xf32>
    %cst_60 = arith.constant 9.99999974E-6 : f32
    %184 = vector.broadcast %cst_60 : f32 to vector<16x1xf32>
    %185 = arith.addf %181, %184 : vector<16x1xf32>
    %186 = math.rsqrt %185 : vector<16x1xf32>
    %187 = vector.broadcast %186 : vector<16x1xf32> to vector<16x32xf32>
    %188 = arith.mulf %183, %187 : vector<16x32xf32>
    %189 = vector.broadcast %169 : vector<1x32xf32> to vector<16x32xf32>
    %190 = arith.mulf %188, %189 : vector<16x32xf32>
    %191 = vector.broadcast %170 : vector<1x32xf32> to vector<16x32xf32>
    %192 = arith.addf %190, %191 : vector<16x32xf32>
    %193 = arith.truncf %192 : vector<16x32xf32> to vector<16x32xbf16>
    %c0_61 = arith.constant 0 : index
    %c0_62 = arith.constant 0 : index
    %194 = vector.load %arg6[%c0_61, %c0_62] : memref<32x128xbf16, #tpu.memory_space<vmem>>, vector<32x128xbf16>
    %cst_63 = arith.constant dense<0.000000e+00> : vector<16x128xf32>
    %195 = tpu.matmul %193, %194, %cst_63 {dimension_numbers = #tpu.dot_dimension_numbers<[1], [0], [0], [1], [0, 0, 1, 1], [], []>} : vector<16x32xbf16>, vector<32x128xbf16>, vector<16x128xf32> -> vector<16x128xf32>
    %c0_64 = arith.constant 0 : index
    %c0_65 = arith.constant 0 : index
    %196 = vector.load %arg7[%c0_64, %c0_65] : memref<1x128xf32, #tpu.memory_space<vmem>>, vector<1x128xf32>
    %197 = vector.broadcast %196 : vector<1x128xf32> to vector<16x128xf32>
    %198 = arith.addf %195, %197 : vector<16x128xf32>
    %cst_66 = arith.constant 0.000000e+00 : f32
    %199 = vector.broadcast %cst_66 : f32 to vector<16x128xf32>
    %200 = arith.maximumf %198, %199 : vector<16x128xf32>
    %201 = arith.truncf %200 : vector<16x128xf32> to vector<16x128xbf16>
    %c0_67 = arith.constant 0 : index
    %c0_68 = arith.constant 0 : index
    %202 = vector.load %arg8[%c0_67, %c0_68] : memref<128x32xbf16, #tpu.memory_space<vmem>>, vector<128x32xbf16>
    %cst_69 = arith.constant dense<0.000000e+00> : vector<16x32xf32>
    %203 = tpu.matmul %201, %202, %cst_69 {dimension_numbers = #tpu.dot_dimension_numbers<[1], [0], [0], [1], [0, 0, 1, 1], [], []>} : vector<16x128xbf16>, vector<128x32xbf16>, vector<16x32xf32> -> vector<16x32xf32>
    %c0_70 = arith.constant 0 : index
    %c0_71 = arith.constant 0 : index
    %204 = vector.load %arg9[%c0_70, %c0_71] : memref<1x32xf32, #tpu.memory_space<vmem>>, vector<1x32xf32>
    %205 = vector.broadcast %204 : vector<1x32xf32> to vector<16x32xf32>
    %206 = arith.addf %203, %205 : vector<16x32xf32>
    %207 = arith.addf %206, %192 : vector<16x32xf32>
    %c0_72 = arith.constant 0 : index
    %c0_73 = arith.constant 0 : index
    %208 = vector.load %arg10[%c0_72, %c0_73] : memref<1x32xf32, #tpu.memory_space<vmem>>, vector<1x32xf32>
    %c0_74 = arith.constant 0 : index
    %c0_75 = arith.constant 0 : index
    %209 = vector.load %arg11[%c0_74, %c0_75] : memref<1x32xf32, #tpu.memory_space<vmem>>, vector<1x32xf32>
    %cst_76 = arith.constant dense<0.000000e+00> : vector<16xf32>
    %210 = vector.multi_reduction <add>, %207, %cst_76 [1] : vector<16x32xf32> to vector<16xf32>
    %211 = vector.shape_cast %210 : vector<16xf32> to vector<16x1xf32>
    %cst_77 = arith.constant 3.200000e+01 : f32
    %212 = vector.broadcast %cst_77 : f32 to vector<16x1xf32>
    %213 = arith.divf %211, %212 : vector<16x1xf32>
    %214 = vector.broadcast %213 : vector<16x1xf32> to vector<16x32xf32>
    %215 = arith.subf %207, %214 : vector<16x32xf32>
    %216 = arith.mulf %215, %215 : vector<16x32xf32>
    %cst_78 = arith.constant dense<0.000000e+00> : vector<16xf32>
    %217 = vector.multi_reduction <add>, %216, %cst_78 [1] : vector<16x32xf32> to vector<16xf32>
    %218 = vector.shape_cast %217 : vector<16xf32> to vector<16x1xf32>
    %cst_79 = arith.constant 3.200000e+01 : f32
    %219 = vector.broadcast %cst_79 : f32 to vector<16x1xf32>
    %220 = arith.divf %218, %219 : vector<16x1xf32>
    %221 = vector.broadcast %213 : vector<16x1xf32> to vector<16x32xf32>
    %222 = arith.subf %207, %221 : vector<16x32xf32>
    %cst_80 = arith.constant 9.99999974E-6 : f32
    %223 = vector.broadcast %cst_80 : f32 to vector<16x1xf32>
    %224 = arith.addf %220, %223 : vector<16x1xf32>
    %225 = math.rsqrt %224 : vector<16x1xf32>
    %226 = vector.broadcast %225 : vector<16x1xf32> to vector<16x32xf32>
    %227 = arith.mulf %222, %226 : vector<16x32xf32>
    %228 = vector.broadcast %208 : vector<1x32xf32> to vector<16x32xf32>
    %229 = arith.mulf %227, %228 : vector<16x32xf32>
    %230 = vector.broadcast %209 : vector<1x32xf32> to vector<16x32xf32>
    %231 = arith.addf %229, %230 : vector<16x32xf32>
    %c0_81 = arith.constant 0 : index
    %c0_82 = arith.constant 0 : index
    %232 = vector.load %arg12[%c0_81, %c0_82] : memref<16x32xf32, #tpu.memory_space<vmem>>, vector<16x32xf32>
    tpu.vector_store %arg12[%c0_81, %c0_82], %231 {strides = array<i32>} : memref<16x32xf32, #tpu.memory_space<vmem>>, vector<16x32xf32>,
    return
  }
  func.func @transform_0(%arg0: i32) -> (i32, i32) {
    %c0_i32 = arith.constant 0 : i32
    %c0_i32_0 = arith.constant 0 : i32
    return %arg0, %c0_i32 : i32, i32
  }
  func.func @transform_1(%arg0: i32) -> (i32, i32) {
    %c0_i32 = arith.constant 0 : i32
    %c0_i32_0 = arith.constant 0 : i32
    %c0_i32_1 = arith.constant 0 : i32
    return %c0_i32, %c0_i32_0 : i32, i32
  }
  func.func @transform_2(%arg0: i32) -> (i32, i32) {
    %c0_i32 = arith.constant 0 : i32
    %c0_i32_0 = arith.constant 0 : i32
    %c0_i32_1 = arith.constant 0 : i32
    return %c0_i32, %c0_i32_0 : i32, i32
  }
  func.func @transform_3(%arg0: i32) -> (i32, i32) {
    %c0_i32 = arith.constant 0 : i32
    %c0_i32_0 = arith.constant 0 : i32
    %c0_i32_1 = arith.constant 0 : i32
    return %c0_i32, %c0_i32_0 : i32, i32
  }
  func.func @transform_4(%arg0: i32) -> (i32, i32) {
    %c0_i32 = arith.constant 0 : i32
    %c0_i32_0 = arith.constant 0 : i32
    %c0_i32_1 = arith.constant 0 : i32
    return %c0_i32, %c0_i32_0 : i32, i32
  }
  func.func @transform_5(%arg0: i32) -> (i32, i32) {
    %c0_i32 = arith.constant 0 : i32
    %c0_i32_0 = arith.constant 0 : i32
    %c0_i32_1 = arith.constant 0 : i32
    return %c0_i32, %c0_i32_0 : i32, i32
  }
  func.func @transform_6(%arg0: i32) -> (i32, i32) {
    %c0_i32 = arith.constant 0 : i32
    %c0_i32_0 = arith.constant 0 : i32
    %c0_i32_1 = arith.constant 0 : i32
    return %c0_i32, %c0_i32_0 : i32, i32
  }
  func.func @transform_7(%arg0: i32) -> (i32, i32) {
    %c0_i32 = arith.constant 0 : i32
    %c0_i32_0 = arith.constant 0 : i32
    %c0_i32_1 = arith.constant 0 : i32
    return %c0_i32, %c0_i32_0 : i32, i32
  }
  func.func @transform_8(%arg0: i32) -> (i32, i32) {
    %c0_i32 = arith.constant 0 : i32
    %c0_i32_0 = arith.constant 0 : i32
    %c0_i32_1 = arith.constant 0 : i32
    return %c0_i32, %c0_i32_0 : i32, i32
  }
  func.func @transform_9(%arg0: i32) -> (i32, i32) {
    %c0_i32 = arith.constant 0 : i32
    %c0_i32_0 = arith.constant 0 : i32
    %c0_i32_1 = arith.constant 0 : i32
    return %c0_i32, %c0_i32_0 : i32, i32
  }
  func.func @transform_10(%arg0: i32) -> (i32, i32) {
    %c0_i32 = arith.constant 0 : i32
    %c0_i32_0 = arith.constant 0 : i32
    %c0_i32_1 = arith.constant 0 : i32
    return %c0_i32, %c0_i32_0 : i32, i32
  }
  func.func @transform_11(%arg0: i32) -> (i32, i32) {
    %c0_i32 = arith.constant 0 : i32
    %c0_i32_0 = arith.constant 0 : i32
    return %arg0, %c0_i32 : i32, i32
  }
}

module attributes {stable_mosaic.version = 11 : i64} {
  func.func @kernel(%arg0: i32, %arg1: memref<16x32xf32, #tpu.memory_space<vmem>>, %arg2: memref<32x96xbf16, #tpu.memory_space<vmem>>, %arg3: memref<1x96xf32, #tpu.memory_space<vmem>>, %arg4: memref<1x32xf32, #tpu.memory_space<vmem>>, %arg5: memref<1x32xf32, #tpu.memory_space<vmem>>, %arg6: memref<32x128xbf16, #tpu.memory_space<vmem>>, %arg7: memref<1x128xf32, #tpu.memory_space<vmem>>, %arg8: memref<128x32xbf16, #tpu.memory_space<vmem>>, %arg9: memref<1x32xf32, #tpu.memory_space<vmem>>, %arg10: memref<1x32xf32, #tpu.memory_space<vmem>>, %arg11: memref<1x32xf32, #tpu.memory_space<vmem>>, %arg12: memref<16x32xf32, #tpu.memory_space<vmem>>, %arg13: memref<16x32xf32, #tpu.memory_space<vmem>>) attributes {dimension_semantics = [#tpu.dimension_semantics<parallel>], iteration_bounds = array<i64: 1>, scalar_prefetch = 0 : i64, scratch_operands = 1 : i64, tpu.core_type = #tpu.core_type<tc>, window_params = [{transform_indices = @transform_0, window_bounds = array<i64: 16, 32>}, {pipeline_mode = #tpu.pipeline_mode<synchronous>, transform_indices = @transform_1, window_bounds = array<i64: 32, 96>}, {pipeline_mode = #tpu.pipeline_mode<synchronous>, transform_indices = @transform_2, window_bounds = array<i64: 1, 96>}, {pipeline_mode = #tpu.pipeline_mode<synchronous>, transform_indices = @transform_3, window_bounds = array<i64: 1, 32>}, {pipeline_mode = #tpu.pipeline_mode<synchronous>, transform_indices = @transform_4, window_bounds = array<i64: 1, 32>}, {pipeline_mode = #tpu.pipeline_mode<synchronous>, transform_indices = @transform_5, window_bounds = array<i64: 32, 128>}, {pipeline_mode = #tpu.pipeline_mode<synchronous>, transform_indices = @transform_6, window_bounds = array<i64: 1, 128>}, {pipeline_mode = #tpu.pipeline_mode<synchronous>, transform_indices = @transform_7, window_bounds = array<i64: 128, 32>}, {pipeline_mode = #tpu.pipeline_mode<synchronous>, transform_indices = @transform_8, window_bounds = array<i64: 1, 32>}, {pipeline_mode = #tpu.pipeline_mode<synchronous>, transform_indices = @transform_9, window_bounds = array<i64: 1, 32>}, {pipeline_mode = #tpu.pipeline_mode<synchronous>, transform_indices = @transform_10, window_bounds = array<i64: 1, 32>}, {transform_indices = @transform_11, window_bounds = array<i64: 16, 32>}]} {
    %c0 = arith.constant 0 : index
    %c0_0 = arith.constant 0 : index
    %0 = vector.load %arg1[%c0, %c0_0] : memref<16x32xf32, #tpu.memory_space<vmem>>, vector<16x32xf32>
    %1 = arith.truncf %0 : vector<16x32xf32> to vector<16x32xbf16>
    %c0_1 = arith.constant 0 : index
    %c0_2 = arith.constant 0 : index
    %2 = vector.load %arg2[%c0_1, %c0_2] : memref<32x96xbf16, #tpu.memory_space<vmem>>, vector<32x96xbf16>
    %cst = arith.constant dense<0.000000e+00> : vector<16x96xf32>
    %3 = tpu.matmul %1, %2, %cst {dimension_numbers = #tpu.dot_dimension_numbers<[1], [0], [0], [1], [0, 0, 1, 1], [], []>} : vector<16x32xbf16>, vector<32x96xbf16>, vector<16x96xf32> -> vector<16x96xf32>
    %c0_3 = arith.constant 0 : index
    %c0_4 = arith.constant 0 : index
    %4 = vector.load %arg3[%c0_3, %c0_4] : memref<1x96xf32, #tpu.memory_space<vmem>>, vector<1x96xf32>
    %5 = vector.broadcast %4 : vector<1x96xf32> to vector<16x96xf32>
    %6 = arith.addf %3, %5 : vector<16x96xf32>
    %7 = vector.extract_strided_slice %6 {offsets = [0, 0], sizes = [8, 8], strides = [1, 1]} : vector<16x96xf32> to vector<8x8xf32>
    %8 = arith.truncf %7 : vector<8x8xf32> to vector<8x8xbf16>
    %9 = vector.extract_strided_slice %6 {offsets = [0, 32], sizes = [8, 8], strides = [1, 1]} : vector<16x96xf32> to vector<8x8xf32>
    %10 = arith.truncf %9 : vector<8x8xf32> to vector<8x8xbf16>
    %11 = vector.extract_strided_slice %6 {offsets = [0, 64], sizes = [8, 8], strides = [1, 1]} : vector<16x96xf32> to vector<8x8xf32>
    %12 = arith.truncf %11 : vector<8x8xf32> to vector<8x8xbf16>
    %cst_5 = arith.constant dense<0.000000e+00> : vector<8x8xf32>
    %13 = tpu.matmul %8, %10, %cst_5 {dimension_numbers = #tpu.dot_dimension_numbers<[1], [1], [0], [0], [0, 0, 1, 0], [], []>} : vector<8x8xbf16>, vector<8x8xbf16>, vector<8x8xf32> -> vector<8x8xf32>
    %cst_6 = arith.constant dense<0xFF800000> : vector<8xf32>
    %14 = vector.multi_reduction <maximumf>, %13, %cst_6 [1] : vector<8x8xf32> to vector<8xf32>
    %15 = vector.shape_cast %14 : vector<8xf32> to vector<8x1xf32>
    %16 = vector.broadcast %15 : vector<8x1xf32> to vector<8x8xf32>
    %17 = arith.subf %13, %16 : vector<8x8xf32>
    %18 = math.exp %17 : vector<8x8xf32>
    %cst_7 = arith.constant dense<0.000000e+00> : vector<8xf32>
    %19 = vector.multi_reduction <add>, %18, %cst_7 [1] : vector<8x8xf32> to vector<8xf32>
    %20 = vector.shape_cast %19 : vector<8xf32> to vector<8x1xf32>
    %21 = arith.truncf %18 : vector<8x8xf32> to vector<8x8xbf16>
    %cst_8 = arith.constant dense<0.000000e+00> : vector<8x8xf32>
    %22 = tpu.matmul %21, %12, %cst_8 {dimension_numbers = #tpu.dot_dimension_numbers<[1], [0], [0], [1], [0, 0, 1, 1], [], []>} : vector<8x8xbf16>, vector<8x8xbf16>, vector<8x8xf32> -> vector<8x8xf32>
    %23 = tpu.reciprocal %20 {approx = true} : vector<8x1xf32> -> vector<8x1xf32>
    %24 = vector.broadcast %23 : vector<8x1xf32> to vector<8x8xf32>
    %25 = arith.mulf %22, %24 : vector<8x8xf32>
    %c0_9 = arith.constant 0 : index
    %c0_10 = arith.constant 0 : index
    %26 = vector.load %arg13[%c0_9, %c0_10] : memref<16x32xf32, #tpu.memory_space<vmem>>, vector<8x8xf32>
    tpu.vector_store %arg13[%c0_9, %c0_10], %25 {strides = array<i32>} : memref<16x32xf32, #tpu.memory_space<vmem>>, vector<8x8xf32>,
    %27 = vector.extract_strided_slice %6 {offsets = [0, 8], sizes = [8, 8], strides = [1, 1]} : vector<16x96xf32> to vector<8x8xf32>
    %28 = arith.truncf %27 : vector<8x8xf32> to vector<8x8xbf16>
    %29 = vector.extract_strided_slice %6 {offsets = [0, 40], sizes = [8, 8], strides = [1, 1]} : vector<16x96xf32> to vector<8x8xf32>
    %30 = arith.truncf %29 : vector<8x8xf32> to vector<8x8xbf16>
    %31 = vector.extract_strided_slice %6 {offsets = [0, 72], sizes = [8, 8], strides = [1, 1]} : vector<16x96xf32> to vector<8x8xf32>
    %32 = arith.truncf %31 : vector<8x8xf32> to vector<8x8xbf16>
    %cst_11 = arith.constant dense<0.000000e+00> : vector<8x8xf32>
    %33 = tpu.matmul %28, %30, %cst_11 {dimension_numbers = #tpu.dot_dimension_numbers<[1], [1], [0], [0], [0, 0, 1, 0], [], []>} : vector<8x8xbf16>, vector<8x8xbf16>, vector<8x8xf32> -> vector<8x8xf32>
    %cst_12 = arith.constant dense<0xFF800000> : vector<8xf32>
    %34 = vector.multi_reduction <maximumf>, %33, %cst_12 [1] : vector<8x8xf32> to vector<8xf32>
    %35 = vector.shape_cast %34 : vector<8xf32> to vector<8x1xf32>
    %36 = vector.broadcast %35 : vector<8x1xf32> to vector<8x8xf32>
    %37 = arith.subf %33, %36 : vector<8x8xf32>
    %38 = math.exp %37 : vector<8x8xf32>
    %cst_13 = arith.constant dense<0.000000e+00> : vector<8xf32>
    %39 = vector.multi_reduction <add>, %38, %cst_13 [1] : vector<8x8xf32> to vector<8xf32>
    %40 = vector.shape_cast %39 : vector<8xf32> to vector<8x1xf32>
    %41 = arith.truncf %38 : vector<8x8xf32> to vector<8x8xbf16>
    %cst_14 = arith.constant dense<0.000000e+00> : vector<8x8xf32>
    %42 = tpu.matmul %41, %32, %cst_14 {dimension_numbers = #tpu.dot_dimension_numbers<[1], [0], [0], [1], [0, 0, 1, 1], [], []>} : vector<8x8xbf16>, vector<8x8xbf16>, vector<8x8xf32> -> vector<8x8xf32>
    %43 = tpu.reciprocal %40 {approx = true} : vector<8x1xf32> -> vector<8x1xf32>
    %44 = vector.broadcast %43 : vector<8x1xf32> to vector<8x8xf32>
    %45 = arith.mulf %42, %44 : vector<8x8xf32>
    %c0_15 = arith.constant 0 : index
    %c8 = arith.constant 8 : index
    %46 = vector.load %arg13[%c0_15, %c8] : memref<16x32xf32, #tpu.memory_space<vmem>>, vector<8x8xf32>
    tpu.vector_store %arg13[%c0_15, %c8], %45 {strides = array<i32>} : memref<16x32xf32, #tpu.memory_space<vmem>>, vector<8x8xf32>,
    %47 = vector.extract_strided_slice %6 {offsets = [0, 16], sizes = [8, 8], strides = [1, 1]} : vector<16x96xf32> to vector<8x8xf32>
    %48 = arith.truncf %47 : vector<8x8xf32> to vector<8x8xbf16>
    %49 = vector.extract_strided_slice %6 {offsets = [0, 48], sizes = [8, 8], strides = [1, 1]} : vector<16x96xf32> to vector<8x8xf32>
    %50 = arith.truncf %49 : vector<8x8xf32> to vector<8x8xbf16>
    %51 = vector.extract_strided_slice %6 {offsets = [0, 80], sizes = [8, 8], strides = [1, 1]} : vector<16x96xf32> to vector<8x8xf32>
    %52 = arith.truncf %51 : vector<8x8xf32> to vector<8x8xbf16>
    %cst_16 = arith.constant dense<0.000000e+00> : vector<8x8xf32>
    %53 = tpu.matmul %48, %50, %cst_16 {dimension_numbers = #tpu.dot_dimension_numbers<[1], [1], [0], [0], [0, 0, 1, 0], [], []>} : vector<8x8xbf16>, vector<8x8xbf16>, vector<8x8xf32> -> vector<8x8xf32>
    %cst_17 = arith.constant dense<0xFF800000> : vector<8xf32>
    %54 = vector.multi_reduction <maximumf>, %53, %cst_17 [1] : vector<8x8xf32> to vector<8xf32>
    %55 = vector.shape_cast %54 : vector<8xf32> to vector<8x1xf32>
    %56 = vector.broadcast %55 : vector<8x1xf32> to vector<8x8xf32>
    %57 = arith.subf %53, %56 : vector<8x8xf32>
    %58 = math.exp %57 : vector<8x8xf32>
    %cst_18 = arith.constant dense<0.000000e+00> : vector<8xf32>
    %59 = vector.multi_reduction <add>, %58, %cst_18 [1] : vector<8x8xf32> to vector<8xf32>
    %60 = vector.shape_cast %59 : vector<8xf32> to vector<8x1xf32>
    %61 = arith.truncf %58 : vector<8x8xf32> to vector<8x8xbf16>
    %cst_19 = arith.constant dense<0.000000e+00> : vector<8x8xf32>
    %62 = tpu.matmul %61, %52, %cst_19 {dimension_numbers = #tpu.dot_dimension_numbers<[1], [0], [0], [1], [0, 0, 1, 1], [], []>} : vector<8x8xbf16>, vector<8x8xbf16>, vector<8x8xf32> -> vector<8x8xf32>
    %63 = tpu.reciprocal %60 {approx = true} : vector<8x1xf32> -> vector<8x1xf32>
    %64 = vector.broadcast %63 : vector<8x1xf32> to vector<8x8xf32>
    %65 = arith.mulf %62, %64 : vector<8x8xf32>
    %c0_20 = arith.constant 0 : index
    %c16 = arith.constant 16 : index
    %66 = vector.load %arg13[%c0_20, %c16] : memref<16x32xf32, #tpu.memory_space<vmem>>, vector<8x8xf32>
    tpu.vector_store %arg13[%c0_20, %c16], %65 {strides = array<i32>} : memref<16x32xf32, #tpu.memory_space<vmem>>, vector<8x8xf32>,
    %67 = vector.extract_strided_slice %6 {offsets = [0, 24], sizes = [8, 8], strides = [1, 1]} : vector<16x96xf32> to vector<8x8xf32>
    %68 = arith.truncf %67 : vector<8x8xf32> to vector<8x8xbf16>
    %69 = vector.extract_strided_slice %6 {offsets = [0, 56], sizes = [8, 8], strides = [1, 1]} : vector<16x96xf32> to vector<8x8xf32>
    %70 = arith.truncf %69 : vector<8x8xf32> to vector<8x8xbf16>
    %71 = vector.extract_strided_slice %6 {offsets = [0, 88], sizes = [8, 8], strides = [1, 1]} : vector<16x96xf32> to vector<8x8xf32>
    %72 = arith.truncf %71 : vector<8x8xf32> to vector<8x8xbf16>
    %cst_21 = arith.constant dense<0.000000e+00> : vector<8x8xf32>
    %73 = tpu.matmul %68, %70, %cst_21 {dimension_numbers = #tpu.dot_dimension_numbers<[1], [1], [0], [0], [0, 0, 1, 0], [], []>} : vector<8x8xbf16>, vector<8x8xbf16>, vector<8x8xf32> -> vector<8x8xf32>
    %cst_22 = arith.constant dense<0xFF800000> : vector<8xf32>
    %74 = vector.multi_reduction <maximumf>, %73, %cst_22 [1] : vector<8x8xf32> to vector<8xf32>
    %75 = vector.shape_cast %74 : vector<8xf32> to vector<8x1xf32>
    %76 = vector.broadcast %75 : vector<8x1xf32> to vector<8x8xf32>
    %77 = arith.subf %73, %76 : vector<8x8xf32>
    %78 = math.exp %77 : vector<8x8xf32>
    %cst_23 = arith.constant dense<0.000000e+00> : vector<8xf32>
    %79 = vector.multi_reduction <add>, %78, %cst_23 [1] : vector<8x8xf32> to vector<8xf32>
    %80 = vector.shape_cast %79 : vector<8xf32> to vector<8x1xf32>
    %81 = arith.truncf %78 : vector<8x8xf32> to vector<8x8xbf16>
    %cst_24 = arith.constant dense<0.000000e+00> : vector<8x8xf32>
    %82 = tpu.matmul %81, %72, %cst_24 {dimension_numbers = #tpu.dot_dimension_numbers<[1], [0], [0], [1], [0, 0, 1, 1], [], []>} : vector<8x8xbf16>, vector<8x8xbf16>, vector<8x8xf32> -> vector<8x8xf32>
    %83 = tpu.reciprocal %80 {approx = true} : vector<8x1xf32> -> vector<8x1xf32>
    %84 = vector.broadcast %83 : vector<8x1xf32> to vector<8x8xf32>
    %85 = arith.mulf %82, %84 : vector<8x8xf32>
    %c0_25 = arith.constant 0 : index
    %c24 = arith.constant 24 : index
    %86 = vector.load %arg13[%c0_25, %c24] : memref<16x32xf32, #tpu.memory_space<vmem>>, vector<8x8xf32>
    tpu.vector_store %arg13[%c0_25, %c24], %85 {strides = array<i32>} : memref<16x32xf32, #tpu.memory_space<vmem>>, vector<8x8xf32>,
    %87 = vector.extract_strided_slice %6 {offsets = [8, 0], sizes = [8, 8], strides = [1, 1]} : vector<16x96xf32> to vector<8x8xf32>
    %88 = arith.truncf %87 : vector<8x8xf32> to vector<8x8xbf16>
    %89 = vector.extract_strided_slice %6 {offsets = [8, 32], sizes = [8, 8], strides = [1, 1]} : vector<16x96xf32> to vector<8x8xf32>
    %90 = arith.truncf %89 : vector<8x8xf32> to vector<8x8xbf16>
    %91 = vector.extract_strided_slice %6 {offsets = [8, 64], sizes = [8, 8], strides = [1, 1]} : vector<16x96xf32> to vector<8x8xf32>
    %92 = arith.truncf %91 : vector<8x8xf32> to vector<8x8xbf16>
    %cst_26 = arith.constant dense<0.000000e+00> : vector<8x8xf32>
    %93 = tpu.matmul %88, %90, %cst_26 {dimension_numbers = #tpu.dot_dimension_numbers<[1], [1], [0], [0], [0, 0, 1, 0], [], []>} : vector<8x8xbf16>, vector<8x8xbf16>, vector<8x8xf32> -> vector<8x8xf32>
    %cst_27 = arith.constant dense<0xFF800000> : vector<8xf32>
    %94 = vector.multi_reduction <maximumf>, %93, %cst_27 [1] : vector<8x8xf32> to vector<8xf32>
    %95 = vector.shape_cast %94 : vector<8xf32> to vector<8x1xf32>
    %96 = vector.broadcast %95 : vector<8x1xf32> to vector<8x8xf32>
    %97 = arith.subf %93, %96 : vector<8x8xf32>
    %98 = math.exp %97 : vector<8x8xf32>
    %cst_28 = arith.constant dense<0.000000e+00> : vector<8xf32>
    %99 = vector.multi_reduction <add>, %98, %cst_28 [1] : vector<8x8xf32> to vector<8xf32>
    %100 = vector.shape_cast %99 : vector<8xf32> to vector<8x1xf32>
    %101 = arith.truncf %98 : vector<8x8xf32> to vector<8x8xbf16>
    %cst_29 = arith.constant dense<0.000000e+00> : vector<8x8xf32>
    %102 = tpu.matmul %101, %92, %cst_29 {dimension_numbers = #tpu.dot_dimension_numbers<[1], [0], [0], [1], [0, 0, 1, 1], [], []>} : vector<8x8xbf16>, vector<8x8xbf16>, vector<8x8xf32> -> vector<8x8xf32>
    %103 = tpu.reciprocal %100 {approx = true} : vector<8x1xf32> -> vector<8x1xf32>
    %104 = vector.broadcast %103 : vector<8x1xf32> to vector<8x8xf32>
    %105 = arith.mulf %102, %104 : vector<8x8xf32>
    %c8_30 = arith.constant 8 : index
    %c0_31 = arith.constant 0 : index
    %106 = vector.load %arg13[%c8_30, %c0_31] : memref<16x32xf32, #tpu.memory_space<vmem>>, vector<8x8xf32>
    tpu.vector_store %arg13[%c8_30, %c0_31], %105 {strides = array<i32>} : memref<16x32xf32, #tpu.memory_space<vmem>>, vector<8x8xf32>,
    %107 = vector.extract_strided_slice %6 {offsets = [8, 8], sizes = [8, 8], strides = [1, 1]} : vector<16x96xf32> to vector<8x8xf32>
    %108 = arith.truncf %107 : vector<8x8xf32> to vector<8x8xbf16>
    %109 = vector.extract_strided_slice %6 {offsets = [8, 40], sizes = [8, 8], strides = [1, 1]} : vector<16x96xf32> to vector<8x8xf32>
    %110 = arith.truncf %109 : vector<8x8xf32> to vector<8x8xbf16>
    %111 = vector.extract_strided_slice %6 {offsets = [8, 72], sizes = [8, 8], strides = [1, 1]} : vector<16x96xf32> to vector<8x8xf32>
    %112 = arith.truncf %111 : vector<8x8xf32> to vector<8x8xbf16>
    %cst_32 = arith.constant dense<0.000000e+00> : vector<8x8xf32>
    %113 = tpu.matmul %108, %110, %cst_32 {dimension_numbers = #tpu.dot_dimension_numbers<[1], [1], [0], [0], [0, 0, 1, 0], [], []>} : vector<8x8xbf16>, vector<8x8xbf16>, vector<8x8xf32> -> vector<8x8xf32>
    %cst_33 = arith.constant dense<0xFF800000> : vector<8xf32>
    %114 = vector.multi_reduction <maximumf>, %113, %cst_33 [1] : vector<8x8xf32> to vector<8xf32>
    %115 = vector.shape_cast %114 : vector<8xf32> to vector<8x1xf32>
    %116 = vector.broadcast %115 : vector<8x1xf32> to vector<8x8xf32>
    %117 = arith.subf %113, %116 : vector<8x8xf32>
    %118 = math.exp %117 : vector<8x8xf32>
    %cst_34 = arith.constant dense<0.000000e+00> : vector<8xf32>
    %119 = vector.multi_reduction <add>, %118, %cst_34 [1] : vector<8x8xf32> to vector<8xf32>
    %120 = vector.shape_cast %119 : vector<8xf32> to vector<8x1xf32>
    %121 = arith.truncf %118 : vector<8x8xf32> to vector<8x8xbf16>
    %cst_35 = arith.constant dense<0.000000e+00> : vector<8x8xf32>
    %122 = tpu.matmul %121, %112, %cst_35 {dimension_numbers = #tpu.dot_dimension_numbers<[1], [0], [0], [1], [0, 0, 1, 1], [], []>} : vector<8x8xbf16>, vector<8x8xbf16>, vector<8x8xf32> -> vector<8x8xf32>
    %123 = tpu.reciprocal %120 {approx = true} : vector<8x1xf32> -> vector<8x1xf32>
    %124 = vector.broadcast %123 : vector<8x1xf32> to vector<8x8xf32>
    %125 = arith.mulf %122, %124 : vector<8x8xf32>
    %c8_36 = arith.constant 8 : index
    %c8_37 = arith.constant 8 : index
    %126 = vector.load %arg13[%c8_36, %c8_37] : memref<16x32xf32, #tpu.memory_space<vmem>>, vector<8x8xf32>
    tpu.vector_store %arg13[%c8_36, %c8_37], %125 {strides = array<i32>} : memref<16x32xf32, #tpu.memory_space<vmem>>, vector<8x8xf32>,
    %127 = vector.extract_strided_slice %6 {offsets = [8, 16], sizes = [8, 8], strides = [1, 1]} : vector<16x96xf32> to vector<8x8xf32>
    %128 = arith.truncf %127 : vector<8x8xf32> to vector<8x8xbf16>
    %129 = vector.extract_strided_slice %6 {offsets = [8, 48], sizes = [8, 8], strides = [1, 1]} : vector<16x96xf32> to vector<8x8xf32>
    %130 = arith.truncf %129 : vector<8x8xf32> to vector<8x8xbf16>
    %131 = vector.extract_strided_slice %6 {offsets = [8, 80], sizes = [8, 8], strides = [1, 1]} : vector<16x96xf32> to vector<8x8xf32>
    %132 = arith.truncf %131 : vector<8x8xf32> to vector<8x8xbf16>
    %cst_38 = arith.constant dense<0.000000e+00> : vector<8x8xf32>
    %133 = tpu.matmul %128, %130, %cst_38 {dimension_numbers = #tpu.dot_dimension_numbers<[1], [1], [0], [0], [0, 0, 1, 0], [], []>} : vector<8x8xbf16>, vector<8x8xbf16>, vector<8x8xf32> -> vector<8x8xf32>
    %cst_39 = arith.constant dense<0xFF800000> : vector<8xf32>
    %134 = vector.multi_reduction <maximumf>, %133, %cst_39 [1] : vector<8x8xf32> to vector<8xf32>
    %135 = vector.shape_cast %134 : vector<8xf32> to vector<8x1xf32>
    %136 = vector.broadcast %135 : vector<8x1xf32> to vector<8x8xf32>
    %137 = arith.subf %133, %136 : vector<8x8xf32>
    %138 = math.exp %137 : vector<8x8xf32>
    %cst_40 = arith.constant dense<0.000000e+00> : vector<8xf32>
    %139 = vector.multi_reduction <add>, %138, %cst_40 [1] : vector<8x8xf32> to vector<8xf32>
    %140 = vector.shape_cast %139 : vector<8xf32> to vector<8x1xf32>
    %141 = arith.truncf %138 : vector<8x8xf32> to vector<8x8xbf16>
    %cst_41 = arith.constant dense<0.000000e+00> : vector<8x8xf32>
    %142 = tpu.matmul %141, %132, %cst_41 {dimension_numbers = #tpu.dot_dimension_numbers<[1], [0], [0], [1], [0, 0, 1, 1], [], []>} : vector<8x8xbf16>, vector<8x8xbf16>, vector<8x8xf32> -> vector<8x8xf32>
    %143 = tpu.reciprocal %140 {approx = true} : vector<8x1xf32> -> vector<8x1xf32>
    %144 = vector.broadcast %143 : vector<8x1xf32> to vector<8x8xf32>
    %145 = arith.mulf %142, %144 : vector<8x8xf32>
    %c8_42 = arith.constant 8 : index
    %c16_43 = arith.constant 16 : index
    %146 = vector.load %arg13[%c8_42, %c16_43] : memref<16x32xf32, #tpu.memory_space<vmem>>, vector<8x8xf32>
    tpu.vector_store %arg13[%c8_42, %c16_43], %145 {strides = array<i32>} : memref<16x32xf32, #tpu.memory_space<vmem>>, vector<8x8xf32>,
    %147 = vector.extract_strided_slice %6 {offsets = [8, 24], sizes = [8, 8], strides = [1, 1]} : vector<16x96xf32> to vector<8x8xf32>
    %148 = arith.truncf %147 : vector<8x8xf32> to vector<8x8xbf16>
    %149 = vector.extract_strided_slice %6 {offsets = [8, 56], sizes = [8, 8], strides = [1, 1]} : vector<16x96xf32> to vector<8x8xf32>
    %150 = arith.truncf %149 : vector<8x8xf32> to vector<8x8xbf16>
    %151 = vector.extract_strided_slice %6 {offsets = [8, 88], sizes = [8, 8], strides = [1, 1]} : vector<16x96xf32> to vector<8x8xf32>
    %152 = arith.truncf %151 : vector<8x8xf32> to vector<8x8xbf16>
    %cst_44 = arith.constant dense<0.000000e+00> : vector<8x8xf32>
    %153 = tpu.matmul %148, %150, %cst_44 {dimension_numbers = #tpu.dot_dimension_numbers<[1], [1], [0], [0], [0, 0, 1, 0], [], []>} : vector<8x8xbf16>, vector<8x8xbf16>, vector<8x8xf32> -> vector<8x8xf32>
    %cst_45 = arith.constant dense<0xFF800000> : vector<8xf32>
    %154 = vector.multi_reduction <maximumf>, %153, %cst_45 [1] : vector<8x8xf32> to vector<8xf32>
    %155 = vector.shape_cast %154 : vector<8xf32> to vector<8x1xf32>
    %156 = vector.broadcast %155 : vector<8x1xf32> to vector<8x8xf32>
    %157 = arith.subf %153, %156 : vector<8x8xf32>
    %158 = math.exp %157 : vector<8x8xf32>
    %cst_46 = arith.constant dense<0.000000e+00> : vector<8xf32>
    %159 = vector.multi_reduction <add>, %158, %cst_46 [1] : vector<8x8xf32> to vector<8xf32>
    %160 = vector.shape_cast %159 : vector<8xf32> to vector<8x1xf32>
    %161 = arith.truncf %158 : vector<8x8xf32> to vector<8x8xbf16>
    %cst_47 = arith.constant dense<0.000000e+00> : vector<8x8xf32>
    %162 = tpu.matmul %161, %152, %cst_47 {dimension_numbers = #tpu.dot_dimension_numbers<[1], [0], [0], [1], [0, 0, 1, 1], [], []>} : vector<8x8xbf16>, vector<8x8xbf16>, vector<8x8xf32> -> vector<8x8xf32>
    %163 = tpu.reciprocal %160 {approx = true} : vector<8x1xf32> -> vector<8x1xf32>
    %164 = vector.broadcast %163 : vector<8x1xf32> to vector<8x8xf32>
    %165 = arith.mulf %162, %164 : vector<8x8xf32>
    %c8_48 = arith.constant 8 : index
    %c24_49 = arith.constant 24 : index
    %166 = vector.load %arg13[%c8_48, %c24_49] : memref<16x32xf32, #tpu.memory_space<vmem>>, vector<8x8xf32>
    tpu.vector_store %arg13[%c8_48, %c24_49], %165 {strides = array<i32>} : memref<16x32xf32, #tpu.memory_space<vmem>>, vector<8x8xf32>,
    %c0_50 = arith.constant 0 : index
    %c0_51 = arith.constant 0 : index
    %167 = vector.load %arg13[%c0_50, %c0_51] : memref<16x32xf32, #tpu.memory_space<vmem>>, vector<16x32xf32>
    %168 = arith.addf %167, %0 : vector<16x32xf32>
    %c0_52 = arith.constant 0 : index
    %c0_53 = arith.constant 0 : index
    %169 = vector.load %arg4[%c0_52, %c0_53] : memref<1x32xf32, #tpu.memory_space<vmem>>, vector<1x32xf32>
    %c0_54 = arith.constant 0 : index
    %c0_55 = arith.constant 0 : index
    %170 = vector.load %arg5[%c0_54, %c0_55] : memref<1x32xf32, #tpu.memory_space<vmem>>, vector<1x32xf32>
    %cst_56 = arith.constant dense<0.000000e+00> : vector<16xf32>
    %171 = vector.multi_reduction <add>, %168, %cst_56 [1] : vector<16x32xf32> to vector<16xf32>
    %172 = vector.shape_cast %171 : vector<16xf32> to vector<16x1xf32>
    %cst_57 = arith.constant 3.200000e+01 : f32
    %173 = vector.broadcast %cst_57 : f32 to vector<16x1xf32>
    %174 = arith.divf %172, %173 : vector<16x1xf32>
    %175 = vector.broadcast %174 : vector<16x1xf32> to vector<16x32xf32>
    %176 = arith.subf %168, %175 : vector<16x32xf32>
    %177 = arith.mulf %176, %176 : vector<16x32xf32>
    %cst_58 = arith.constant dense<0.000000e+00> : vector<16xf32>
    %178 = vector.multi_reduction <add>, %177, %cst_58 [1] : vector<16x32xf32> to vector<16xf32>
    %179 = vector.shape_cast %178 : vector<16xf32> to vector<16x1xf32>
    %cst_59 = arith.constant 3.200000e+01 : f32
    %180 = vector.broadcast %cst_59 : f32 to vector<16x1xf32>
    %181 = arith.divf %179, %180 : vector<16x1xf32>
    %182 = vector.broadcast %174 : vector<16x1xf32> to vector<16x32xf32>
    %183 = arith.subf %168, %182 : vector<16x32xf32>
    %cst_60 = arith.constant 9.99999974E-6 : f32
    %184 = vector.broadcast %cst_60 : f32 to vector<16x1xf32>
    %185 = arith.addf %181, %184 : vector<16x1xf32>
    %186 = math.rsqrt %185 : vector<16x1xf32>
    %187 = vector.broadcast %186 : vector<16x1xf32> to vector<16x32xf32>
    %188 = arith.mulf %183, %187 : vector<16x32xf32>
    %189 = vector.broadcast %169 : vector<1x32xf32> to vector<16x32xf32>
    %190 = arith.mulf %188, %189 : vector<16x32xf32>
    %191 = vector.broadcast %170 : vector<1x32xf32> to vector<16x32xf32>
    %192 = arith.addf %190, %191 : vector<16x32xf32>
    %193 = arith.truncf %192 : vector<16x32xf32> to vector<16x32xbf16>
    %c0_61 = arith.constant 0 : index
    %c0_62 = arith.constant 0 : index
    %194 = vector.load %arg6[%c0_61, %c0_62] : memref<32x128xbf16, #tpu.memory_space<vmem>>, vector<32x128xbf16>
    %cst_63 = arith.constant dense<0.000000e+00> : vector<16x128xf32>
    %195 = tpu.matmul %193, %194, %cst_63 {dimension_numbers = #tpu.dot_dimension_numbers<[1], [0], [0], [1], [0, 0, 1, 1], [], []>} : vector<16x32xbf16>, vector<32x128xbf16>, vector<16x128xf32> -> vector<16x128xf32>
    %c0_64 = arith.constant 0 : index
    %c0_65 = arith.constant 0 : index
    %196 = vector.load %arg7[%c0_64, %c0_65] : memref<1x128xf32, #tpu.memory_space<vmem>>, vector<1x128xf32>
    %197 = vector.broadcast %196 : vector<1x128xf32> to vector<16x128xf32>
    %198 = arith.addf %195, %197 : vector<16x128xf32>
    %cst_66 = arith.constant 0.000000e+00 : f32
    %199 = vector.broadcast %cst_66 : f32 to vector<16x128xf32>
    %200 = arith.maximumf %198, %199 : vector<16x128xf32>
    %201 = arith.truncf %200 : vector<16x128xf32> to vector<16x128xbf16>
    %c0_67 = arith.constant 0 : index
    %c0_68 = arith.constant 0 : index
    %202 = vector.load %arg8[%c0_67, %c0_68] : memref<128x32xbf16, #tpu.memory_space<vmem>>, vector<128x32xbf16>
    %cst_69 = arith.constant dense<0.000000e+00> : vector<16x32xf32>
    %203 = tpu.matmul %201, %202, %cst_69 {dimension_numbers = #tpu.dot_dimension_numbers<[1], [0], [0], [1], [0, 0, 1, 1], [], []>} : vector<16x128xbf16>, vector<128x32xbf16>, vector<16x32xf32> -> vector<16x32xf32>
    %c0_70 = arith.constant 0 : index
    %c0_71 = arith.constant 0 : index
    %204 = vector.load %arg9[%c0_70, %c0_71] : memref<1x32xf32, #tpu.memory_space<vmem>>, vector<1x32xf32>
    %205 = vector.broadcast %204 : vector<1x32xf32> to vector<16x32xf32>
    %206 = arith.addf %203, %205 : vector<16x32xf32>
    %207 = arith.addf %206, %192 : vector<16x32xf32>
    %c0_72 = arith.constant 0 : index
    %c0_73 = arith.constant 0 : index
    %208 = vector.load %arg10[%c0_72, %c0_73] : memref<1x32xf32, #tpu.memory_space<vmem>>, vector<1x32xf32>
    %c0_74 = arith.constant 0 : index
    %c0_75 = arith.constant 0 : index
    %209 = vector.load %arg11[%c0_74, %c0_75] : memref<1x32xf32, #tpu.memory_space<vmem>>, vector<1x32xf32>
    %cst_76 = arith.constant dense<0.000000e+00> : vector<16xf32>
    %210 = vector.multi_reduction <add>, %207, %cst_76 [1] : vector<16x32xf32> to vector<16xf32>
    %211 = vector.shape_cast %210 : vector<16xf32> to vector<16x1xf32>
    %cst_77 = arith.constant 3.200000e+01 : f32
    %212 = vector.broadcast %cst_77 : f32 to vector<16x1xf32>
    %213 = arith.divf %211, %212 : vector<16x1xf32>
    %214 = vector.broadcast %213 : vector<16x1xf32> to vector<16x32xf32>
    %215 = arith.subf %207, %214 : vector<16x32xf32>
    %216 = arith.mulf %215, %215 : vector<16x32xf32>
    %cst_78 = arith.constant dense<0.000000e+00> : vector<16xf32>
    %217 = vector.multi_reduction <add>, %216, %cst_78 [1] : vector<16x32xf32> to vector<16xf32>
    %218 = vector.shape_cast %217 : vector<16xf32> to vector<16x1xf32>
    %cst_79 = arith.constant 3.200000e+01 : f32
    %219 = vector.broadcast %cst_79 : f32 to vector<16x1xf32>
    %220 = arith.divf %218, %219 : vector<16x1xf32>
    %221 = vector.broadcast %213 : vector<16x1xf32> to vector<16x32xf32>
    %222 = arith.subf %207, %221 : vector<16x32xf32>
    %cst_80 = arith.constant 9.99999974E-6 : f32
    %223 = vector.broadcast %cst_80 : f32 to vector<16x1xf32>
    %224 = arith.addf %220, %223 : vector<16x1xf32>
    %225 = math.rsqrt %224 : vector<16x1xf32>
    %226 = vector.broadcast %225 : vector<16x1xf32> to vector<16x32xf32>
    %227 = arith.mulf %222, %226 : vector<16x32xf32>
    %228 = vector.broadcast %208 : vector<1x32xf32> to vector<16x32xf32>
    %229 = arith.mulf %227, %228 : vector<16x32xf32>
    %230 = vector.broadcast %209 : vector<1x32xf32> to vector<16x32xf32>
    %231 = arith.addf %229, %230 : vector<16x32xf32>
    %c0_81 = arith.constant 0 : index
    %c0_82 = arith.constant 0 : index
    %232 = vector.load %arg12[%c0_81, %c0_82] : memref<16x32xf32, #tpu.memory_space<vmem>>, vector<16x32xf32>
    tpu.vector_store %arg12[%c0_81, %c0_82], %231 {strides = array<i32>} : memref<16x32xf32, #tpu.memory_space<vmem>>, vector<16x32xf32>,
    return
  }
  func.func @transform_0(%arg0: i32) -> (i32, i32) {
    %c0_i32 = arith.constant 0 : i32
    %c0_i32_0 = arith.constant 0 : i32
    return %arg0, %c0_i32 : i32, i32
  }
  func.func @transform_1(%arg0: i32) -> (i32, i32) {
    %c0_i32 = arith.constant 0 : i32
    %c0_i32_0 = arith.constant 0 : i32
    %c0_i32_1 = arith.constant 0 : i32
    return %c0_i32, %c0_i32_0 : i32, i32
  }
  func.func @transform_2(%arg0: i32) -> (i32, i32) {
    %c0_i32 = arith.constant 0 : i32
    %c0_i32_0 = arith.constant 0 : i32
    %c0_i32_1 = arith.constant 0 : i32
    return %c0_i32, %c0_i32_0 : i32, i32
  }
  func.func @transform_3(%arg0: i32) -> (i32, i32) {
    %c0_i32 = arith.constant 0 : i32
    %c0_i32_0 = arith.constant 0 : i32
    %c0_i32_1 = arith.constant 0 : i32
    return %c0_i32, %c0_i32_0 : i32, i32
  }
  func.func @transform_4(%arg0: i32) -> (i32, i32) {
    %c0_i32 = arith.constant 0 : i32
    %c0_i32_0 = arith.constant 0 : i32
    %c0_i32_1 = arith.constant 0 : i32
    return %c0_i32, %c0_i32_0 : i32, i32
  }
  func.func @transform_5(%arg0: i32) -> (i32, i32) {
    %c0_i32 = arith.constant 0 : i32
    %c0_i32_0 = arith.constant 0 : i32
    %c0_i32_1 = arith.constant 0 : i32
    return %c0_i32, %c0_i32_0 : i32, i32
  }
  func.func @transform_6(%arg0: i32) -> (i32, i32) {
    %c0_i32 = arith.constant 0 : i32
    %c0_i32_0 = arith.constant 0 : i32
    %c0_i32_1 = arith.constant 0 : i32
    return %c0_i32, %c0_i32_0 : i32, i32
  }
  func.func @transform_7(%arg0: i32) -> (i32, i32) {
    %c0_i32 = arith.constant 0 : i32
    %c0_i32_0 = arith.constant 0 : i32
    %c0_i32_1 = arith.constant 0 : i32
    return %c0_i32, %c0_i32_0 : i32, i32
  }
  func.func @transform_8(%arg0: i32) -> (i32, i32) {
    %c0_i32 = arith.constant 0 : i32
    %c0_i32_0 = arith.constant 0 : i32
    %c0_i32_1 = arith.constant 0 : i32
    return %c0_i32, %c0_i32_0 : i32, i32
  }
  func.func @transform_9(%arg0: i32) -> (i32, i32) {
    %c0_i32 = arith.constant 0 : i32
    %c0_i32_0 = arith.constant 0 : i32
    %c0_i32_1 = arith.constant 0 : i32
    return %c0_i32, %c0_i32_0 : i32, i32
  }
  func.func @transform_10(%arg0: i32) -> (i32, i32) {
    %c0_i32 = arith.constant 0 : i32
    %c0_i32_0 = arith.constant 0 : i32
    %c0_i32_1 = arith.constant 0 : i32
    return %c0_i32, %c0_i32_0 : i32, i32
  }
  func.func @transform_11(%arg0: i32) -> (i32, i32) {
    %c0_i32 = arith.constant 0 : i32
    %c0_i32_0 = arith.constant 0 : i32
    return %arg0, %c0_i32 : i32, i32
  }
}

</mosaic_0001>

<llo_original>
// kernel: tpu_custom_call.1
$region0: #{tpu_custom_call.1}
  #allocation0 [shape = 'u32[]', space=smem, size = 0x4, offset = 0x4, fixed_abs, tag = 'smem constant byte address 0x4 - core index']
  #allocation1 [shape = 'u32[144,128]{1,0:T(1,128)}', space=vmem, size = 0x12000, scoped, tag = 'internal scratch']
  #allocation2 [shape = 'f32[16,32]{1,0:T(8,128)}', space=vmem, size = 0x2000, scoped, tag = 'scratch operand']
  %s0 = inlined_call_operand.vmem [shape: f32[16,32], index: 0, kind: input, shape index: {}]
  %s1 = inlined_call_operand.vmem [shape: bf16[32,96], index: 1, kind: input, shape index: {}]
  %s2 = inlined_call_operand.vmem [shape: f32[1,96], index: 2, kind: input, shape index: {}]
  %s3 = inlined_call_operand.vmem [shape: f32[1,32], index: 3, kind: input, shape index: {}]
  %s4 = inlined_call_operand.vmem [shape: f32[1,32], index: 4, kind: input, shape index: {}]
  %s5 = inlined_call_operand.vmem [shape: bf16[32,128], index: 5, kind: input, shape index: {}]
  %s6 = inlined_call_operand.vmem [shape: f32[1,128], index: 6, kind: input, shape index: {}]
  %s7 = inlined_call_operand.vmem [shape: bf16[128,32], index: 7, kind: input, shape index: {}]
  %s8 = inlined_call_operand.vmem [shape: f32[1,32], index: 8, kind: input, shape index: {}]
  %s9 = inlined_call_operand.vmem [shape: f32[1,32], index: 9, kind: input, shape index: {}]
  %s10 = inlined_call_operand.vmem [shape: f32[1,32], index: 10, kind: input, shape index: {}]
  %s11 = inlined_call_operand.hbm [shape: f32[16,32], index: 11, kind: output, shape index: {}]
  %s12 = sld [smem:[#allocation0]]
  $region54: #{tpu_custom_call.1} parent=0
    _
  %s14 = ssub.s32 1, %s12
  %s15 = scalar_select 0, %s14, %s12
  $region1: #{tpu_custom_call.1} parent=0
    #allocation3 [shape = 'u8[8192]{0}', space=vmem, size = 0x2000, scoped, tag = 'output window, operand 0, single buffered']
    #allocation4 [shape = 's32[1]{0}', space=sflag, size = 0x4, scoped, tag = 'scoped memory for tpu_custom_call.1']
    %16 = vsyncpa [#allocation4], 0
    // Predicated region
    $region2: #{tpu_custom_call.1} parent=1 // pred_check
      _
    $region3: #{tpu_custom_call.1} parent=1 // pred_check_branch
      %18 = sbr.rel (0) target = $region5
    $region4: #{tpu_custom_call.1} parent=1 // pred_region
      _
    $region5: #{tpu_custom_call.1} parent=1 // pred_fallthru
      _
    // Predicated region
    $region6: #{tpu_custom_call.1} parent=1 // pred_check
      _
    $region7: #{tpu_custom_call.1} parent=1 // pred_check_branch
      %20 = sbr.rel (0) target = $region9
    $region8: #{tpu_custom_call.1} parent=1 // pred_region
      _
    $region9: #{tpu_custom_call.1} parent=1 // pred_fallthru
      _
    // Predicated region
    $region10: #{tpu_custom_call.1} parent=1 // pred_check
      _
    $region11: #{tpu_custom_call.1} parent=1 // pred_check_branch
      %22 = sbr.rel (0) target = $region13
    $region12: #{tpu_custom_call.1} parent=1 // pred_region
      _
    $region13: #{tpu_custom_call.1} parent=1 // pred_fallthru
      _
    // Predicated region
    $region14: #{tpu_custom_call.1} parent=1 // pred_check
      _
    $region15: #{tpu_custom_call.1} parent=1 // pred_check_branch
      %24 = sbr.rel (0) target = $region17
    $region16: #{tpu_custom_call.1} parent=1 // pred_region
      _
    $region17: #{tpu_custom_call.1} parent=1 // pred_fallthru
      _
    // Predicated region
    $region18: #{tpu_custom_call.1} parent=1 // pred_check
      _
    $region19: #{tpu_custom_call.1} parent=1 // pred_check_branch
      %26 = sbr.rel (0) target = $region21
    $region20: #{tpu_custom_call.1} parent=1 // pred_region
      _
    $region21: #{tpu_custom_call.1} parent=1 // pred_fallthru
      _
    // Predicated region
    $region22: #{tpu_custom_call.1} parent=1 // pred_check
      _
    $region23: #{tpu_custom_call.1} parent=1 // pred_check_branch
      %28 = sbr.rel (0) target = $region25
    $region24: #{tpu_custom_call.1} parent=1 // pred_region
      _
    $region25: #{tpu_custom_call.1} parent=1 // pred_fallthru
      _
    // Predicated region
    $region26: #{tpu_custom_call.1} parent=1 // pred_check
      _
    $region27: #{tpu_custom_call.1} parent=1 // pred_check_branch
      %30 = sbr.rel (0) target = $region29
    $region28: #{tpu_custom_call.1} parent=1 // pred_region
      _
    $region29: #{tpu_custom_call.1} parent=1 // pred_fallthru
      _
    // Predicated region
    $region30: #{tpu_custom_call.1} parent=1 // pred_check
      _
    $region31: #{tpu_custom_call.1} parent=1 // pred_check_branch
      %32 = sbr.rel (0) target = $region33
    $region32: #{tpu_custom_call.1} parent=1 // pred_region
      _
    $region33: #{tpu_custom_call.1} parent=1 // pred_fallthru
      _
    // Predicated region
    $region34: #{tpu_custom_call.1} parent=1 // pred_check
      _
    $region35: #{tpu_custom_call.1} parent=1 // pred_check_branch
      %34 = sbr.rel (0) target = $region37
    $region36: #{tpu_custom_call.1} parent=1 // pred_region
      _
    $region37: #{tpu_custom_call.1} parent=1 // pred_fallthru
      _
    // Predicated region
    $region38: #{tpu_custom_call.1} parent=1 // pred_check
      _
    $region39: #{tpu_custom_call.1} parent=1 // pred_check_branch
      %36 = sbr.rel (0) target = $region41
    $region40: #{tpu_custom_call.1} parent=1 // pred_region
      _
    $region41: #{tpu_custom_call.1} parent=1 // pred_fallthru
      _
    // Predicated region
    $region42: #{tpu_custom_call.1} parent=1 // pred_check
      _
    $region43: #{tpu_custom_call.1} parent=1 // pred_check_branch
      %38 = sbr.rel (0) target = $region45
    $region44: #{tpu_custom_call.1} parent=1 // pred_region
      _
    $region45: #{tpu_custom_call.1} parent=1 // pred_fallthru
      _
    %v40 = vld [vmem:[%s0] sm:$0xff]
    %v41 = vld [vmem:[%s0 + $0x8] sm:$0xff]
    %v42 = vpack.c.bf16 %v41, %v40
    %v43 = vld [vmem:[%s1] sm:$0xf]
    %v44 = vld [vmem:[%s1 + $0x4] sm:$0xf]
    %v45 = vld [vmem:[%s1 + $0x8] sm:$0xf]
    %v46 = vld [vmem:[%s1 + $0xc] sm:$0xf]
    %v47 = vld [vmem:[%s2] sm:$0x1]
    %v49 = vlaneseq
    %v50 = vshrl.u32 %v49, 7
    %v51 = vsub.s32 0, %v50
    %v52 = vrot.slane %v47, %v51
    %v58 = vunpack.c.l.b16 %v43
    %v59 = vunpack.c.l.b16 %v44
    %v60 = vunpack.c.l.b16 %v45
    %v61 = vunpack.c.l.b16 %v46
    %v62 = vpack.c.b16 %v59, %v58
    %v63 = vpack.c.b16 %v61, %v60
    %vm66 = vcmask 261120
    %v68 = vsel %vm66, %v42, 0
    %70 = vmatprep.subr.bf16.mxu0 0
    %71 = vmatpush1.bf16.msra.mxu0 %v62
    %72 = vmatprep.subr.bf16.mxu0 0
    %73 = vmatpush1.bf16.msra.mxu0 %v63
    %74 = vmatprep.subr.bf16.mxu0 0
    %75 = vmatpush1.bf16.msra.mxu0 0
    %76 = vmatprep.subr.bf16.mxu0 0
    %77 = vmatpush1.bf16.msra.mxu0 0
    %78 = vmatprep.subr.bf16.mxu0 0
    %79 = vmatpush1.bf16.msra.mxu0 0
    %80 = vmatprep.subr.bf16.mxu0 0
    %81 = vmatpush1.bf16.msra.mxu0 0
    %82 = vmatprep.subr.bf16.mxu0 0
    %83 = vmatpush1.bf16.msra.mxu0 0
    %84 = vmatprep.subr.bf16.mxu0 0
    %85 = vmatpush1.bf16.msra.mxu0 0
    %86 = vmatprep.subr.bf16.mxu0 0
    %87 = vmatpush1.bf16.msra.mxu0 0
    %88 = vmatprep.subr.bf16.mxu0 0
    %89 = vmatpush1.bf16.msra.mxu0 0
    %90 = vmatprep.subr.bf16.mxu0 0
    %91 = vmatpush1.bf16.msra.mxu0 0
    %92 = vmatprep.subr.bf16.mxu0 0
    %93 = vmatpush1.bf16.msra.mxu0 0
    %94 = vmatprep.subr.bf16.mxu0 0
    %95 = vmatpush1.bf16.msra.mxu0 0
    %96 = vmatprep.subr.bf16.mxu0 0
    %97 = vmatpush1.bf16.msra.mxu0 0
    %98 = vmatprep.subr.bf16.mxu0 0
    %99 = vmatpush1.bf16.msra.mxu0 0
    %100 = vmatprep.subr.bf16.mxu0 0
    %101 = vmatpush1.bf16.msra.mxu0 0
    %102 = vmatprep.mubr.bf16.mxu0 0
    %103 = vmatmul.mubr.bf16.gmra.mrb[0].mxu0 %v68
    %v104 = vpop.f32.mrb[0].mxu0
    %v105 = vadd.f32 %v52, %v104
    %v106 = vpop.f32.mrb[0].mxu0
    %v107 = vpop.f32.mrb[0].mxu0
    %v108 = vadd.f32 %v52, %v107
    %v109 = vpop.f32.mrb[0].mxu0
    %110 = vdwg.mxu0
    %v111 = vpack.c.bf16 %v105, %v105
    %113 = vrot.lane.b32.xlu0 %v111, 96
    %v114 = vpop.permute.xlu0 %113
    %vm115 = vcmask 64512
    %v117 = vsel %vm115, %v111, 0
    %v120 = vsel %vm115, %v114, 0
    %122 = vmatprep.subr.bf16.mxu0 0
    %123 = vmatpush1.bf16.xpose.msra.mxu0 %v120
    %124 = vmatprep.subr.bf16.mxu0 0
    %125 = vmatpush1.bf16.xpose.msra.mxu0 0
    %126 = vmatprep.subr.bf16.mxu0 0
    %127 = vmatpush1.bf16.xpose.msra.mxu0 0
    %128 = vmatprep.subr.bf16.mxu0 0
    %129 = vmatpush1.bf16.xpose.msra.mxu0 0
    %130 = vmatprep.subr.bf16.mxu0 0
    %131 = vmatpush1.bf16.xpose.msra.mxu0 0
    %132 = vmatprep.subr.bf16.mxu0 0
    %133 = vmatpush1.bf16.xpose.msra.mxu0 0
    %134 = vmatprep.subr.bf16.mxu0 0
    %135 = vmatpush1.bf16.xpose.msra.mxu0 0
    %136 = vmatprep.subr.bf16.mxu0 0
    %137 = vmatpush1.bf16.xpose.msra.mxu0 0
    %138 = vmatprep.subr.bf16.mxu0 0
    %139 = vmatpush1.bf16.xpose.msra.mxu0 0
    %140 = vmatprep.subr.bf16.mxu0 0
    %141 = vmatpush1.bf16.xpose.msra.mxu0 0
    %142 = vmatprep.subr.bf16.mxu0 0
    %143 = vmatpush1.bf16.xpose.msra.mxu0 0
    %144 = vmatprep.subr.bf16.mxu0 0
    %145 = vmatpush1.bf16.xpose.msra.mxu0 0
    %146 = vmatprep.subr.bf16.mxu0 0
    %147 = vmatpush1.bf16.xpose.msra.mxu0 0
    %148 = vmatprep.subr.bf16.mxu0 0
    %149 = vmatpush1.bf16.xpose.msra.mxu0 0
    %150 = vmatprep.subr.bf16.mxu0 0
    %151 = vmatpush1.bf16.xpose.msra.mxu0 0
    %152 = vmatprep.subr.bf16.mxu0 0
    %153 = vmatpush1.bf16.xpose.msra.mxu0 0
    %154 = vmatprep.mubr.bf16.mxu0 0
    %155 = vmatmul.mubr.bf16.gmra.mrb[0].mxu0 %v117
    %v156 = vpop.f32.mrb[0].mxu0
    %v157 = vadd.f32 0.0, %v156
    %v158 = vpop.f32.mrb[0].mxu0
    %v159 = vpop.f32.mrb[0].mxu0
    %v160 = vpop.f32.mrb[0].mxu0
    %161 = vdwg.mxu0
    %v162 = vsel %vm115, %v157, -inf
    %163 = vmax.xlane.f32.xlu0 %v162
    %v164 = vpop.xlane.xlu0 %163
    %v165 = vsub.f32 %v157, %v164
    %v166 = vmul.f32 %v165, 1.442695
    %v167 = vpow.pop %v166
    %v168 = vsel %vm115, %v167, 0.0
    %169 = vadd.xlane.f32.xlu0 %v168
    %v170 = vpop.xlane.xlu0 %169
    %v171 = vpack.c.bf16 %v167, %v167
    %172 = vrot.lane.b32.xlu0 %v111, 64
    %v173 = vpop.permute.xlu0 %172
    %v175 = vsel %vm115, %v171, 0
    %vm177 = vcmask 1043456
    %v179 = vsel %vm177, %v173, 0
    %181 = vmatprep.subr.bf16.mxu0 0
    %182 = vmatpush1.bf16.msra.mxu0 %v179
    %183 = vmatprep.subr.bf16.mxu0 0
    %184 = vmatpush1.bf16.msra.mxu0 0
    %185 = vmatprep.subr.bf16.mxu0 0
    %186 = vmatpush1.bf16.msra.mxu0 0
    %187 = vmatprep.subr.bf16.mxu0 0
    %188 = vmatpush1.bf16.msra.mxu0 0
    %189 = vmatprep.subr.bf16.mxu0 0
    %190 = vmatpush1.bf16.msra.mxu0 0
    %191 = vmatprep.subr.bf16.mxu0 0
    %192 = vmatpush1.bf16.msra.mxu0 0
    %193 = vmatprep.subr.bf16.mxu0 0
    %194 = vmatpush1.bf16.msra.mxu0 0
    %195 = vmatprep.subr.bf16.mxu0 0
    %196 = vmatpush1.bf16.msra.mxu0 0
    %197 = vmatprep.subr.bf16.mxu0 0
    %198 = vmatpush1.bf16.msra.mxu0 0
    %199 = vmatprep.subr.bf16.mxu0 0
    %200 = vmatpush1.bf16.msra.mxu0 0
    %201 = vmatprep.subr.bf16.mxu0 0
    %202 = vmatpush1.bf16.msra.mxu0 0
    %203 = vmatprep.subr.bf16.mxu0 0
    %204 = vmatpush1.bf16.msra.mxu0 0
    %205 = vmatprep.subr.bf16.mxu0 0
    %206 = vmatpush1.bf16.msra.mxu0 0
    %207 = vmatprep.subr.bf16.mxu0 0
    %208 = vmatpush1.bf16.msra.mxu0 0
    %209 = vmatprep.subr.bf16.mxu0 0
    %210 = vmatpush1.bf16.msra.mxu0 0
    %211 = vmatprep.subr.bf16.mxu0 0
    %212 = vmatpush1.bf16.msra.mxu0 0
    %213 = vmatprep.mubr.bf16.mxu0 0
    %214 = vmatmul.mubr.bf16.gmra.mrb[0].mxu0 %v175
    %v215 = vpop.f32.mrb[0].mxu0
    %v216 = vadd.f32 0.0, %v215
    %v217 = vpop.f32.mrb[0].mxu0
    %v218 = vpop.f32.mrb[0].mxu0
    %v219 = vpop.f32.mrb[0].mxu0
    %220 = vdwg.mxu0
    %v221 = vrcp.pop %v170
    %v222 = vmul.f32 %v216, %v221
    %223 = vst.msk [vmem:[#allocation2] sm:$0xff] %vm115, %v222
    %224 = vrot.lane.b32.xlu0 %v111, 120
    %v225 = vpop.permute.xlu0 %224
    %226 = vrot.lane.b32.xlu0 %v111, 88
    %v227 = vpop.permute.xlu0 %226
    %v229 = vsel %vm115, %v225, 0
    %v232 = vsel %vm115, %v227, 0
    %234 = vmatprep.subr.bf16.mxu0 0
    %235 = vmatpush1.bf16.xpose.msra.mxu0 %v232
    %236 = vmatprep.subr.bf16.mxu0 0
    %237 = vmatpush1.bf16.xpose.msra.mxu0 0
    %238 = vmatprep.subr.bf16.mxu0 0
    %239 = vmatpush1.bf16.xpose.msra.mxu0 0
    %240 = vmatprep.subr.bf16.mxu0 0
    %241 = vmatpush1.bf16.xpose.msra.mxu0 0
    %242 = vmatprep.subr.bf16.mxu0 0
    %243 = vmatpush1.bf16.xpose.msra.mxu0 0
    %244 = vmatprep.subr.bf16.mxu0 0
    %245 = vmatpush1.bf16.xpose.msra.mxu0 0
    %246 = vmatprep.subr.bf16.mxu0 0
    %247 = vmatpush1.bf16.xpose.msra.mxu0 0
    %248 = vmatprep.subr.bf16.mxu0 0
    %249 = vmatpush1.bf16.xpose.msra.mxu0 0
    %250 = vmatprep.subr.bf16.mxu0 0
    %251 = vmatpush1.bf16.xpose.msra.mxu0 0
    %252 = vmatprep.subr.bf16.mxu0 0
    %253 = vmatpush1.bf16.xpose.msra.mxu0 0
    %254 = vmatprep.subr.bf16.mxu0 0
    %255 = vmatpush1.bf16.xpose.msra.mxu0 0
    %256 = vmatprep.subr.bf16.mxu0 0
    %257 = vmatpush1.bf16.xpose.msra.mxu0 0
    %258 = vmatprep.subr.bf16.mxu0 0
    %259 = vmatpush1.bf16.xpose.msra.mxu0 0
    %260 = vmatprep.subr.bf16.mxu0 0
    %261 = vmatpush1.bf16.xpose.msra.mxu0 0
    %262 = vmatprep.subr.bf16.mxu0 0
    %263 = vmatpush1.bf16.xpose.msra.mxu0 0
    %264 = vmatprep.subr.bf16.mxu0 0
    %265 = vmatpush1.bf16.xpose.msra.mxu0 0
    %266 = vmatprep.mubr.bf16.mxu0 0
    %267 = vmatmul.mubr.bf16.gmra.mrb[0].mxu0 %v229
    %v268 = vpop.f32.mrb[0].mxu0
    %v269 = vadd.f32 0.0, %v268
    %v270 = vpop.f32.mrb[0].mxu0
    %v271 = vpop.f32.mrb[0].mxu0
    %v272 = vpop.f32.mrb[0].mxu0
    %273 = vdwg.mxu0
    %v274 = vsel %vm115, %v269, -inf
    %275 = vmax.xlane.f32.xlu0 %v274
    %v276 = vpop.xlane.xlu0 %275
    %v277 = vsub.f32 %v269, %v276
    %v278 = vmul.f32 %v277, 1.442695
    %v279 = vpow.pop %v278
    %v280 = vsel %vm115, %v279, 0.0
    %281 = vadd.xlane.f32.xlu0 %v280
    %v282 = vpop.xlane.xlu0 %281
    %v283 = vpack.c.bf16 %v279, %v279
    %284 = vrot.lane.b32.xlu0 %v111, 56
    %v285 = vpop.permute.xlu0 %284
    %v287 = vsel %vm115, %v283, 0
    %v290 = vsel %vm177, %v285, 0
    %292 = vmatprep.subr.bf16.mxu0 0
    %293 = vmatpush1.bf16.msra.mxu0 %v290
    %294 = vmatprep.subr.bf16.mxu0 0
    %295 = vmatpush1.bf16.msra.mxu0 0
    %296 = vmatprep.subr.bf16.mxu0 0
    %297 = vmatpush1.bf16.msra.mxu0 0
    %298 = vmatprep.subr.bf16.mxu0 0
    %299 = vmatpush1.bf16.msra.mxu0 0
    %300 = vmatprep.subr.bf16.mxu0 0
    %301 = vmatpush1.bf16.msra.mxu0 0
    %302 = vmatprep.subr.bf16.mxu0 0
    %303 = vmatpush1.bf16.msra.mxu0 0
    %304 = vmatprep.subr.bf16.mxu0 0
    %305 = vmatpush1.bf16.msra.mxu0 0
    %306 = vmatprep.subr.bf16.mxu0 0
    %307 = vmatpush1.bf16.msra.mxu0 0
    %308 = vmatprep.subr.bf16.mxu0 0
    %309 = vmatpush1.bf16.msra.mxu0 0
    %310 = vmatprep.subr.bf16.mxu0 0
    %311 = vmatpush1.bf16.msra.mxu0 0
    %312 = vmatprep.subr.bf16.mxu0 0
    %313 = vmatpush1.bf16.msra.mxu0 0
    %314 = vmatprep.subr.bf16.mxu0 0
    %315 = vmatpush1.bf16.msra.mxu0 0
    %316 = vmatprep.subr.bf16.mxu0 0
    %317 = vmatpush1.bf16.msra.mxu0 0
    %318 = vmatprep.subr.bf16.mxu0 0
    %319 = vmatpush1.bf16.msra.mxu0 0
    %320 = vmatprep.subr.bf16.mxu0 0
    %321 = vmatpush1.bf16.msra.mxu0 0
    %322 = vmatprep.subr.bf16.mxu0 0
    %323 = vmatpush1.bf16.msra.mxu0 0
    %324 = vmatprep.mubr.bf16.mxu0 0
    %325 = vmatmul.mubr.bf16.gmra.mrb[0].mxu0 %v287
    %v326 = vpop.f32.mrb[0].mxu0
    %v327 = vadd.f32 0.0, %v326
    %v328 = vpop.f32.mrb[0].mxu0
    %v329 = vpop.f32.mrb[0].mxu0
    %v330 = vpop.f32.mrb[0].mxu0
    %331 = vdwg.mxu0
    %v332 = vrcp.pop %v282
    %v333 = vmul.f32 %v327, %v332
    %335 = vrot.lane.b32.xlu0 %v333, 8
    %v336 = vpop.permute.xlu0 %335
    %vm338 = vcmask 130112
    %339 = vst.msk [vmem:[#allocation2] sm:$0xff] %vm338, %v336
    %340 = vrot.lane.b32.xlu0 %v111, 112
    %v341 = vpop.permute.xlu0 %340
    %342 = vrot.lane.b32.xlu0 %v111, 80
    %v343 = vpop.permute.xlu0 %342
    %v345 = vsel %vm115, %v341, 0
    %v348 = vsel %vm115, %v343, 0
    %350 = vmatprep.subr.bf16.mxu0 0
    %351 = vmatpush1.bf16.xpose.msra.mxu0 %v348
    %352 = vmatprep.subr.bf16.mxu0 0
    %353 = vmatpush1.bf16.xpose.msra.mxu0 0
    %354 = vmatprep.subr.bf16.mxu0 0
    %355 = vmatpush1.bf16.xpose.msra.mxu0 0
    %356 = vmatprep.subr.bf16.mxu0 0
    %357 = vmatpush1.bf16.xpose.msra.mxu0 0
    %358 = vmatprep.subr.bf16.mxu0 0
    %359 = vmatpush1.bf16.xpose.msra.mxu0 0
    %360 = vmatprep.subr.bf16.mxu0 0
    %361 = vmatpush1.bf16.xpose.msra.mxu0 0
    %362 = vmatprep.subr.bf16.mxu0 0
    %363 = vmatpush1.bf16.xpose.msra.mxu0 0
    %364 = vmatprep.subr.bf16.mxu0 0
    %365 = vmatpush1.bf16.xpose.msra.mxu0 0
    %366 = vmatprep.subr.bf16.mxu0 0
    %367 = vmatpush1.bf16.xpose.msra.mxu0 0
    %368 = vmatprep.subr.bf16.mxu0 0
    %369 = vmatpush1.bf16.xpose.msra.mxu0 0
    %370 = vmatprep.subr.bf16.mxu0 0
    %371 = vmatpush1.bf16.xpose.msra.mxu0 0
    %372 = vmatprep.subr.bf16.mxu0 0
    %373 = vmatpush1.bf16.xpose.msra.mxu0 0
    %374 = vmatprep.subr.bf16.mxu0 0
    %375 = vmatpush1.bf16.xpose.msra.mxu0 0
    %376 = vmatprep.subr.bf16.mxu0 0
    %377 = vmatpush1.bf16.xpose.msra.mxu0 0
    %378 = vmatprep.subr.bf16.mxu0 0
    %379 = vmatpush1.bf16.xpose.msra.mxu0 0
    %380 = vmatprep.subr.bf16.mxu0 0
    %381 = vmatpush1.bf16.xpose.msra.mxu0 0
    %382 = vmatprep.mubr.bf16.mxu0 0
    %383 = vmatmul.mubr.bf16.gmra.mrb[0].mxu0 %v345
    %v384 = vpop.f32.mrb[0].mxu0
    %v385 = vadd.f32 0.0, %v384
    %v386 = vpop.f32.mrb[0].mxu0
    %v387 = vpop.f32.mrb[0].mxu0
    %v388 = vpop.f32.mrb[0].mxu0
    %389 = vdwg.mxu0
    %v390 = vsel %vm115, %v385, -inf
    %391 = vmax.xlane.f32.xlu0 %v390
    %v392 = vpop.xlane.xlu0 %391
    %v393 = vsub.f32 %v385, %v392
    %v394 = vmul.f32 %v393, 1.442695
    %v395 = vpow.pop %v394
    %v396 = vsel %vm115, %v395, 0.0
    %397 = vadd.xlane.f32.xlu0 %v396
    %v398 = vpop.xlane.xlu0 %397
    %v399 = vpack.c.bf16 %v395, %v395
    %400 = vrot.lane.b32.xlu0 %v111, 48
    %v401 = vpop.permute.xlu0 %400
    %v403 = vsel %vm115, %v399, 0
    %v406 = vsel %vm177, %v401, 0
    %408 = vmatprep.subr.bf16.mxu0 0
    %409 = vmatpush1.bf16.msra.mxu0 %v406
    %410 = vmatprep.subr.bf16.mxu0 0
    %411 = vmatpush1.bf16.msra.mxu0 0
    %412 = vmatprep.subr.bf16.mxu0 0
    %413 = vmatpush1.bf16.msra.mxu0 0
    %414 = vmatprep.subr.bf16.mxu0 0
    %415 = vmatpush1.bf16.msra.mxu0 0
    %416 = vmatprep.subr.bf16.mxu0 0
    %417 = vmatpush1.bf16.msra.mxu0 0
    %418 = vmatprep.subr.bf16.mxu0 0
    %419 = vmatpush1.bf16.msra.mxu0 0
    %420 = vmatprep.subr.bf16.mxu0 0
    %421 = vmatpush1.bf16.msra.mxu0 0
    %422 = vmatprep.subr.bf16.mxu0 0
    %423 = vmatpush1.bf16.msra.mxu0 0
    %424 = vmatprep.subr.bf16.mxu0 0
    %425 = vmatpush1.bf16.msra.mxu0 0
    %426 = vmatprep.subr.bf16.mxu0 0
    %427 = vmatpush1.bf16.msra.mxu0 0
    %428 = vmatprep.subr.bf16.mxu0 0
    %429 = vmatpush1.bf16.msra.mxu0 0
    %430 = vmatprep.subr.bf16.mxu0 0
    %431 = vmatpush1.bf16.msra.mxu0 0
    %432 = vmatprep.subr.bf16.mxu0 0
    %433 = vmatpush1.bf16.msra.mxu0 0
    %434 = vmatprep.subr.bf16.mxu0 0
    %435 = vmatpush1.bf16.msra.mxu0 0
    %436 = vmatprep.subr.bf16.mxu0 0
    %437 = vmatpush1.bf16.msra.mxu0 0
    %438 = vmatprep.subr.bf16.mxu0 0
    %439 = vmatpush1.bf16.msra.mxu0 0
    %440 = vmatprep.mubr.bf16.mxu0 0
    %441 = vmatmul.mubr.bf16.gmra.mrb[0].mxu0 %v403
    %v442 = vpop.f32.mrb[0].mxu0
    %v443 = vadd.f32 0.0, %v442
    %v444 = vpop.f32.mrb[0].mxu0
    %v445 = vpop.f32.mrb[0].mxu0
    %v446 = vpop.f32.mrb[0].mxu0
    %447 = vdwg.mxu0
    %v448 = vrcp.pop %v398
    %v449 = vmul.f32 %v443, %v448
    %451 = vrot.lane.b32.xlu0 %v449, 16
    %v452 = vpop.permute.xlu0 %451
    %vm454 = vcmask 195712
    %455 = vst.msk [vmem:[#allocation2] sm:$0xff] %vm454, %v452
    %456 = vrot.lane.b32.xlu0 %v111, 104
    %v457 = vpop.permute.xlu0 %456
    %458 = vrot.lane.b32.xlu0 %v111, 72
    %v459 = vpop.permute.xlu0 %458
    %v461 = vsel %vm115, %v457, 0
    %v464 = vsel %vm115, %v459, 0
    %466 = vmatprep.subr.bf16.mxu0 0
    %467 = vmatpush1.bf16.xpose.msra.mxu0 %v464
    %468 = vmatprep.subr.bf16.mxu0 0
    %469 = vmatpush1.bf16.xpose.msra.mxu0 0
    %470 = vmatprep.subr.bf16.mxu0 0
    %471 = vmatpush1.bf16.xpose.msra.mxu0 0
    %472 = vmatprep.subr.bf16.mxu0 0
    %473 = vmatpush1.bf16.xpose.msra.mxu0 0
    %474 = vmatprep.subr.bf16.mxu0 0
    %475 = vmatpush1.bf16.xpose.msra.mxu0 0
    %476 = vmatprep.subr.bf16.mxu0 0
    %477 = vmatpush1.bf16.xpose.msra.mxu0 0
    %478 = vmatprep.subr.bf16.mxu0 0
    %479 = vmatpush1.bf16.xpose.msra.mxu0 0
    %480 = vmatprep.subr.bf16.mxu0 0
    %481 = vmatpush1.bf16.xpose.msra.mxu0 0
    %482 = vmatprep.subr.bf16.mxu0 0
    %483 = vmatpush1.bf16.xpose.msra.mxu0 0
    %484 = vmatprep.subr.bf16.mxu0 0
    %485 = vmatpush1.bf16.xpose.msra.mxu0 0
    %486 = vmatprep.subr.bf16.mxu0 0
    %487 = vmatpush1.bf16.xpose.msra.mxu0 0
    %488 = vmatprep.subr.bf16.mxu0 0
    %489 = vmatpush1.bf16.xpose.msra.mxu0 0
    %490 = vmatprep.subr.bf16.mxu0 0
    %491 = vmatpush1.bf16.xpose.msra.mxu0 0
    %492 = vmatprep.subr.bf16.mxu0 0
    %493 = vmatpush1.bf16.xpose.msra.mxu0 0
    %494 = vmatprep.subr.bf16.mxu0 0
    %495 = vmatpush1.bf16.xpose.msra.mxu0 0
    %496 = vmatprep.subr.bf16.mxu0 0
    %497 = vmatpush1.bf16.xpose.msra.mxu0 0
    %498 = vmatprep.mubr.bf16.mxu0 0
    %499 = vmatmul.mubr.bf16.gmra.mrb[0].mxu0 %v461
    %v500 = vpop.f32.mrb[0].mxu0
    %v501 = vadd.f32 0.0, %v500
    %v502 = vpop.f32.mrb[0].mxu0
    %v503 = vpop.f32.mrb[0].mxu0
    %v504 = vpop.f32.mrb[0].mxu0
    %505 = vdwg.mxu0
    %v506 = vsel %vm115, %v501, -inf
    %507 = vmax.xlane.f32.xlu0 %v506
    %v508 = vpop.xlane.xlu0 %507
    %v509 = vsub.f32 %v501, %v508
    %v510 = vmul.f32 %v509, 1.442695
    %v511 = vpow.pop %v510
    %v512 = vsel %vm115, %v511, 0.0
    %513 = vadd.xlane.f32.xlu0 %v512
    %v514 = vpop.xlane.xlu0 %513
    %v515 = vpack.c.bf16 %v511, %v511
    %516 = vrot.lane.b32.xlu0 %v111, 40
    %v517 = vpop.permute.xlu0 %516
    %v519 = vsel %vm115, %v515, 0
    %v522 = vsel %vm177, %v517, 0
    %524 = vmatprep.subr.bf16.mxu0 0
    %525 = vmatpush1.bf16.msra.mxu0 %v522
    %526 = vmatprep.subr.bf16.mxu0 0
    %527 = vmatpush1.bf16.msra.mxu0 0
    %528 = vmatprep.subr.bf16.mxu0 0
    %529 = vmatpush1.bf16.msra.mxu0 0
    %530 = vmatprep.subr.bf16.mxu0 0
    %531 = vmatpush1.bf16.msra.mxu0 0
    %532 = vmatprep.subr.bf16.mxu0 0
    %533 = vmatpush1.bf16.msra.mxu0 0
    %534 = vmatprep.subr.bf16.mxu0 0
    %535 = vmatpush1.bf16.msra.mxu0 0
    %536 = vmatprep.subr.bf16.mxu0 0
    %537 = vmatpush1.bf16.msra.mxu0 0
    %538 = vmatprep.subr.bf16.mxu0 0
    %539 = vmatpush1.bf16.msra.mxu0 0
    %540 = vmatprep.subr.bf16.mxu0 0
    %541 = vmatpush1.bf16.msra.mxu0 0
    %542 = vmatprep.subr.bf16.mxu0 0
    %543 = vmatpush1.bf16.msra.mxu0 0
    %544 = vmatprep.subr.bf16.mxu0 0
    %545 = vmatpush1.bf16.msra.mxu0 0
    %546 = vmatprep.subr.bf16.mxu0 0
    %547 = vmatpush1.bf16.msra.mxu0 0
    %548 = vmatprep.subr.bf16.mxu0 0
    %549 = vmatpush1.bf16.msra.mxu0 0
    %550 = vmatprep.subr.bf16.mxu0 0
    %551 = vmatpush1.bf16.msra.mxu0 0
    %552 = vmatprep.subr.bf16.mxu0 0
    %553 = vmatpush1.bf16.msra.mxu0 0
    %554 = vmatprep.subr.bf16.mxu0 0
    %555 = vmatpush1.bf16.msra.mxu0 0
    %556 = vmatprep.mubr.bf16.mxu0 0
    %557 = vmatmul.mubr.bf16.gmra.mrb[0].mxu0 %v519
    %v558 = vpop.f32.mrb[0].mxu0
    %v559 = vadd.f32 0.0, %v558
    %v560 = vpop.f32.mrb[0].mxu0
    %v561 = vpop.f32.mrb[0].mxu0
    %v562 = vpop.f32.mrb[0].mxu0
    %563 = vdwg.mxu0
    %v564 = vrcp.pop %v514
    %v565 = vmul.f32 %v559, %v564
    %567 = vrot.lane.b32.xlu0 %v565, 24
    %v568 = vpop.permute.xlu0 %567
    %vm570 = vcmask 261312
    %571 = vst.msk [vmem:[#allocation2] sm:$0xff] %vm570, %v568
    %v572 = vpack.c.bf16 %v108, %v108
    %574 = vrot.lane.b32.xlu0 %v572, 96
    %v575 = vpop.permute.xlu0 %574
    %v577 = vsel %vm115, %v572, 0
    %v580 = vsel %vm115, %v575, 0
    %582 = vmatprep.subr.bf16.mxu0 0
    %583 = vmatpush1.bf16.xpose.msra.mxu0 %v580
    %584 = vmatprep.subr.bf16.mxu0 0
    %585 = vmatpush1.bf16.xpose.msra.mxu0 0
    %586 = vmatprep.subr.bf16.mxu0 0
    %587 = vmatpush1.bf16.xpose.msra.mxu0 0
    %588 = vmatprep.subr.bf16.mxu0 0
    %589 = vmatpush1.bf16.xpose.msra.mxu0 0
    %590 = vmatprep.subr.bf16.mxu0 0
    %591 = vmatpush1.bf16.xpose.msra.mxu0 0
    %592 = vmatprep.subr.bf16.mxu0 0
    %593 = vmatpush1.bf16.xpose.msra.mxu0 0
    %594 = vmatprep.subr.bf16.mxu0 0
    %595 = vmatpush1.bf16.xpose.msra.mxu0 0
    %596 = vmatprep.subr.bf16.mxu0 0
    %597 = vmatpush1.bf16.xpose.msra.mxu0 0
    %598 = vmatprep.subr.bf16.mxu0 0
    %599 = vmatpush1.bf16.xpose.msra.mxu0 0
    %600 = vmatprep.subr.bf16.mxu0 0
    %601 = vmatpush1.bf16.xpose.msra.mxu0 0
    %602 = vmatprep.subr.bf16.mxu0 0
    %603 = vmatpush1.bf16.xpose.msra.mxu0 0
    %604 = vmatprep.subr.bf16.mxu0 0
    %605 = vmatpush1.bf16.xpose.msra.mxu0 0
    %606 = vmatprep.subr.bf16.mxu0 0
    %607 = vmatpush1.bf16.xpose.msra.mxu0 0
    %608 = vmatprep.subr.bf16.mxu0 0
    %609 = vmatpush1.bf16.xpose.msra.mxu0 0
    %610 = vmatprep.subr.bf16.mxu0 0
    %611 = vmatpush1.bf16.xpose.msra.mxu0 0
    %612 = vmatprep.subr.bf16.mxu0 0
    %613 = vmatpush1.bf16.xpose.msra.mxu0 0
    %614 = vmatprep.mubr.bf16.mxu0 0
    %615 = vmatmul.mubr.bf16.gmra.mrb[0].mxu0 %v577
    %v616 = vpop.f32.mrb[0].mxu0
    %v617 = vadd.f32 0.0, %v616
    %v618 = vpop.f32.mrb[0].mxu0
    %v619 = vpop.f32.mrb[0].mxu0
    %v620 = vpop.f32.mrb[0].mxu0
    %621 = vdwg.mxu0
    %v622 = vsel %vm115, %v617, -inf
    %623 = vmax.xlane.f32.xlu0 %v622
    %v624 = vpop.xlane.xlu0 %623
    %v625 = vsub.f32 %v617, %v624
    %v626 = vmul.f32 %v625, 1.442695
    %v627 = vpow.pop %v626
    %v628 = vsel %vm115, %v627, 0.0
    %629 = vadd.xlane.f32.xlu0 %v628
    %v630 = vpop.xlane.xlu0 %629
    %v631 = vpack.c.bf16 %v627, %v627
    %632 = vrot.lane.b32.xlu0 %v572, 64
    %v633 = vpop.permute.xlu0 %632
    %v635 = vsel %vm115, %v631, 0
    %v638 = vsel %vm177, %v633, 0
    %640 = vmatprep.subr.bf16.mxu0 0
    %641 = vmatpush1.bf16.msra.mxu0 %v638
    %642 = vmatprep.subr.bf16.mxu0 0
    %643 = vmatpush1.bf16.msra.mxu0 0
    %644 = vmatprep.subr.bf16.mxu0 0
    %645 = vmatpush1.bf16.msra.mxu0 0
    %646 = vmatprep.subr.bf16.mxu0 0
    %647 = vmatpush1.bf16.msra.mxu0 0
    %648 = vmatprep.subr.bf16.mxu0 0
    %649 = vmatpush1.bf16.msra.mxu0 0
    %650 = vmatprep.subr.bf16.mxu0 0
    %651 = vmatpush1.bf16.msra.mxu0 0
    %652 = vmatprep.subr.bf16.mxu0 0
    %653 = vmatpush1.bf16.msra.mxu0 0
    %654 = vmatprep.subr.bf16.mxu0 0
    %655 = vmatpush1.bf16.msra.mxu0 0
    %656 = vmatprep.subr.bf16.mxu0 0
    %657 = vmatpush1.bf16.msra.mxu0 0
    %658 = vmatprep.subr.bf16.mxu0 0
    %659 = vmatpush1.bf16.msra.mxu0 0
    %660 = vmatprep.subr.bf16.mxu0 0
    %661 = vmatpush1.bf16.msra.mxu0 0
    %662 = vmatprep.subr.bf16.mxu0 0
    %663 = vmatpush1.bf16.msra.mxu0 0
    %664 = vmatprep.subr.bf16.mxu0 0
    %665 = vmatpush1.bf16.msra.mxu0 0
    %666 = vmatprep.subr.bf16.mxu0 0
    %667 = vmatpush1.bf16.msra.mxu0 0
    %668 = vmatprep.subr.bf16.mxu0 0
    %669 = vmatpush1.bf16.msra.mxu0 0
    %670 = vmatprep.subr.bf16.mxu0 0
    %671 = vmatpush1.bf16.msra.mxu0 0
    %672 = vmatprep.mubr.bf16.mxu0 0
    %673 = vmatmul.mubr.bf16.gmra.mrb[0].mxu0 %v635
    %v674 = vpop.f32.mrb[0].mxu0
    %v675 = vadd.f32 0.0, %v674
    %v676 = vpop.f32.mrb[0].mxu0
    %v677 = vpop.f32.mrb[0].mxu0
    %v678 = vpop.f32.mrb[0].mxu0
    %679 = vdwg.mxu0
    %v680 = vrcp.pop %v630
    %v681 = vmul.f32 %v675, %v680
    %682 = vst.msk [vmem:[#allocation2 + $0x8] sm:$0xff] %vm115, %v681
    %683 = vrot.lane.b32.xlu0 %v572, 120
    %v684 = vpop.permute.xlu0 %683
    %685 = vrot.lane.b32.xlu0 %v572, 88
    %v686 = vpop.permute.xlu0 %685
    %v688 = vsel %vm115, %v684, 0
    %v691 = vsel %vm115, %v686, 0
    %693 = vmatprep.subr.bf16.mxu0 0
    %694 = vmatpush1.bf16.xpose.msra.mxu0 %v691
    %695 = vmatprep.subr.bf16.mxu0 0
    %696 = vmatpush1.bf16.xpose.msra.mxu0 0
    %697 = vmatprep.subr.bf16.mxu0 0
    %698 = vmatpush1.bf16.xpose.msra.mxu0 0
    %699 = vmatprep.subr.bf16.mxu0 0
    %700 = vmatpush1.bf16.xpose.msra.mxu0 0
    %701 = vmatprep.subr.bf16.mxu0 0
    %702 = vmatpush1.bf16.xpose.msra.mxu0 0
    %703 = vmatprep.subr.bf16.mxu0 0
    %704 = vmatpush1.bf16.xpose.msra.mxu0 0
    %705 = vmatprep.subr.bf16.mxu0 0
    %706 = vmatpush1.bf16.xpose.msra.mxu0 0
    %707 = vmatprep.subr.bf16.mxu0 0
    %708 = vmatpush1.bf16.xpose.msra.mxu0 0
    %709 = vmatprep.subr.bf16.mxu0 0
    %710 = vmatpush1.bf16.xpose.msra.mxu0 0
    %711 = vmatprep.subr.bf16.mxu0 0
    %712 = vmatpush1.bf16.xpose.msra.mxu0 0
    %713 = vmatprep.subr.bf16.mxu0 0
    %714 = vmatpush1.bf16.xpose.msra.mxu0 0
    %715 = vmatprep.subr.bf16.mxu0 0
    %716 = vmatpush1.bf16.xpose.msra.mxu0 0
    %717 = vmatprep.subr.bf16.mxu0 0
    %718 = vmatpush1.bf16.xpose.msra.mxu0 0
    %719 = vmatprep.subr.bf16.mxu0 0
    %720 = vmatpush1.bf16.xpose.msra.mxu0 0
    %721 = vmatprep.subr.bf16.mxu0 0
    %722 = vmatpush1.bf16.xpose.msra.mxu0 0
    %723 = vmatprep.subr.bf16.mxu0 0
    %724 = vmatpush1.bf16.xpose.msra.mxu0 0
    %725 = vmatprep.mubr.bf16.mxu0 0
    %726 = vmatmul.mubr.bf16.gmra.mrb[0].mxu0 %v688
    %v727 = vpop.f32.mrb[0].mxu0
    %v728 = vadd.f32 0.0, %v727
    %v729 = vpop.f32.mrb[0].mxu0
    %v730 = vpop.f32.mrb[0].mxu0
    %v731 = vpop.f32.mrb[0].mxu0
    %732 = vdwg.mxu0
    %v733 = vsel %vm115, %v728, -inf
    %734 = vmax.xlane.f32.xlu0 %v733
    %v735 = vpop.xlane.xlu0 %734
    %v736 = vsub.f32 %v728, %v735
    %v737 = vmul.f32 %v736, 1.442695
    %v738 = vpow.pop %v737
    %v739 = vsel %vm115, %v738, 0.0
    %740 = vadd.xlane.f32.xlu0 %v739
    %v741 = vpop.xlane.xlu0 %740
    %v742 = vpack.c.bf16 %v738, %v738
    %743 = vrot.lane.b32.xlu0 %v572, 56
    %v744 = vpop.permute.xlu0 %743
    %v746 = vsel %vm115, %v742, 0
    %v749 = vsel %vm177, %v744, 0
    %751 = vmatprep.subr.bf16.mxu0 0
    %752 = vmatpush1.bf16.msra.mxu0 %v749
    %753 = vmatprep.subr.bf16.mxu0 0
    %754 = vmatpush1.bf16.msra.mxu0 0
    %755 = vmatprep.subr.bf16.mxu0 0
    %756 = vmatpush1.bf16.msra.mxu0 0
    %757 = vmatprep.subr.bf16.mxu0 0
    %758 = vmatpush1.bf16.msra.mxu0 0
    %759 = vmatprep.subr.bf16.mxu0 0
    %760 = vmatpush1.bf16.msra.mxu0 0
    %761 = vmatprep.subr.bf16.mxu0 0
    %762 = vmatpush1.bf16.msra.mxu0 0
    %763 = vmatprep.subr.bf16.mxu0 0
    %764 = vmatpush1.bf16.msra.mxu0 0
    %765 = vmatprep.subr.bf16.mxu0 0
    %766 = vmatpush1.bf16.msra.mxu0 0
    %767 = vmatprep.subr.bf16.mxu0 0
    %768 = vmatpush1.bf16.msra.mxu0 0
    %769 = vmatprep.subr.bf16.mxu0 0
    %770 = vmatpush1.bf16.msra.mxu0 0
    %771 = vmatprep.subr.bf16.mxu0 0
    %772 = vmatpush1.bf16.msra.mxu0 0
    %773 = vmatprep.subr.bf16.mxu0 0
    %774 = vmatpush1.bf16.msra.mxu0 0
    %775 = vmatprep.subr.bf16.mxu0 0
    %776 = vmatpush1.bf16.msra.mxu0 0
    %777 = vmatprep.subr.bf16.mxu0 0
    %778 = vmatpush1.bf16.msra.mxu0 0
    %779 = vmatprep.subr.bf16.mxu0 0
    %780 = vmatpush1.bf16.msra.mxu0 0
    %781 = vmatprep.subr.bf16.mxu0 0
    %782 = vmatpush1.bf16.msra.mxu0 0
    %783 = vmatprep.mubr.bf16.mxu0 0
    %784 = vmatmul.mubr.bf16.gmra.mrb[0].mxu0 %v746
    %v785 = vpop.f32.mrb[0].mxu0
    %v786 = vadd.f32 0.0, %v785
    %v787 = vpop.f32.mrb[0].mxu0
    %v788 = vpop.f32.mrb[0].mxu0
    %v789 = vpop.f32.mrb[0].mxu0
    %790 = vdwg.mxu0
    %v791 = vrcp.pop %v741
    %v792 = vmul.f32 %v786, %v791
    %794 = vrot.lane.b32.xlu0 %v792, 8
    %v795 = vpop.permute.xlu0 %794
    %797 = vst.msk [vmem:[#allocation2 + $0x8] sm:$0xff] %vm338, %v795
    %798 = vrot.lane.b32.xlu0 %v572, 112
    %v799 = vpop.permute.xlu0 %798
    %800 = vrot.lane.b32.xlu0 %v572, 80
    %v801 = vpop.permute.xlu0 %800
    %v803 = vsel %vm115, %v799, 0
    %v806 = vsel %vm115, %v801, 0
    %808 = vmatprep.subr.bf16.mxu0 0
    %809 = vmatpush1.bf16.xpose.msra.mxu0 %v806
    %810 = vmatprep.subr.bf16.mxu0 0
    %811 = vmatpush1.bf16.xpose.msra.mxu0 0
    %812 = vmatprep.subr.bf16.mxu0 0
    %813 = vmatpush1.bf16.xpose.msra.mxu0 0
    %814 = vmatprep.subr.bf16.mxu0 0
    %815 = vmatpush1.bf16.xpose.msra.mxu0 0
    %816 = vmatprep.subr.bf16.mxu0 0
    %817 = vmatpush1.bf16.xpose.msra.mxu0 0
    %818 = vmatprep.subr.bf16.mxu0 0
    %819 = vmatpush1.bf16.xpose.msra.mxu0 0
    %820 = vmatprep.subr.bf16.mxu0 0
    %821 = vmatpush1.bf16.xpose.msra.mxu0 0
    %822 = vmatprep.subr.bf16.mxu0 0
    %823 = vmatpush1.bf16.xpose.msra.mxu0 0
    %824 = vmatprep.subr.bf16.mxu0 0
    %825 = vmatpush1.bf16.xpose.msra.mxu0 0
    %826 = vmatprep.subr.bf16.mxu0 0
    %827 = vmatpush1.bf16.xpose.msra.mxu0 0
    %828 = vmatprep.subr.bf16.mxu0 0
    %829 = vmatpush1.bf16.xpose.msra.mxu0 0
    %830 = vmatprep.subr.bf16.mxu0 0
    %831 = vmatpush1.bf16.xpose.msra.mxu0 0
    %832 = vmatprep.subr.bf16.mxu0 0
    %833 = vmatpush1.bf16.xpose.msra.mxu0 0
    %834 = vmatprep.subr.bf16.mxu0 0
    %835 = vmatpush1.bf16.xpose.msra.mxu0 0
    %836 = vmatprep.subr.bf16.mxu0 0
    %837 = vmatpush1.bf16.xpose.msra.mxu0 0
    %838 = vmatprep.subr.bf16.mxu0 0
    %839 = vmatpush1.bf16.xpose.msra.mxu0 0
    %840 = vmatprep.mubr.bf16.mxu0 0
    %841 = vmatmul.mubr.bf16.gmra.mrb[0].mxu0 %v803
    %v842 = vpop.f32.mrb[0].mxu0
    %v843 = vadd.f32 0.0, %v842
    %v844 = vpop.f32.mrb[0].mxu0
    %v845 = vpop.f32.mrb[0].mxu0
    %v846 = vpop.f32.mrb[0].mxu0
    %847 = vdwg.mxu0
    %v848 = vsel %vm115, %v843, -inf
    %849 = vmax.xlane.f32.xlu0 %v848
    %v850 = vpop.xlane.xlu0 %849
    %v851 = vsub.f32 %v843, %v850
    %v852 = vmul.f32 %v851, 1.442695
    %v853 = vpow.pop %v852
    %v854 = vsel %vm115, %v853, 0.0
    %855 = vadd.xlane.f32.xlu0 %v854
    %v856 = vpop.xlane.xlu0 %855
    %v857 = vpack.c.bf16 %v853, %v853
    %858 = vrot.lane.b32.xlu0 %v572, 48
    %v859 = vpop.permute.xlu0 %858
    %v861 = vsel %vm115, %v857, 0
    %v864 = vsel %vm177, %v859, 0
    %866 = vmatprep.subr.bf16.mxu0 0
    %867 = vmatpush1.bf16.msra.mxu0 %v864
    %868 = vmatprep.subr.bf16.mxu0 0
    %869 = vmatpush1.bf16.msra.mxu0 0
    %870 = vmatprep.subr.bf16.mxu0 0
    %871 = vmatpush1.bf16.msra.mxu0 0
    %872 = vmatprep.subr.bf16.mxu0 0
    %873 = vmatpush1.bf16.msra.mxu0 0
    %874 = vmatprep.subr.bf16.mxu0 0
    %875 = vmatpush1.bf16.msra.mxu0 0
    %876 = vmatprep.subr.bf16.mxu0 0
    %877 = vmatpush1.bf16.msra.mxu0 0
    %878 = vmatprep.subr.bf16.mxu0 0
    %879 = vmatpush1.bf16.msra.mxu0 0
    %880 = vmatprep.subr.bf16.mxu0 0
    %881 = vmatpush1.bf16.msra.mxu0 0
    %882 = vmatprep.subr.bf16.mxu0 0
    %883 = vmatpush1.bf16.msra.mxu0 0
    %884 = vmatprep.subr.bf16.mxu0 0
    %885 = vmatpush1.bf16.msra.mxu0 0
    %886 = vmatprep.subr.bf16.mxu0 0
    %887 = vmatpush1.bf16.msra.mxu0 0
    %888 = vmatprep.subr.bf16.mxu0 0
    %889 = vmatpush1.bf16.msra.mxu0 0
    %890 = vmatprep.subr.bf16.mxu0 0
    %891 = vmatpush1.bf16.msra.mxu0 0
    %892 = vmatprep.subr.bf16.mxu0 0
    %893 = vmatpush1.bf16.msra.mxu0 0
    %894 = vmatprep.subr.bf16.mxu0 0
    %895 = vmatpush1.bf16.msra.mxu0 0
    %896 = vmatprep.subr.bf16.mxu0 0
    %897 = vmatpush1.bf16.msra.mxu0 0
    %898 = vmatprep.mubr.bf16.mxu0 0
    %899 = vmatmul.mubr.bf16.gmra.mrb[0].mxu0 %v861
    %v900 = vpop.f32.mrb[0].mxu0
    %v901 = vadd.f32 0.0, %v900
    %v902 = vpop.f32.mrb[0].mxu0
    %v903 = vpop.f32.mrb[0].mxu0
    %v904 = vpop.f32.mrb[0].mxu0
    %905 = vdwg.mxu0
    %v906 = vrcp.pop %v856
    %v907 = vmul.f32 %v901, %v906
    %909 = vrot.lane.b32.xlu0 %v907, 16
    %v910 = vpop.permute.xlu0 %909
    %912 = vst.msk [vmem:[#allocation2 + $0x8] sm:$0xff] %vm454, %v910
    %913 = vrot.lane.b32.xlu0 %v572, 104
    %v914 = vpop.permute.xlu0 %913
    %915 = vrot.lane.b32.xlu0 %v572, 72
    %v916 = vpop.permute.xlu0 %915
    %v918 = vsel %vm115, %v914, 0
    %v921 = vsel %vm115, %v916, 0
    %923 = vmatprep.subr.bf16.mxu0 0
    %924 = vmatpush1.bf16.xpose.msra.mxu0 %v921
    %925 = vmatprep.subr.bf16.mxu0 0
    %926 = vmatpush1.bf16.xpose.msra.mxu0 0
    %927 = vmatprep.subr.bf16.mxu0 0
    %928 = vmatpush1.bf16.xpose.msra.mxu0 0
    %929 = vmatprep.subr.bf16.mxu0 0
    %930 = vmatpush1.bf16.xpose.msra.mxu0 0
    %931 = vmatprep.subr.bf16.mxu0 0
    %932 = vmatpush1.bf16.xpose.msra.mxu0 0
    %933 = vmatprep.subr.bf16.mxu0 0
    %934 = vmatpush1.bf16.xpose.msra.mxu0 0
    %935 = vmatprep.subr.bf16.mxu0 0
    %936 = vmatpush1.bf16.xpose.msra.mxu0 0
    %937 = vmatprep.subr.bf16.mxu0 0
    %938 = vmatpush1.bf16.xpose.msra.mxu0 0
    %939 = vmatprep.subr.bf16.mxu0 0
    %940 = vmatpush1.bf16.xpose.msra.mxu0 0
    %941 = vmatprep.subr.bf16.mxu0 0
    %942 = vmatpush1.bf16.xpose.msra.mxu0 0
    %943 = vmatprep.subr.bf16.mxu0 0
    %944 = vmatpush1.bf16.xpose.msra.mxu0 0
    %945 = vmatprep.subr.bf16.mxu0 0
    %946 = vmatpush1.bf16.xpose.msra.mxu0 0
    %947 = vmatprep.subr.bf16.mxu0 0
    %948 = vmatpush1.bf16.xpose.msra.mxu0 0
    %949 = vmatprep.subr.bf16.mxu0 0
    %950 = vmatpush1.bf16.xpose.msra.mxu0 0
    %951 = vmatprep.subr.bf16.mxu0 0
    %952 = vmatpush1.bf16.xpose.msra.mxu0 0
    %953 = vmatprep.subr.bf16.mxu0 0
    %954 = vmatpush1.bf16.xpose.msra.mxu0 0
    %955 = vmatprep.mubr.bf16.mxu0 0
    %956 = vmatmul.mubr.bf16.gmra.mrb[0].mxu0 %v918
    %v957 = vpop.f32.mrb[0].mxu0
    %v958 = vadd.f32 0.0, %v957
    %v959 = vpop.f32.mrb[0].mxu0
    %v960 = vpop.f32.mrb[0].mxu0
    %v961 = vpop.f32.mrb[0].mxu0
    %962 = vdwg.mxu0
    %v963 = vsel %vm115, %v958, -inf
    %964 = vmax.xlane.f32.xlu0 %v963
    %v965 = vpop.xlane.xlu0 %964
    %v966 = vsub.f32 %v958, %v965
    %v967 = vmul.f32 %v966, 1.442695
    %v968 = vpow.pop %v967
    %v969 = vsel %vm115, %v968, 0.0
    %970 = vadd.xlane.f32.xlu0 %v969
    %v971 = vpop.xlane.xlu0 %970
    %v972 = vpack.c.bf16 %v968, %v968
    %973 = vrot.lane.b32.xlu0 %v572, 40
    %v974 = vpop.permute.xlu0 %973
    %v976 = vsel %vm115, %v972, 0
    %v979 = vsel %vm177, %v974, 0
    %981 = vmatprep.subr.bf16.mxu0 0
    %982 = vmatpush1.bf16.msra.mxu0 %v979
    %983 = vmatprep.subr.bf16.mxu0 0
    %984 = vmatpush1.bf16.msra.mxu0 0
    %985 = vmatprep.subr.bf16.mxu0 0
    %986 = vmatpush1.bf16.msra.mxu0 0
    %987 = vmatprep.subr.bf16.mxu0 0
    %988 = vmatpush1.bf16.msra.mxu0 0
    %989 = vmatprep.subr.bf16.mxu0 0
    %990 = vmatpush1.bf16.msra.mxu0 0
    %991 = vmatprep.subr.bf16.mxu0 0
    %992 = vmatpush1.bf16.msra.mxu0 0
    %993 = vmatprep.subr.bf16.mxu0 0
    %994 = vmatpush1.bf16.msra.mxu0 0
    %995 = vmatprep.subr.bf16.mxu0 0
    %996 = vmatpush1.bf16.msra.mxu0 0
    %997 = vmatprep.subr.bf16.mxu0 0
    %998 = vmatpush1.bf16.msra.mxu0 0
    %999 = vmatprep.subr.bf16.mxu0 0
    %1000 = vmatpush1.bf16.msra.mxu0 0
    %1001 = vmatprep.subr.bf16.mxu0 0
    %1002 = vmatpush1.bf16.msra.mxu0 0
    %1003 = vmatprep.subr.bf16.mxu0 0
    %1004 = vmatpush1.bf16.msra.mxu0 0
    %1005 = vmatprep.subr.bf16.mxu0 0
    %1006 = vmatpush1.bf16.msra.mxu0 0
    %1007 = vmatprep.subr.bf16.mxu0 0
    %1008 = vmatpush1.bf16.msra.mxu0 0
    %1009 = vmatprep.subr.bf16.mxu0 0
    %1010 = vmatpush1.bf16.msra.mxu0 0
    %1011 = vmatprep.subr.bf16.mxu0 0
    %1012 = vmatpush1.bf16.msra.mxu0 0
    %1013 = vmatprep.mubr.bf16.mxu0 0
    %1014 = vmatmul.mubr.bf16.gmra.mrb[0].mxu0 %v976
    %v1015 = vpop.f32.mrb[0].mxu0
    %v1016 = vadd.f32 0.0, %v1015
    %v1017 = vpop.f32.mrb[0].mxu0
    %v1018 = vpop.f32.mrb[0].mxu0
    %v1019 = vpop.f32.mrb[0].mxu0
    %1020 = vdwg.mxu0
    %v1021 = vrcp.pop %v971
    %v1022 = vmul.f32 %v1016, %v1021
    %1024 = vrot.lane.b32.xlu0 %v1022, 24
    %v1025 = vpop.permute.xlu0 %1024
    %1027 = vst.msk [vmem:[#allocation2 + $0x8] sm:$0xff] %vm570, %v1025
    %v1028 = vld [vmem:[#allocation2] sm:$0xff]
    %v1029 = vld [vmem:[#allocation2 + $0x8] sm:$0xff]
    %v1030 = vadd.f32 %v1028, %v40
    %v1031 = vadd.f32 %v1029, %v41
    %v1032 = vld [vmem:[%s3] sm:$0x1]
    %v1033 = vld [vmem:[%s4] sm:$0x1]
    %v1034 = vsel %vm66, %v1030, 0.0
    %1035 = vadd.xlane.f32.xlu0 %v1034
    %v1036 = vpop.xlane.xlu0 %1035
    %v1037 = vsel %vm66, %v1031, 0.0
    %1038 = vadd.xlane.f32.xlu0 %v1037
    %v1039 = vpop.xlane.xlu0 %1038
    %v1040 = vrcp.pop 32.0
    %v1041 = vmul.f32 %v1036, %v1040
    %v1042 = vmul.f32 %v1039, %v1040
    %v1043 = vsub.f32 %v1030, %v1041
    %v1044 = vsub.f32 %v1031, %v1042
    %v1045 = vmul.f32 %v1043, %v1043
    %v1046 = vmul.f32 %v1044, %v1044
    %v1047 = vsel %vm66, %v1045, 0.0
    %1048 = vadd.xlane.f32.xlu0 %v1047
    %v1049 = vpop.xlane.xlu0 %1048
    %v1050 = vsel %vm66, %v1046, 0.0
    %1051 = vadd.xlane.f32.xlu0 %v1050
    %v1052 = vpop.xlane.xlu0 %1051
    %v1053 = vmul.f32 %v1049, %v1040
    %v1054 = vmul.f32 %v1052, %v1040
    %v1055 = vadd.f32 %v1053, 1e-05
    %v1056 = vadd.f32 %v1054, 1e-05
    %v1057 = vrsqrt.pop %v1055
    %v1058 = vrsqrt.pop %v1056
    %v1059 = vmul.f32 %v1043, %v1057
    %v1060 = vmul.f32 %v1044, %v1058
    %v1062 = vlaneseq
    %v1063 = vshrl.u32 %v1062, 7
    %v1064 = vsub.s32 0, %v1063
    %v1065 = vrot.slane %v1032, %v1064
    %v1067 = vmul.f32 %v1059, %v1065
    %v1068 = vmul.f32 %v1060, %v1065
    %v1070 = vlaneseq
    %v1071 = vshrl.u32 %v1070, 7
    %v1072 = vsub.s32 0, %v1071
    %v1073 = vrot.slane %v1033, %v1072
    %v1075 = vadd.f32 %v1067, %v1073
    %v1076 = vadd.f32 %v1068, %v1073
    %v1077 = vpack.c.bf16 %v1076, %v1075
    %v1078 = vld [vmem:[%s5] sm:$0xf]
    %v1079 = vld [vmem:[%s5 + $0x4] sm:$0xf]
    %v1080 = vld [vmem:[%s5 + $0x8] sm:$0xf]
    %v1081 = vld [vmem:[%s5 + $0xc] sm:$0xf]
    %v1082 = vld [vmem:[%s6] sm:$0x1]
    %v1084 = vlaneseq
    %v1085 = vshrl.u32 %v1084, 7
    %v1086 = vsub.s32 0, %v1085
    %v1087 = vrot.slane %v1082, %v1086
    %v1093 = vunpack.c.l.b16 %v1078
    %v1094 = vunpack.c.l.b16 %v1079
    %v1095 = vunpack.c.l.b16 %v1080
    %v1096 = vunpack.c.l.b16 %v1081
    %v1097 = vpack.c.b16 %v1094, %v1093
    %v1098 = vpack.c.b16 %v1096, %v1095
    %v1102 = vsel %vm66, %v1077, 0
    %1104 = vmatprep.subr.bf16.mxu0 0
    %1105 = vmatpush1.bf16.msra.mxu0 %v1097
    %1106 = vmatprep.subr.bf16.mxu0 0
    %1107 = vmatpush1.bf16.msra.mxu0 %v1098
    %1108 = vmatprep.subr.bf16.mxu0 0
    %1109 = vmatpush1.bf16.msra.mxu0 0
    %1110 = vmatprep.subr.bf16.mxu0 0
    %1111 = vmatpush1.bf16.msra.mxu0 0
    %1112 = vmatprep.subr.bf16.mxu0 0
    %1113 = vmatpush1.bf16.msra.mxu0 0
    %1114 = vmatprep.subr.bf16.mxu0 0
    %1115 = vmatpush1.bf16.msra.mxu0 0
    %1116 = vmatprep.subr.bf16.mxu0 0
    %1117 = vmatpush1.bf16.msra.mxu0 0
    %1118 = vmatprep.subr.bf16.mxu0 0
    %1119 = vmatpush1.bf16.msra.mxu0 0
    %1120 = vmatprep.subr.bf16.mxu0 0
    %1121 = vmatpush1.bf16.msra.mxu0 0
    %1122 = vmatprep.subr.bf16.mxu0 0
    %1123 = vmatpush1.bf16.msra.mxu0 0
    %1124 = vmatprep.subr.bf16.mxu0 0
    %1125 = vmatpush1.bf16.msra.mxu0 0
    %1126 = vmatprep.subr.bf16.mxu0 0
    %1127 = vmatpush1.bf16.msra.mxu0 0
    %1128 = vmatprep.subr.bf16.mxu0 0
    %1129 = vmatpush1.bf16.msra.mxu0 0
    %1130 = vmatprep.subr.bf16.mxu0 0
    %1131 = vmatpush1.bf16.msra.mxu0 0
    %1132 = vmatprep.subr.bf16.mxu0 0
    %1133 = vmatpush1.bf16.msra.mxu0 0
    %1134 = vmatprep.subr.bf16.mxu0 0
    %1135 = vmatpush1.bf16.msra.mxu0 0
    %1136 = vmatprep.mubr.bf16.mxu0 0
    %1137 = vmatmul.mubr.bf16.gmra.mrb[0].mxu0 %v1102
    %v1138 = vpop.f32.mrb[0].mxu0
    %v1139 = vadd.f32 %v1087, %v1138
    %v1140 = vpop.f32.mrb[0].mxu0
    %v1141 = vpop.f32.mrb[0].mxu0
    %v1142 = vadd.f32 %v1087, %v1141
    %v1143 = vpop.f32.mrb[0].mxu0
    %1144 = vdwg.mxu0
    %v1145 = vmax.f32 %v1139, 0.0
    %v1146 = vmax.f32 %v1142, 0.0
    %v1147 = vpack.c.bf16 %v1146, %v1145
    %v1148 = vld [vmem:[%s7] sm:$0xf]
    %v1149 = vld [vmem:[%s7 + $0x4] sm:$0xf]
    %v1150 = vld [vmem:[%s7 + $0x8] sm:$0xf]
    %v1151 = vld [vmem:[%s7 + $0xc] sm:$0xf]
    %v1152 = vld [vmem:[%s7 + $0x10] sm:$0xf]
    %v1153 = vld [vmem:[%s7 + $0x14] sm:$0xf]
    %v1154 = vld [vmem:[%s7 + $0x18] sm:$0xf]
    %v1155 = vld [vmem:[%s7 + $0x1c] sm:$0xf]
    %v1156 = vld [vmem:[%s7 + $0x20] sm:$0xf]
    %v1157 = vld [vmem:[%s7 + $0x24] sm:$0xf]
    %v1158 = vld [vmem:[%s7 + $0x28] sm:$0xf]
    %v1159 = vld [vmem:[%s7 + $0x2c] sm:$0xf]
    %v1160 = vld [vmem:[%s7 + $0x30] sm:$0xf]
    %v1161 = vld [vmem:[%s7 + $0x34] sm:$0xf]
    %v1162 = vld [vmem:[%s7 + $0x38] sm:$0xf]
    %v1163 = vld [vmem:[%s7 + $0x3c] sm:$0xf]
    %v1164 = vld [vmem:[%s8] sm:$0x1]
    %v1166 = vlaneseq
    %v1167 = vshrl.u32 %v1166, 7
    %v1168 = vsub.s32 0, %v1167
    %v1169 = vrot.slane %v1164, %v1168
    %v1187 = vunpack.c.l.b16 %v1148
    %v1188 = vunpack.c.l.b16 %v1149
    %v1189 = vunpack.c.l.b16 %v1150
    %v1190 = vunpack.c.l.b16 %v1151
    %v1191 = vunpack.c.l.b16 %v1152
    %v1192 = vunpack.c.l.b16 %v1153
    %v1193 = vunpack.c.l.b16 %v1154
    %v1194 = vunpack.c.l.b16 %v1155
    %v1195 = vunpack.c.l.b16 %v1156
    %v1196 = vunpack.c.l.b16 %v1157
    %v1197 = vunpack.c.l.b16 %v1158
    %v1198 = vunpack.c.l.b16 %v1159
    %v1199 = vunpack.c.l.b16 %v1160
    %v1200 = vunpack.c.l.b16 %v1161
    %v1201 = vunpack.c.l.b16 %v1162
    %v1202 = vunpack.c.l.b16 %v1163
    %v1203 = vpack.c.b16 %v1188, %v1187
    %v1204 = vpack.c.b16 %v1190, %v1189
    %v1205 = vpack.c.b16 %v1192, %v1191
    %v1206 = vpack.c.b16 %v1194, %v1193
    %v1207 = vpack.c.b16 %v1196, %v1195
    %v1208 = vpack.c.b16 %v1198, %v1197
    %v1209 = vpack.c.b16 %v1200, %v1199
    %v1210 = vpack.c.b16 %v1202, %v1201
    %1219 = vmatprep.subr.bf16.mxu0 0
    %1220 = vmatpush1.bf16.msra.mxu0 %v1203
    %1221 = vmatprep.subr.bf16.mxu0 0
    %1222 = vmatpush1.bf16.msra.mxu0 %v1204
    %1223 = vmatprep.subr.bf16.mxu0 0
    %1224 = vmatpush1.bf16.msra.mxu0 %v1205
    %1225 = vmatprep.subr.bf16.mxu0 0
    %1226 = vmatpush1.bf16.msra.mxu0 %v1206
    %1227 = vmatprep.subr.bf16.mxu0 0
    %1228 = vmatpush1.bf16.msra.mxu0 %v1207
    %1229 = vmatprep.subr.bf16.mxu0 0
    %1230 = vmatpush1.bf16.msra.mxu0 %v1208
    %1231 = vmatprep.subr.bf16.mxu0 0
    %1232 = vmatpush1.bf16.msra.mxu0 %v1209
    %1233 = vmatprep.subr.bf16.mxu0 0
    %1234 = vmatpush1.bf16.msra.mxu0 %v1210
    %1235 = vmatprep.subr.bf16.mxu0 0
    %1236 = vmatpush1.bf16.msra.mxu0 0
    %1237 = vmatprep.subr.bf16.mxu0 0
    %1238 = vmatpush1.bf16.msra.mxu0 0
    %1239 = vmatprep.subr.bf16.mxu0 0
    %1240 = vmatpush1.bf16.msra.mxu0 0
    %1241 = vmatprep.subr.bf16.mxu0 0
    %1242 = vmatpush1.bf16.msra.mxu0 0
    %1243 = vmatprep.subr.bf16.mxu0 0
    %1244 = vmatpush1.bf16.msra.mxu0 0
    %1245 = vmatprep.subr.bf16.mxu0 0
    %1246 = vmatpush1.bf16.msra.mxu0 0
    %1247 = vmatprep.subr.bf16.mxu0 0
    %1248 = vmatpush1.bf16.msra.mxu0 0
    %1249 = vmatprep.subr.bf16.mxu0 0
    %1250 = vmatpush1.bf16.msra.mxu0 0
    %1251 = vmatprep.mubr.bf16.mxu0 0
    %1252 = vmatmul.mubr.bf16.gmra.mrb[0].mxu0 %v1147
    %v1253 = vpop.f32.mrb[0].mxu0
    %v1254 = vadd.f32 %v1169, %v1253
    %v1255 = vpop.f32.mrb[0].mxu0
    %v1256 = vpop.f32.mrb[0].mxu0
    %v1257 = vadd.f32 %v1169, %v1256
    %v1258 = vpop.f32.mrb[0].mxu0
    %1259 = vdwg.mxu0
    %v1260 = vadd.f32 %v1254, %v1075
    %v1261 = vadd.f32 %v1257, %v1076
    %v1262 = vld [vmem:[%s9] sm:$0x1]
    %v1263 = vld [vmem:[%s10] sm:$0x1]
    %v1264 = vsel %vm66, %v1260, 0.0
    %1265 = vadd.xlane.f32.xlu0 %v1264
    %v1266 = vpop.xlane.xlu0 %1265
    %v1267 = vsel %vm66, %v1261, 0.0
    %1268 = vadd.xlane.f32.xlu0 %v1267
    %v1269 = vpop.xlane.xlu0 %1268
    %v1270 = vmul.f32 %v1266, %v1040
    %v1271 = vmul.f32 %v1269, %v1040
    %v1272 = vsub.f32 %v1260, %v1270
    %v1273 = vsub.f32 %v1261, %v1271
    %v1274 = vmul.f32 %v1272, %v1272
    %v1275 = vmul.f32 %v1273, %v1273
    %v1276 = vsel %vm66, %v1274, 0.0
    %1277 = vadd.xlane.f32.xlu0 %v1276
    %v1278 = vpop.xlane.xlu0 %1277
    %v1279 = vsel %vm66, %v1275, 0.0
    %1280 = vadd.xlane.f32.xlu0 %v1279
    %v1281 = vpop.xlane.xlu0 %1280
    %v1282 = vmul.f32 %v1278, %v1040
    %v1283 = vmul.f32 %v1281, %v1040
    %v1284 = vadd.f32 %v1282, 1e-05
    %v1285 = vadd.f32 %v1283, 1e-05
    %v1286 = vrsqrt.pop %v1284
    %v1287 = vrsqrt.pop %v1285
    %v1288 = vmul.f32 %v1272, %v1286
    %v1289 = vmul.f32 %v1273, %v1287
    %v1291 = vlaneseq
    %v1292 = vshrl.u32 %v1291, 7
    %v1293 = vsub.s32 0, %v1292
    %v1294 = vrot.slane %v1262, %v1293
    %v1296 = vmul.f32 %v1288, %v1294
    %v1297 = vmul.f32 %v1289, %v1294
    %v1299 = vlaneseq
    %v1300 = vshrl.u32 %v1299, 7
    %v1301 = vsub.s32 0, %v1300
    %v1302 = vrot.slane %v1263, %v1301
    %v1304 = vadd.f32 %v1296, %v1302
    %v1305 = vadd.f32 %v1297, %v1302
    %1306 = vst.msk [vmem:[#allocation3] sm:$0xff] %vm66, %v1304
    %1307 = vst.msk [vmem:[#allocation3 + $0x8] sm:$0xff] %vm66, %v1305
    // Predicated region
    $region46: #{tpu_custom_call.1} parent=1 // pred_check
      _
    $region47: #{tpu_custom_call.1} parent=1 // pred_check_branch
      %1309 = sbr.rel (0) target = $region49
    $region48: #{tpu_custom_call.1} parent=1 // pred_region
      %s1311 = ssub.s32 256, 256
      %1312 = vsyncadd [#allocation4], %s1311
      %s1313 = sshll.u32 [#allocation3], 4
      %s1314 = int_to_ptr.vmem [resolvable:$true] %s1313
      %1319 = dma.vmem_to_hbm [thread:$0]  %s1314, 256, %s11, [#allocation4], 128, 128, 8
    $region49: #{tpu_custom_call.1} parent=1 // pred_fallthru
      _
    // Predicated region
    $region50: #{tpu_custom_call.1} parent=1 // pred_check
      _
    $region51: #{tpu_custom_call.1} parent=1 // pred_check_branch
      %1321 = sbr.rel (0) target = $region53
    $region52: #{tpu_custom_call.1} parent=1 // pred_region
      %1322 = dma.done [#allocation4], 256
    $region53: #{tpu_custom_call.1} parent=1 // pred_fallthru
      _
    %1323 = vsyncpa [#allocation4], 1

// kernel: tpu_custom_call.1
$region0: #{tpu_custom_call.1}
  #allocation0 [shape = 'u32[]', space=smem, size = 0x4, offset = 0x4, fixed_abs, tag = 'smem constant byte address 0x4 - core index']
  #allocation1 [shape = 'u32[144,128]{1,0:T(1,128)}', space=vmem, size = 0x12000, scoped, tag = 'internal scratch']
  #allocation2 [shape = 'f32[16,32]{1,0:T(8,128)}', space=vmem, size = 0x2000, scoped, tag = 'scratch operand']
  %s0 = inlined_call_operand.vmem [shape: f32[16,32], index: 0, kind: input, shape index: {}]
  %s1 = inlined_call_operand.vmem [shape: bf16[32,96], index: 1, kind: input, shape index: {}]
  %s2 = inlined_call_operand.vmem [shape: f32[1,96], index: 2, kind: input, shape index: {}]
  %s3 = inlined_call_operand.vmem [shape: f32[1,32], index: 3, kind: input, shape index: {}]
  %s4 = inlined_call_operand.vmem [shape: f32[1,32], index: 4, kind: input, shape index: {}]
  %s5 = inlined_call_operand.vmem [shape: bf16[32,128], index: 5, kind: input, shape index: {}]
  %s6 = inlined_call_operand.vmem [shape: f32[1,128], index: 6, kind: input, shape index: {}]
  %s7 = inlined_call_operand.vmem [shape: bf16[128,32], index: 7, kind: input, shape index: {}]
  %s8 = inlined_call_operand.vmem [shape: f32[1,32], index: 8, kind: input, shape index: {}]
  %s9 = inlined_call_operand.vmem [shape: f32[1,32], index: 9, kind: input, shape index: {}]
  %s10 = inlined_call_operand.vmem [shape: f32[1,32], index: 10, kind: input, shape index: {}]
  %s11 = inlined_call_operand.hbm [shape: f32[16,32], index: 11, kind: output, shape index: {}]
  %s12 = sld [smem:[#allocation0]]
  $region54: #{tpu_custom_call.1} parent=0
    _
  %s14 = ssub.s32 1, %s12
  %s15 = scalar_select 0, %s14, %s12
  $region1: #{tpu_custom_call.1} parent=0
    #allocation3 [shape = 'u8[8192]{0}', space=vmem, size = 0x2000, scoped, tag = 'output window, operand 0, single buffered']
    #allocation4 [shape = 's32[1]{0}', space=sflag, size = 0x4, scoped, tag = 'scoped memory for tpu_custom_call.1']
    %16 = vsyncpa [#allocation4], 0
    // Predicated region
    $region2: #{tpu_custom_call.1} parent=1 // pred_check
      _
    $region3: #{tpu_custom_call.1} parent=1 // pred_check_branch
      %18 = sbr.rel (0) target = $region5
    $region4: #{tpu_custom_call.1} parent=1 // pred_region
      _
    $region5: #{tpu_custom_call.1} parent=1 // pred_fallthru
      _
    // Predicated region
    $region6: #{tpu_custom_call.1} parent=1 // pred_check
      _
    $region7: #{tpu_custom_call.1} parent=1 // pred_check_branch
      %20 = sbr.rel (0) target = $region9
    $region8: #{tpu_custom_call.1} parent=1 // pred_region
      _
    $region9: #{tpu_custom_call.1} parent=1 // pred_fallthru
      _
    // Predicated region
    $region10: #{tpu_custom_call.1} parent=1 // pred_check
      _
    $region11: #{tpu_custom_call.1} parent=1 // pred_check_branch
      %22 = sbr.rel (0) target = $region13
    $region12: #{tpu_custom_call.1} parent=1 // pred_region
      _
    $region13: #{tpu_custom_call.1} parent=1 // pred_fallthru
      _
    // Predicated region
    $region14: #{tpu_custom_call.1} parent=1 // pred_check
      _
    $region15: #{tpu_custom_call.1} parent=1 // pred_check_branch
      %24 = sbr.rel (0) target = $region17
    $region16: #{tpu_custom_call.1} parent=1 // pred_region
      _
    $region17: #{tpu_custom_call.1} parent=1 // pred_fallthru
      _
    // Predicated region
    $region18: #{tpu_custom_call.1} parent=1 // pred_check
      _
    $region19: #{tpu_custom_call.1} parent=1 // pred_check_branch
      %26 = sbr.rel (0) target = $region21
    $region20: #{tpu_custom_call.1} parent=1 // pred_region
      _
    $region21: #{tpu_custom_call.1} parent=1 // pred_fallthru
      _
    // Predicated region
    $region22: #{tpu_custom_call.1} parent=1 // pred_check
      _
    $region23: #{tpu_custom_call.1} parent=1 // pred_check_branch
      %28 = sbr.rel (0) target = $region25
    $region24: #{tpu_custom_call.1} parent=1 // pred_region
      _
    $region25: #{tpu_custom_call.1} parent=1 // pred_fallthru
      _
    // Predicated region
    $region26: #{tpu_custom_call.1} parent=1 // pred_check
      _
    $region27: #{tpu_custom_call.1} parent=1 // pred_check_branch
      %30 = sbr.rel (0) target = $region29
    $region28: #{tpu_custom_call.1} parent=1 // pred_region
      _
    $region29: #{tpu_custom_call.1} parent=1 // pred_fallthru
      _
    // Predicated region
    $region30: #{tpu_custom_call.1} parent=1 // pred_check
      _
    $region31: #{tpu_custom_call.1} parent=1 // pred_check_branch
      %32 = sbr.rel (0) target = $region33
    $region32: #{tpu_custom_call.1} parent=1 // pred_region
      _
    $region33: #{tpu_custom_call.1} parent=1 // pred_fallthru
      _
    // Predicated region
    $region34: #{tpu_custom_call.1} parent=1 // pred_check
      _
    $region35: #{tpu_custom_call.1} parent=1 // pred_check_branch
      %34 = sbr.rel (0) target = $region37
    $region36: #{tpu_custom_call.1} parent=1 // pred_region
      _
    $region37: #{tpu_custom_call.1} parent=1 // pred_fallthru
      _
    // Predicated region
    $region38: #{tpu_custom_call.1} parent=1 // pred_check
      _
    $region39: #{tpu_custom_call.1} parent=1 // pred_check_branch
      %36 = sbr.rel (0) target = $region41
    $region40: #{tpu_custom_call.1} parent=1 // pred_region
      _
    $region41: #{tpu_custom_call.1} parent=1 // pred_fallthru
      _
    // Predicated region
    $region42: #{tpu_custom_call.1} parent=1 // pred_check
      _
    $region43: #{tpu_custom_call.1} parent=1 // pred_check_branch
      %38 = sbr.rel (0) target = $region45
    $region44: #{tpu_custom_call.1} parent=1 // pred_region
      _
    $region45: #{tpu_custom_call.1} parent=1 // pred_fallthru
      _
    %v40 = vld [vmem:[%s0] sm:$0xff]
    %v41 = vld [vmem:[%s0 + $0x8] sm:$0xff]
    %v42 = vpack.c.bf16 %v41, %v40
    %v43 = vld [vmem:[%s1] sm:$0xf]
    %v44 = vld [vmem:[%s1 + $0x4] sm:$0xf]
    %v45 = vld [vmem:[%s1 + $0x8] sm:$0xf]
    %v46 = vld [vmem:[%s1 + $0xc] sm:$0xf]
    %v47 = vld [vmem:[%s2] sm:$0x1]
    %v49 = vlaneseq
    %v50 = vshrl.u32 %v49, 7
    %v51 = vsub.s32 0, %v50
    %v52 = vrot.slane %v47, %v51
    %v58 = vunpack.c.l.b16 %v43
    %v59 = vunpack.c.l.b16 %v44
    %v60 = vunpack.c.l.b16 %v45
    %v61 = vunpack.c.l.b16 %v46
    %v62 = vpack.c.b16 %v59, %v58
    %v63 = vpack.c.b16 %v61, %v60
    %vm66 = vcmask 261120
    %v68 = vsel %vm66, %v42, 0
    %70 = vmatprep.subr.bf16.mxu0 0
    %71 = vmatpush1.bf16.msra.mxu0 %v62
    %72 = vmatprep.subr.bf16.mxu0 0
    %73 = vmatpush1.bf16.msra.mxu0 %v63
    %74 = vmatprep.subr.bf16.mxu0 0
    %75 = vmatpush1.bf16.msra.mxu0 0
    %76 = vmatprep.subr.bf16.mxu0 0
    %77 = vmatpush1.bf16.msra.mxu0 0
    %78 = vmatprep.subr.bf16.mxu0 0
    %79 = vmatpush1.bf16.msra.mxu0 0
    %80 = vmatprep.subr.bf16.mxu0 0
    %81 = vmatpush1.bf16.msra.mxu0 0
    %82 = vmatprep.subr.bf16.mxu0 0
    %83 = vmatpush1.bf16.msra.mxu0 0
    %84 = vmatprep.subr.bf16.mxu0 0
    %85 = vmatpush1.bf16.msra.mxu0 0
    %86 = vmatprep.subr.bf16.mxu0 0
    %87 = vmatpush1.bf16.msra.mxu0 0
    %88 = vmatprep.subr.bf16.mxu0 0
    %89 = vmatpush1.bf16.msra.mxu0 0
    %90 = vmatprep.subr.bf16.mxu0 0
    %91 = vmatpush1.bf16.msra.mxu0 0
    %92 = vmatprep.subr.bf16.mxu0 0
    %93 = vmatpush1.bf16.msra.mxu0 0
    %94 = vmatprep.subr.bf16.mxu0 0
    %95 = vmatpush1.bf16.msra.mxu0 0
    %96 = vmatprep.subr.bf16.mxu0 0
    %97 = vmatpush1.bf16.msra.mxu0 0
    %98 = vmatprep.subr.bf16.mxu0 0
    %99 = vmatpush1.bf16.msra.mxu0 0
    %100 = vmatprep.subr.bf16.mxu0 0
    %101 = vmatpush1.bf16.msra.mxu0 0
    %102 = vmatprep.mubr.bf16.mxu0 0
    %103 = vmatmul.mubr.bf16.gmra.mrb[0].mxu0 %v68
    %v104 = vpop.f32.mrb[0].mxu0
    %v105 = vadd.f32 %v52, %v104
    %v106 = vpop.f32.mrb[0].mxu0
    %v107 = vpop.f32.mrb[0].mxu0
    %v108 = vadd.f32 %v52, %v107
    %v109 = vpop.f32.mrb[0].mxu0
    %110 = vdwg.mxu0
    %v111 = vpack.c.bf16 %v105, %v105
    %113 = vrot.lane.b32.xlu0 %v111, 96
    %v114 = vpop.permute.xlu0 %113
    %vm115 = vcmask 64512
    %v117 = vsel %vm115, %v111, 0
    %v120 = vsel %vm115, %v114, 0
    %122 = vmatprep.subr.bf16.mxu0 0
    %123 = vmatpush1.bf16.xpose.msra.mxu0 %v120
    %124 = vmatprep.subr.bf16.mxu0 0
    %125 = vmatpush1.bf16.xpose.msra.mxu0 0
    %126 = vmatprep.subr.bf16.mxu0 0
    %127 = vmatpush1.bf16.xpose.msra.mxu0 0
    %128 = vmatprep.subr.bf16.mxu0 0
    %129 = vmatpush1.bf16.xpose.msra.mxu0 0
    %130 = vmatprep.subr.bf16.mxu0 0
    %131 = vmatpush1.bf16.xpose.msra.mxu0 0
    %132 = vmatprep.subr.bf16.mxu0 0
    %133 = vmatpush1.bf16.xpose.msra.mxu0 0
    %134 = vmatprep.subr.bf16.mxu0 0
    %135 = vmatpush1.bf16.xpose.msra.mxu0 0
    %136 = vmatprep.subr.bf16.mxu0 0
    %137 = vmatpush1.bf16.xpose.msra.mxu0 0
    %138 = vmatprep.subr.bf16.mxu0 0
    %139 = vmatpush1.bf16.xpose.msra.mxu0 0
    %140 = vmatprep.subr.bf16.mxu0 0
    %141 = vmatpush1.bf16.xpose.msra.mxu0 0
    %142 = vmatprep.subr.bf16.mxu0 0
    %143 = vmatpush1.bf16.xpose.msra.mxu0 0
    %144 = vmatprep.subr.bf16.mxu0 0
    %145 = vmatpush1.bf16.xpose.msra.mxu0 0
    %146 = vmatprep.subr.bf16.mxu0 0
    %147 = vmatpush1.bf16.xpose.msra.mxu0 0
    %148 = vmatprep.subr.bf16.mxu0 0
    %149 = vmatpush1.bf16.xpose.msra.mxu0 0
    %150 = vmatprep.subr.bf16.mxu0 0
    %151 = vmatpush1.bf16.xpose.msra.mxu0 0
    %152 = vmatprep.subr.bf16.mxu0 0
    %153 = vmatpush1.bf16.xpose.msra.mxu0 0
    %154 = vmatprep.mubr.bf16.mxu0 0
    %155 = vmatmul.mubr.bf16.gmra.mrb[0].mxu0 %v117
    %v156 = vpop.f32.mrb[0].mxu0
    %v157 = vadd.f32 0.0, %v156
    %v158 = vpop.f32.mrb[0].mxu0
    %v159 = vpop.f32.mrb[0].mxu0
    %v160 = vpop.f32.mrb[0].mxu0
    %161 = vdwg.mxu0
    %v162 = vsel %vm115, %v157, -inf
    %163 = vmax.xlane.f32.xlu0 %v162
    %v164 = vpop.xlane.xlu0 %163
    %v165 = vsub.f32 %v157, %v164
    %v166 = vmul.f32 %v165, 1.442695
    %v167 = vpow.pop %v166
    %v168 = vsel %vm115, %v167, 0.0
    %169 = vadd.xlane.f32.xlu0 %v168
    %v170 = vpop.xlane.xlu0 %169
    %v171 = vpack.c.bf16 %v167, %v167
    %172 = vrot.lane.b32.xlu0 %v111, 64
    %v173 = vpop.permute.xlu0 %172
    %v175 = vsel %vm115, %v171, 0
    %vm177 = vcmask 1043456
    %v179 = vsel %vm177, %v173, 0
    %181 = vmatprep.subr.bf16.mxu0 0
    %182 = vmatpush1.bf16.msra.mxu0 %v179
    %183 = vmatprep.subr.bf16.mxu0 0
    %184 = vmatpush1.bf16.msra.mxu0 0
    %185 = vmatprep.subr.bf16.mxu0 0
    %186 = vmatpush1.bf16.msra.mxu0 0
    %187 = vmatprep.subr.bf16.mxu0 0
    %188 = vmatpush1.bf16.msra.mxu0 0
    %189 = vmatprep.subr.bf16.mxu0 0
    %190 = vmatpush1.bf16.msra.mxu0 0
    %191 = vmatprep.subr.bf16.mxu0 0
    %192 = vmatpush1.bf16.msra.mxu0 0
    %193 = vmatprep.subr.bf16.mxu0 0
    %194 = vmatpush1.bf16.msra.mxu0 0
    %195 = vmatprep.subr.bf16.mxu0 0
    %196 = vmatpush1.bf16.msra.mxu0 0
    %197 = vmatprep.subr.bf16.mxu0 0
    %198 = vmatpush1.bf16.msra.mxu0 0
    %199 = vmatprep.subr.bf16.mxu0 0
    %200 = vmatpush1.bf16.msra.mxu0 0
    %201 = vmatprep.subr.bf16.mxu0 0
    %202 = vmatpush1.bf16.msra.mxu0 0
    %203 = vmatprep.subr.bf16.mxu0 0
    %204 = vmatpush1.bf16.msra.mxu0 0
    %205 = vmatprep.subr.bf16.mxu0 0
    %206 = vmatpush1.bf16.msra.mxu0 0
    %207 = vmatprep.subr.bf16.mxu0 0
    %208 = vmatpush1.bf16.msra.mxu0 0
    %209 = vmatprep.subr.bf16.mxu0 0
    %210 = vmatpush1.bf16.msra.mxu0 0
    %211 = vmatprep.subr.bf16.mxu0 0
    %212 = vmatpush1.bf16.msra.mxu0 0
    %213 = vmatprep.mubr.bf16.mxu0 0
    %214 = vmatmul.mubr.bf16.gmra.mrb[0].mxu0 %v175
    %v215 = vpop.f32.mrb[0].mxu0
    %v216 = vadd.f32 0.0, %v215
    %v217 = vpop.f32.mrb[0].mxu0
    %v218 = vpop.f32.mrb[0].mxu0
    %v219 = vpop.f32.mrb[0].mxu0
    %220 = vdwg.mxu0
    %v221 = vrcp.pop %v170
    %v222 = vmul.f32 %v216, %v221
    %223 = vst.msk [vmem:[#allocation2] sm:$0xff] %vm115, %v222
    %224 = vrot.lane.b32.xlu0 %v111, 120
    %v225 = vpop.permute.xlu0 %224
    %226 = vrot.lane.b32.xlu0 %v111, 88
    %v227 = vpop.permute.xlu0 %226
    %v229 = vsel %vm115, %v225, 0
    %v232 = vsel %vm115, %v227, 0
    %234 = vmatprep.subr.bf16.mxu0 0
    %235 = vmatpush1.bf16.xpose.msra.mxu0 %v232
    %236 = vmatprep.subr.bf16.mxu0 0
    %237 = vmatpush1.bf16.xpose.msra.mxu0 0
    %238 = vmatprep.subr.bf16.mxu0 0
    %239 = vmatpush1.bf16.xpose.msra.mxu0 0
    %240 = vmatprep.subr.bf16.mxu0 0
    %241 = vmatpush1.bf16.xpose.msra.mxu0 0
    %242 = vmatprep.subr.bf16.mxu0 0
    %243 = vmatpush1.bf16.xpose.msra.mxu0 0
    %244 = vmatprep.subr.bf16.mxu0 0
    %245 = vmatpush1.bf16.xpose.msra.mxu0 0
    %246 = vmatprep.subr.bf16.mxu0 0
    %247 = vmatpush1.bf16.xpose.msra.mxu0 0
    %248 = vmatprep.subr.bf16.mxu0 0
    %249 = vmatpush1.bf16.xpose.msra.mxu0 0
    %250 = vmatprep.subr.bf16.mxu0 0
    %251 = vmatpush1.bf16.xpose.msra.mxu0 0
    %252 = vmatprep.subr.bf16.mxu0 0
    %253 = vmatpush1.bf16.xpose.msra.mxu0 0
    %254 = vmatprep.subr.bf16.mxu0 0
    %255 = vmatpush1.bf16.xpose.msra.mxu0 0
    %256 = vmatprep.subr.bf16.mxu0 0
    %257 = vmatpush1.bf16.xpose.msra.mxu0 0
    %258 = vmatprep.subr.bf16.mxu0 0
    %259 = vmatpush1.bf16.xpose.msra.mxu0 0
    %260 = vmatprep.subr.bf16.mxu0 0
    %261 = vmatpush1.bf16.xpose.msra.mxu0 0
    %262 = vmatprep.subr.bf16.mxu0 0
    %263 = vmatpush1.bf16.xpose.msra.mxu0 0
    %264 = vmatprep.subr.bf16.mxu0 0
    %265 = vmatpush1.bf16.xpose.msra.mxu0 0
    %266 = vmatprep.mubr.bf16.mxu0 0
    %267 = vmatmul.mubr.bf16.gmra.mrb[0].mxu0 %v229
    %v268 = vpop.f32.mrb[0].mxu0
    %v269 = vadd.f32 0.0, %v268
    %v270 = vpop.f32.mrb[0].mxu0
    %v271 = vpop.f32.mrb[0].mxu0
    %v272 = vpop.f32.mrb[0].mxu0
    %273 = vdwg.mxu0
    %v274 = vsel %vm115, %v269, -inf
    %275 = vmax.xlane.f32.xlu0 %v274
    %v276 = vpop.xlane.xlu0 %275
    %v277 = vsub.f32 %v269, %v276
    %v278 = vmul.f32 %v277, 1.442695
    %v279 = vpow.pop %v278
    %v280 = vsel %vm115, %v279, 0.0
    %281 = vadd.xlane.f32.xlu0 %v280
    %v282 = vpop.xlane.xlu0 %281
    %v283 = vpack.c.bf16 %v279, %v279
    %284 = vrot.lane.b32.xlu0 %v111, 56
    %v285 = vpop.permute.xlu0 %284
    %v287 = vsel %vm115, %v283, 0
    %v290 = vsel %vm177, %v285, 0
    %292 = vmatprep.subr.bf16.mxu0 0
    %293 = vmatpush1.bf16.msra.mxu0 %v290
    %294 = vmatprep.subr.bf16.mxu0 0
    %295 = vmatpush1.bf16.msra.mxu0 0
    %296 = vmatprep.subr.bf16.mxu0 0
    %297 = vmatpush1.bf16.msra.mxu0 0
    %298 = vmatprep.subr.bf16.mxu0 0
    %299 = vmatpush1.bf16.msra.mxu0 0
    %300 = vmatprep.subr.bf16.mxu0 0
    %301 = vmatpush1.bf16.msra.mxu0 0
    %302 = vmatprep.subr.bf16.mxu0 0
    %303 = vmatpush1.bf16.msra.mxu0 0
    %304 = vmatprep.subr.bf16.mxu0 0
    %305 = vmatpush1.bf16.msra.mxu0 0
    %306 = vmatprep.subr.bf16.mxu0 0
    %307 = vmatpush1.bf16.msra.mxu0 0
    %308 = vmatprep.subr.bf16.mxu0 0
    %309 = vmatpush1.bf16.msra.mxu0 0
    %310 = vmatprep.subr.bf16.mxu0 0
    %311 = vmatpush1.bf16.msra.mxu0 0
    %312 = vmatprep.subr.bf16.mxu0 0
    %313 = vmatpush1.bf16.msra.mxu0 0
    %314 = vmatprep.subr.bf16.mxu0 0
    %315 = vmatpush1.bf16.msra.mxu0 0
    %316 = vmatprep.subr.bf16.mxu0 0
    %317 = vmatpush1.bf16.msra.mxu0 0
    %318 = vmatprep.subr.bf16.mxu0 0
    %319 = vmatpush1.bf16.msra.mxu0 0
    %320 = vmatprep.subr.bf16.mxu0 0
    %321 = vmatpush1.bf16.msra.mxu0 0
    %322 = vmatprep.subr.bf16.mxu0 0
    %323 = vmatpush1.bf16.msra.mxu0 0
    %324 = vmatprep.mubr.bf16.mxu0 0
    %325 = vmatmul.mubr.bf16.gmra.mrb[0].mxu0 %v287
    %v326 = vpop.f32.mrb[0].mxu0
    %v327 = vadd.f32 0.0, %v326
    %v328 = vpop.f32.mrb[0].mxu0
    %v329 = vpop.f32.mrb[0].mxu0
    %v330 = vpop.f32.mrb[0].mxu0
    %331 = vdwg.mxu0
    %v332 = vrcp.pop %v282
    %v333 = vmul.f32 %v327, %v332
    %335 = vrot.lane.b32.xlu0 %v333, 8
    %v336 = vpop.permute.xlu0 %335
    %vm338 = vcmask 130112
    %339 = vst.msk [vmem:[#allocation2] sm:$0xff] %vm338, %v336
    %340 = vrot.lane.b32.xlu0 %v111, 112
    %v341 = vpop.permute.xlu0 %340
    %342 = vrot.lane.b32.xlu0 %v111, 80
    %v343 = vpop.permute.xlu0 %342
    %v345 = vsel %vm115, %v341, 0
    %v348 = vsel %vm115, %v343, 0
    %350 = vmatprep.subr.bf16.mxu0 0
    %351 = vmatpush1.bf16.xpose.msra.mxu0 %v348
    %352 = vmatprep.subr.bf16.mxu0 0
    %353 = vmatpush1.bf16.xpose.msra.mxu0 0
    %354 = vmatprep.subr.bf16.mxu0 0
    %355 = vmatpush1.bf16.xpose.msra.mxu0 0
    %356 = vmatprep.subr.bf16.mxu0 0
    %357 = vmatpush1.bf16.xpose.msra.mxu0 0
    %358 = vmatprep.subr.bf16.mxu0 0
    %359 = vmatpush1.bf16.xpose.msra.mxu0 0
    %360 = vmatprep.subr.bf16.mxu0 0
    %361 = vmatpush1.bf16.xpose.msra.mxu0 0
    %362 = vmatprep.subr.bf16.mxu0 0
    %363 = vmatpush1.bf16.xpose.msra.mxu0 0
    %364 = vmatprep.subr.bf16.mxu0 0
    %365 = vmatpush1.bf16.xpose.msra.mxu0 0
    %366 = vmatprep.subr.bf16.mxu0 0
    %367 = vmatpush1.bf16.xpose.msra.mxu0 0
    %368 = vmatprep.subr.bf16.mxu0 0
    %369 = vmatpush1.bf16.xpose.msra.mxu0 0
    %370 = vmatprep.subr.bf16.mxu0 0
    %371 = vmatpush1.bf16.xpose.msra.mxu0 0
    %372 = vmatprep.subr.bf16.mxu0 0
    %373 = vmatpush1.bf16.xpose.msra.mxu0 0
    %374 = vmatprep.subr.bf16.mxu0 0
    %375 = vmatpush1.bf16.xpose.msra.mxu0 0
    %376 = vmatprep.subr.bf16.mxu0 0
    %377 = vmatpush1.bf16.xpose.msra.mxu0 0
    %378 = vmatprep.subr.bf16.mxu0 0
    %379 = vmatpush1.bf16.xpose.msra.mxu0 0
    %380 = vmatprep.subr.bf16.mxu0 0
    %381 = vmatpush1.bf16.xpose.msra.mxu0 0
    %382 = vmatprep.mubr.bf16.mxu0 0
    %383 = vmatmul.mubr.bf16.gmra.mrb[0].mxu0 %v345
    %v384 = vpop.f32.mrb[0].mxu0
    %v385 = vadd.f32 0.0, %v384
    %v386 = vpop.f32.mrb[0].mxu0
    %v387 = vpop.f32.mrb[0].mxu0
    %v388 = vpop.f32.mrb[0].mxu0
    %389 = vdwg.mxu0
    %v390 = vsel %vm115, %v385, -inf
    %391 = vmax.xlane.f32.xlu0 %v390
    %v392 = vpop.xlane.xlu0 %391
    %v393 = vsub.f32 %v385, %v392
    %v394 = vmul.f32 %v393, 1.442695
    %v395 = vpow.pop %v394
    %v396 = vsel %vm115, %v395, 0.0
    %397 = vadd.xlane.f32.xlu0 %v396
    %v398 = vpop.xlane.xlu0 %397
    %v399 = vpack.c.bf16 %v395, %v395
    %400 = vrot.lane.b32.xlu0 %v111, 48
    %v401 = vpop.permute.xlu0 %400
    %v403 = vsel %vm115, %v399, 0
    %v406 = vsel %vm177, %v401, 0
    %408 = vmatprep.subr.bf16.mxu0 0
    %409 = vmatpush1.bf16.msra.mxu0 %v406
    %410 = vmatprep.subr.bf16.mxu0 0
    %411 = vmatpush1.bf16.msra.mxu0 0
    %412 = vmatprep.subr.bf16.mxu0 0
    %413 = vmatpush1.bf16.msra.mxu0 0
    %414 = vmatprep.subr.bf16.mxu0 0
    %415 = vmatpush1.bf16.msra.mxu0 0
    %416 = vmatprep.subr.bf16.mxu0 0
    %417 = vmatpush1.bf16.msra.mxu0 0
    %418 = vmatprep.subr.bf16.mxu0 0
    %419 = vmatpush1.bf16.msra.mxu0 0
    %420 = vmatprep.subr.bf16.mxu0 0
    %421 = vmatpush1.bf16.msra.mxu0 0
    %422 = vmatprep.subr.bf16.mxu0 0
    %423 = vmatpush1.bf16.msra.mxu0 0
    %424 = vmatprep.subr.bf16.mxu0 0
    %425 = vmatpush1.bf16.msra.mxu0 0
    %426 = vmatprep.subr.bf16.mxu0 0
    %427 = vmatpush1.bf16.msra.mxu0 0
    %428 = vmatprep.subr.bf16.mxu0 0
    %429 = vmatpush1.bf16.msra.mxu0 0
    %430 = vmatprep.subr.bf16.mxu0 0
    %431 = vmatpush1.bf16.msra.mxu0 0
    %432 = vmatprep.subr.bf16.mxu0 0
    %433 = vmatpush1.bf16.msra.mxu0 0
    %434 = vmatprep.subr.bf16.mxu0 0
    %435 = vmatpush1.bf16.msra.mxu0 0
    %436 = vmatprep.subr.bf16.mxu0 0
    %437 = vmatpush1.bf16.msra.mxu0 0
    %438 = vmatprep.subr.bf16.mxu0 0
    %439 = vmatpush1.bf16.msra.mxu0 0
    %440 = vmatprep.mubr.bf16.mxu0 0
    %441 = vmatmul.mubr.bf16.gmra.mrb[0].mxu0 %v403
    %v442 = vpop.f32.mrb[0].mxu0
    %v443 = vadd.f32 0.0, %v442
    %v444 = vpop.f32.mrb[0].mxu0
    %v445 = vpop.f32.mrb[0].mxu0
    %v446 = vpop.f32.mrb[0].mxu0
    %447 = vdwg.mxu0
    %v448 = vrcp.pop %v398
    %v449 = vmul.f32 %v443, %v448
    %451 = vrot.lane.b32.xlu0 %v449, 16
    %v452 = vpop.permute.xlu0 %451
    %vm454 = vcmask 195712
    %455 = vst.msk [vmem:[#allocation2] sm:$0xff] %vm454, %v452
    %456 = vrot.lane.b32.xlu0 %v111, 104
    %v457 = vpop.permute.xlu0 %456
    %458 = vrot.lane.b32.xlu0 %v111, 72
    %v459 = vpop.permute.xlu0 %458
    %v461 = vsel %vm115, %v457, 0
    %v464 = vsel %vm115, %v459, 0
    %466 = vmatprep.subr.bf16.mxu0 0
    %467 = vmatpush1.bf16.xpose.msra.mxu0 %v464
    %468 = vmatprep.subr.bf16.mxu0 0
    %469 = vmatpush1.bf16.xpose.msra.mxu0 0
    %470 = vmatprep.subr.bf16.mxu0 0
    %471 = vmatpush1.bf16.xpose.msra.mxu0 0
    %472 = vmatprep.subr.bf16.mxu0 0
    %473 = vmatpush1.bf16.xpose.msra.mxu0 0
    %474 = vmatprep.subr.bf16.mxu0 0
    %475 = vmatpush1.bf16.xpose.msra.mxu0 0
    %476 = vmatprep.subr.bf16.mxu0 0
    %477 = vmatpush1.bf16.xpose.msra.mxu0 0
    %478 = vmatprep.subr.bf16.mxu0 0
    %479 = vmatpush1.bf16.xpose.msra.mxu0 0
    %480 = vmatprep.subr.bf16.mxu0 0
    %481 = vmatpush1.bf16.xpose.msra.mxu0 0
    %482 = vmatprep.subr.bf16.mxu0 0
    %483 = vmatpush1.bf16.xpose.msra.mxu0 0
    %484 = vmatprep.subr.bf16.mxu0 0
    %485 = vmatpush1.bf16.xpose.msra.mxu0 0
    %486 = vmatprep.subr.bf16.mxu0 0
    %487 = vmatpush1.bf16.xpose.msra.mxu0 0
    %488 = vmatprep.subr.bf16.mxu0 0
    %489 = vmatpush1.bf16.xpose.msra.mxu0 0
    %490 = vmatprep.subr.bf16.mxu0 0
    %491 = vmatpush1.bf16.xpose.msra.mxu0 0
    %492 = vmatprep.subr.bf16.mxu0 0
    %493 = vmatpush1.bf16.xpose.msra.mxu0 0
    %494 = vmatprep.subr.bf16.mxu0 0
    %495 = vmatpush1.bf16.xpose.msra.mxu0 0
    %496 = vmatprep.subr.bf16.mxu0 0
    %497 = vmatpush1.bf16.xpose.msra.mxu0 0
    %498 = vmatprep.mubr.bf16.mxu0 0
    %499 = vmatmul.mubr.bf16.gmra.mrb[0].mxu0 %v461
    %v500 = vpop.f32.mrb[0].mxu0
    %v501 = vadd.f32 0.0, %v500
    %v502 = vpop.f32.mrb[0].mxu0
    %v503 = vpop.f32.mrb[0].mxu0
    %v504 = vpop.f32.mrb[0].mxu0
    %505 = vdwg.mxu0
    %v506 = vsel %vm115, %v501, -inf
    %507 = vmax.xlane.f32.xlu0 %v506
    %v508 = vpop.xlane.xlu0 %507
    %v509 = vsub.f32 %v501, %v508
    %v510 = vmul.f32 %v509, 1.442695
    %v511 = vpow.pop %v510
    %v512 = vsel %vm115, %v511, 0.0
    %513 = vadd.xlane.f32.xlu0 %v512
    %v514 = vpop.xlane.xlu0 %513
    %v515 = vpack.c.bf16 %v511, %v511
    %516 = vrot.lane.b32.xlu0 %v111, 40
    %v517 = vpop.permute.xlu0 %516
    %v519 = vsel %vm115, %v515, 0
    %v522 = vsel %vm177, %v517, 0
    %524 = vmatprep.subr.bf16.mxu0 0
    %525 = vmatpush1.bf16.msra.mxu0 %v522
    %526 = vmatprep.subr.bf16.mxu0 0
    %527 = vmatpush1.bf16.msra.mxu0 0
    %528 = vmatprep.subr.bf16.mxu0 0
    %529 = vmatpush1.bf16.msra.mxu0 0
    %530 = vmatprep.subr.bf16.mxu0 0
    %531 = vmatpush1.bf16.msra.mxu0 0
    %532 = vmatprep.subr.bf16.mxu0 0
    %533 = vmatpush1.bf16.msra.mxu0 0
    %534 = vmatprep.subr.bf16.mxu0 0
    %535 = vmatpush1.bf16.msra.mxu0 0
    %536 = vmatprep.subr.bf16.mxu0 0
    %537 = vmatpush1.bf16.msra.mxu0 0
    %538 = vmatprep.subr.bf16.mxu0 0
    %539 = vmatpush1.bf16.msra.mxu0 0
    %540 = vmatprep.subr.bf16.mxu0 0
    %541 = vmatpush1.bf16.msra.mxu0 0
    %542 = vmatprep.subr.bf16.mxu0 0
    %543 = vmatpush1.bf16.msra.mxu0 0
    %544 = vmatprep.subr.bf16.mxu0 0
    %545 = vmatpush1.bf16.msra.mxu0 0
    %546 = vmatprep.subr.bf16.mxu0 0
    %547 = vmatpush1.bf16.msra.mxu0 0
    %548 = vmatprep.subr.bf16.mxu0 0
    %549 = vmatpush1.bf16.msra.mxu0 0
    %550 = vmatprep.subr.bf16.mxu0 0
    %551 = vmatpush1.bf16.msra.mxu0 0
    %552 = vmatprep.subr.bf16.mxu0 0
    %553 = vmatpush1.bf16.msra.mxu0 0
    %554 = vmatprep.subr.bf16.mxu0 0
    %555 = vmatpush1.bf16.msra.mxu0 0
    %556 = vmatprep.mubr.bf16.mxu0 0
    %557 = vmatmul.mubr.bf16.gmra.mrb[0].mxu0 %v519
    %v558 = vpop.f32.mrb[0].mxu0
    %v559 = vadd.f32 0.0, %v558
    %v560 = vpop.f32.mrb[0].mxu0
    %v561 = vpop.f32.mrb[0].mxu0
    %v562 = vpop.f32.mrb[0].mxu0
    %563 = vdwg.mxu0
    %v564 = vrcp.pop %v514
    %v565 = vmul.f32 %v559, %v564
    %567 = vrot.lane.b32.xlu0 %v565, 24
    %v568 = vpop.permute.xlu0 %567
    %vm570 = vcmask 261312
    %571 = vst.msk [vmem:[#allocation2] sm:$0xff] %vm570, %v568
    %v572 = vpack.c.bf16 %v108, %v108
    %574 = vrot.lane.b32.xlu0 %v572, 96
    %v575 = vpop.permute.xlu0 %574
    %v577 = vsel %vm115, %v572, 0
    %v580 = vsel %vm115, %v575, 0
    %582 = vmatprep.subr.bf16.mxu0 0
    %583 = vmatpush1.bf16.xpose.msra.mxu0 %v580
    %584 = vmatprep.subr.bf16.mxu0 0
    %585 = vmatpush1.bf16.xpose.msra.mxu0 0
    %586 = vmatprep.subr.bf16.mxu0 0
    %587 = vmatpush1.bf16.xpose.msra.mxu0 0
    %588 = vmatprep.subr.bf16.mxu0 0
    %589 = vmatpush1.bf16.xpose.msra.mxu0 0
    %590 = vmatprep.subr.bf16.mxu0 0
    %591 = vmatpush1.bf16.xpose.msra.mxu0 0
    %592 = vmatprep.subr.bf16.mxu0 0
    %593 = vmatpush1.bf16.xpose.msra.mxu0 0
    %594 = vmatprep.subr.bf16.mxu0 0
    %595 = vmatpush1.bf16.xpose.msra.mxu0 0
    %596 = vmatprep.subr.bf16.mxu0 0
    %597 = vmatpush1.bf16.xpose.msra.mxu0 0
    %598 = vmatprep.subr.bf16.mxu0 0
    %599 = vmatpush1.bf16.xpose.msra.mxu0 0
    %600 = vmatprep.subr.bf16.mxu0 0
    %601 = vmatpush1.bf16.xpose.msra.mxu0 0
    %602 = vmatprep.subr.bf16.mxu0 0
    %603 = vmatpush1.bf16.xpose.msra.mxu0 0
    %604 = vmatprep.subr.bf16.mxu0 0
    %605 = vmatpush1.bf16.xpose.msra.mxu0 0
    %606 = vmatprep.subr.bf16.mxu0 0
    %607 = vmatpush1.bf16.xpose.msra.mxu0 0
    %608 = vmatprep.subr.bf16.mxu0 0
    %609 = vmatpush1.bf16.xpose.msra.mxu0 0
    %610 = vmatprep.subr.bf16.mxu0 0
    %611 = vmatpush1.bf16.xpose.msra.mxu0 0
    %612 = vmatprep.subr.bf16.mxu0 0
    %613 = vmatpush1.bf16.xpose.msra.mxu0 0
    %614 = vmatprep.mubr.bf16.mxu0 0
    %615 = vmatmul.mubr.bf16.gmra.mrb[0].mxu0 %v577
    %v616 = vpop.f32.mrb[0].mxu0
    %v617 = vadd.f32 0.0, %v616
    %v618 = vpop.f32.mrb[0].mxu0
    %v619 = vpop.f32.mrb[0].mxu0
    %v620 = vpop.f32.mrb[0].mxu0
    %621 = vdwg.mxu0
    %v622 = vsel %vm115, %v617, -inf
    %623 = vmax.xlane.f32.xlu0 %v622
    %v624 = vpop.xlane.xlu0 %623
    %v625 = vsub.f32 %v617, %v624
    %v626 = vmul.f32 %v625, 1.442695
    %v627 = vpow.pop %v626
    %v628 = vsel %vm115, %v627, 0.0
    %629 = vadd.xlane.f32.xlu0 %v628
    %v630 = vpop.xlane.xlu0 %629
    %v631 = vpack.c.bf16 %v627, %v627
    %632 = vrot.lane.b32.xlu0 %v572, 64
    %v633 = vpop.permute.xlu0 %632
    %v635 = vsel %vm115, %v631, 0
    %v638 = vsel %vm177, %v633, 0
    %640 = vmatprep.subr.bf16.mxu0 0
    %641 = vmatpush1.bf16.msra.mxu0 %v638
    %642 = vmatprep.subr.bf16.mxu0 0
    %643 = vmatpush1.bf16.msra.mxu0 0
    %644 = vmatprep.subr.bf16.mxu0 0
    %645 = vmatpush1.bf16.msra.mxu0 0
    %646 = vmatprep.subr.bf16.mxu0 0
    %647 = vmatpush1.bf16.msra.mxu0 0
    %648 = vmatprep.subr.bf16.mxu0 0
    %649 = vmatpush1.bf16.msra.mxu0 0
    %650 = vmatprep.subr.bf16.mxu0 0
    %651 = vmatpush1.bf16.msra.mxu0 0
    %652 = vmatprep.subr.bf16.mxu0 0
    %653 = vmatpush1.bf16.msra.mxu0 0
    %654 = vmatprep.subr.bf16.mxu0 0
    %655 = vmatpush1.bf16.msra.mxu0 0
    %656 = vmatprep.subr.bf16.mxu0 0
    %657 = vmatpush1.bf16.msra.mxu0 0
    %658 = vmatprep.subr.bf16.mxu0 0
    %659 = vmatpush1.bf16.msra.mxu0 0
    %660 = vmatprep.subr.bf16.mxu0 0
    %661 = vmatpush1.bf16.msra.mxu0 0
    %662 = vmatprep.subr.bf16.mxu0 0
    %663 = vmatpush1.bf16.msra.mxu0 0
    %664 = vmatprep.subr.bf16.mxu0 0
    %665 = vmatpush1.bf16.msra.mxu0 0
    %666 = vmatprep.subr.bf16.mxu0 0
    %667 = vmatpush1.bf16.msra.mxu0 0
    %668 = vmatprep.subr.bf16.mxu0 0
    %669 = vmatpush1.bf16.msra.mxu0 0
    %670 = vmatprep.subr.bf16.mxu0 0
    %671 = vmatpush1.bf16.msra.mxu0 0
    %672 = vmatprep.mubr.bf16.mxu0 0
    %673 = vmatmul.mubr.bf16.gmra.mrb[0].mxu0 %v635
    %v674 = vpop.f32.mrb[0].mxu0
    %v675 = vadd.f32 0.0, %v674
    %v676 = vpop.f32.mrb[0].mxu0
    %v677 = vpop.f32.mrb[0].mxu0
    %v678 = vpop.f32.mrb[0].mxu0
    %679 = vdwg.mxu0
    %v680 = vrcp.pop %v630
    %v681 = vmul.f32 %v675, %v680
    %682 = vst.msk [vmem:[#allocation2 + $0x8] sm:$0xff] %vm115, %v681
    %683 = vrot.lane.b32.xlu0 %v572, 120
    %v684 = vpop.permute.xlu0 %683
    %685 = vrot.lane.b32.xlu0 %v572, 88
    %v686 = vpop.permute.xlu0 %685
    %v688 = vsel %vm115, %v684, 0
    %v691 = vsel %vm115, %v686, 0
    %693 = vmatprep.subr.bf16.mxu0 0
    %694 = vmatpush1.bf16.xpose.msra.mxu0 %v691
    %695 = vmatprep.subr.bf16.mxu0 0
    %696 = vmatpush1.bf16.xpose.msra.mxu0 0
    %697 = vmatprep.subr.bf16.mxu0 0
    %698 = vmatpush1.bf16.xpose.msra.mxu0 0
    %699 = vmatprep.subr.bf16.mxu0 0
    %700 = vmatpush1.bf16.xpose.msra.mxu0 0
    %701 = vmatprep.subr.bf16.mxu0 0
    %702 = vmatpush1.bf16.xpose.msra.mxu0 0
    %703 = vmatprep.subr.bf16.mxu0 0
    %704 = vmatpush1.bf16.xpose.msra.mxu0 0
    %705 = vmatprep.subr.bf16.mxu0 0
    %706 = vmatpush1.bf16.xpose.msra.mxu0 0
    %707 = vmatprep.subr.bf16.mxu0 0
    %708 = vmatpush1.bf16.xpose.msra.mxu0 0
    %709 = vmatprep.subr.bf16.mxu0 0
    %710 = vmatpush1.bf16.xpose.msra.mxu0 0
    %711 = vmatprep.subr.bf16.mxu0 0
    %712 = vmatpush1.bf16.xpose.msra.mxu0 0
    %713 = vmatprep.subr.bf16.mxu0 0
    %714 = vmatpush1.bf16.xpose.msra.mxu0 0
    %715 = vmatprep.subr.bf16.mxu0 0
    %716 = vmatpush1.bf16.xpose.msra.mxu0 0
    %717 = vmatprep.subr.bf16.mxu0 0
    %718 = vmatpush1.bf16.xpose.msra.mxu0 0
    %719 = vmatprep.subr.bf16.mxu0 0
    %720 = vmatpush1.bf16.xpose.msra.mxu0 0
    %721 = vmatprep.subr.bf16.mxu0 0
    %722 = vmatpush1.bf16.xpose.msra.mxu0 0
    %723 = vmatprep.subr.bf16.mxu0 0
    %724 = vmatpush1.bf16.xpose.msra.mxu0 0
    %725 = vmatprep.mubr.bf16.mxu0 0
    %726 = vmatmul.mubr.bf16.gmra.mrb[0].mxu0 %v688
    %v727 = vpop.f32.mrb[0].mxu0
    %v728 = vadd.f32 0.0, %v727
    %v729 = vpop.f32.mrb[0].mxu0
    %v730 = vpop.f32.mrb[0].mxu0
    %v731 = vpop.f32.mrb[0].mxu0
    %732 = vdwg.mxu0
    %v733 = vsel %vm115, %v728, -inf
    %734 = vmax.xlane.f32.xlu0 %v733
    %v735 = vpop.xlane.xlu0 %734
    %v736 = vsub.f32 %v728, %v735
    %v737 = vmul.f32 %v736, 1.442695
    %v738 = vpow.pop %v737
    %v739 = vsel %vm115, %v738, 0.0
    %740 = vadd.xlane.f32.xlu0 %v739
    %v741 = vpop.xlane.xlu0 %740
    %v742 = vpack.c.bf16 %v738, %v738
    %743 = vrot.lane.b32.xlu0 %v572, 56
    %v744 = vpop.permute.xlu0 %743
    %v746 = vsel %vm115, %v742, 0
    %v749 = vsel %vm177, %v744, 0
    %751 = vmatprep.subr.bf16.mxu0 0
    %752 = vmatpush1.bf16.msra.mxu0 %v749
    %753 = vmatprep.subr.bf16.mxu0 0
    %754 = vmatpush1.bf16.msra.mxu0 0
    %755 = vmatprep.subr.bf16.mxu0 0
    %756 = vmatpush1.bf16.msra.mxu0 0
    %757 = vmatprep.subr.bf16.mxu0 0
    %758 = vmatpush1.bf16.msra.mxu0 0
    %759 = vmatprep.subr.bf16.mxu0 0
    %760 = vmatpush1.bf16.msra.mxu0 0
    %761 = vmatprep.subr.bf16.mxu0 0
    %762 = vmatpush1.bf16.msra.mxu0 0
    %763 = vmatprep.subr.bf16.mxu0 0
    %764 = vmatpush1.bf16.msra.mxu0 0
    %765 = vmatprep.subr.bf16.mxu0 0
    %766 = vmatpush1.bf16.msra.mxu0 0
    %767 = vmatprep.subr.bf16.mxu0 0
    %768 = vmatpush1.bf16.msra.mxu0 0
    %769 = vmatprep.subr.bf16.mxu0 0
    %770 = vmatpush1.bf16.msra.mxu0 0
    %771 = vmatprep.subr.bf16.mxu0 0
    %772 = vmatpush1.bf16.msra.mxu0 0
    %773 = vmatprep.subr.bf16.mxu0 0
    %774 = vmatpush1.bf16.msra.mxu0 0
    %775 = vmatprep.subr.bf16.mxu0 0
    %776 = vmatpush1.bf16.msra.mxu0 0
    %777 = vmatprep.subr.bf16.mxu0 0
    %778 = vmatpush1.bf16.msra.mxu0 0
    %779 = vmatprep.subr.bf16.mxu0 0
    %780 = vmatpush1.bf16.msra.mxu0 0
    %781 = vmatprep.subr.bf16.mxu0 0
    %782 = vmatpush1.bf16.msra.mxu0 0
    %783 = vmatprep.mubr.bf16.mxu0 0
    %784 = vmatmul.mubr.bf16.gmra.mrb[0].mxu0 %v746
    %v785 = vpop.f32.mrb[0].mxu0
    %v786 = vadd.f32 0.0, %v785
    %v787 = vpop.f32.mrb[0].mxu0
    %v788 = vpop.f32.mrb[0].mxu0
    %v789 = vpop.f32.mrb[0].mxu0
    %790 = vdwg.mxu0
    %v791 = vrcp.pop %v741
    %v792 = vmul.f32 %v786, %v791
    %794 = vrot.lane.b32.xlu0 %v792, 8
    %v795 = vpop.permute.xlu0 %794
    %797 = vst.msk [vmem:[#allocation2 + $0x8] sm:$0xff] %vm338, %v795
    %798 = vrot.lane.b32.xlu0 %v572, 112
    %v799 = vpop.permute.xlu0 %798
    %800 = vrot.lane.b32.xlu0 %v572, 80
    %v801 = vpop.permute.xlu0 %800
    %v803 = vsel %vm115, %v799, 0
    %v806 = vsel %vm115, %v801, 0
    %808 = vmatprep.subr.bf16.mxu0 0
    %809 = vmatpush1.bf16.xpose.msra.mxu0 %v806
    %810 = vmatprep.subr.bf16.mxu0 0
    %811 = vmatpush1.bf16.xpose.msra.mxu0 0
    %812 = vmatprep.subr.bf16.mxu0 0
    %813 = vmatpush1.bf16.xpose.msra.mxu0 0
    %814 = vmatprep.subr.bf16.mxu0 0
    %815 = vmatpush1.bf16.xpose.msra.mxu0 0
    %816 = vmatprep.subr.bf16.mxu0 0
    %817 = vmatpush1.bf16.xpose.msra.mxu0 0
    %818 = vmatprep.subr.bf16.mxu0 0
    %819 = vmatpush1.bf16.xpose.msra.mxu0 0
    %820 = vmatprep.subr.bf16.mxu0 0
    %821 = vmatpush1.bf16.xpose.msra.mxu0 0
    %822 = vmatprep.subr.bf16.mxu0 0
    %823 = vmatpush1.bf16.xpose.msra.mxu0 0
    %824 = vmatprep.subr.bf16.mxu0 0
    %825 = vmatpush1.bf16.xpose.msra.mxu0 0
    %826 = vmatprep.subr.bf16.mxu0 0
    %827 = vmatpush1.bf16.xpose.msra.mxu0 0
    %828 = vmatprep.subr.bf16.mxu0 0
    %829 = vmatpush1.bf16.xpose.msra.mxu0 0
    %830 = vmatprep.subr.bf16.mxu0 0
    %831 = vmatpush1.bf16.xpose.msra.mxu0 0
    %832 = vmatprep.subr.bf16.mxu0 0
    %833 = vmatpush1.bf16.xpose.msra.mxu0 0
    %834 = vmatprep.subr.bf16.mxu0 0
    %835 = vmatpush1.bf16.xpose.msra.mxu0 0
    %836 = vmatprep.subr.bf16.mxu0 0
    %837 = vmatpush1.bf16.xpose.msra.mxu0 0
    %838 = vmatprep.subr.bf16.mxu0 0
    %839 = vmatpush1.bf16.xpose.msra.mxu0 0
    %840 = vmatprep.mubr.bf16.mxu0 0
    %841 = vmatmul.mubr.bf16.gmra.mrb[0].mxu0 %v803
    %v842 = vpop.f32.mrb[0].mxu0
    %v843 = vadd.f32 0.0, %v842
    %v844 = vpop.f32.mrb[0].mxu0
    %v845 = vpop.f32.mrb[0].mxu0
    %v846 = vpop.f32.mrb[0].mxu0
    %847 = vdwg.mxu0
    %v848 = vsel %vm115, %v843, -inf
    %849 = vmax.xlane.f32.xlu0 %v848
    %v850 = vpop.xlane.xlu0 %849
    %v851 = vsub.f32 %v843, %v850
    %v852 = vmul.f32 %v851, 1.442695
    %v853 = vpow.pop %v852
    %v854 = vsel %vm115, %v853, 0.0
    %855 = vadd.xlane.f32.xlu0 %v854
    %v856 = vpop.xlane.xlu0 %855
    %v857 = vpack.c.bf16 %v853, %v853
    %858 = vrot.lane.b32.xlu0 %v572, 48
    %v859 = vpop.permute.xlu0 %858
    %v861 = vsel %vm115, %v857, 0
    %v864 = vsel %vm177, %v859, 0
    %866 = vmatprep.subr.bf16.mxu0 0
    %867 = vmatpush1.bf16.msra.mxu0 %v864
    %868 = vmatprep.subr.bf16.mxu0 0
    %869 = vmatpush1.bf16.msra.mxu0 0
    %870 = vmatprep.subr.bf16.mxu0 0
    %871 = vmatpush1.bf16.msra.mxu0 0
    %872 = vmatprep.subr.bf16.mxu0 0
    %873 = vmatpush1.bf16.msra.mxu0 0
    %874 = vmatprep.subr.bf16.mxu0 0
    %875 = vmatpush1.bf16.msra.mxu0 0
    %876 = vmatprep.subr.bf16.mxu0 0
    %877 = vmatpush1.bf16.msra.mxu0 0
    %878 = vmatprep.subr.bf16.mxu0 0
    %879 = vmatpush1.bf16.msra.mxu0 0
    %880 = vmatprep.subr.bf16.mxu0 0
    %881 = vmatpush1.bf16.msra.mxu0 0
    %882 = vmatprep.subr.bf16.mxu0 0
    %883 = vmatpush1.bf16.msra.mxu0 0
    %884 = vmatprep.subr.bf16.mxu0 0
    %885 = vmatpush1.bf16.msra.mxu0 0
    %886 = vmatprep.subr.bf16.mxu0 0
    %887 = vmatpush1.bf16.msra.mxu0 0
    %888 = vmatprep.subr.bf16.mxu0 0
    %889 = vmatpush1.bf16.msra.mxu0 0
    %890 = vmatprep.subr.bf16.mxu0 0
    %891 = vmatpush1.bf16.msra.mxu0 0
    %892 = vmatprep.subr.bf16.mxu0 0
    %893 = vmatpush1.bf16.msra.mxu0 0
    %894 = vmatprep.subr.bf16.mxu0 0
    %895 = vmatpush1.bf16.msra.mxu0 0
    %896 = vmatprep.subr.bf16.mxu0 0
    %897 = vmatpush1.bf16.msra.mxu0 0
    %898 = vmatprep.mubr.bf16.mxu0 0
    %899 = vmatmul.mubr.bf16.gmra.mrb[0].mxu0 %v861
    %v900 = vpop.f32.mrb[0].mxu0
    %v901 = vadd.f32 0.0, %v900
    %v902 = vpop.f32.mrb[0].mxu0
    %v903 = vpop.f32.mrb[0].mxu0
    %v904 = vpop.f32.mrb[0].mxu0
    %905 = vdwg.mxu0
    %v906 = vrcp.pop %v856
    %v907 = vmul.f32 %v901, %v906
    %909 = vrot.lane.b32.xlu0 %v907, 16
    %v910 = vpop.permute.xlu0 %909
    %912 = vst.msk [vmem:[#allocation2 + $0x8] sm:$0xff] %vm454, %v910
    %913 = vrot.lane.b32.xlu0 %v572, 104
    %v914 = vpop.permute.xlu0 %913
    %915 = vrot.lane.b32.xlu0 %v572, 72
    %v916 = vpop.permute.xlu0 %915
    %v918 = vsel %vm115, %v914, 0
    %v921 = vsel %vm115, %v916, 0
    %923 = vmatprep.subr.bf16.mxu0 0
    %924 = vmatpush1.bf16.xpose.msra.mxu0 %v921
    %925 = vmatprep.subr.bf16.mxu0 0
    %926 = vmatpush1.bf16.xpose.msra.mxu0 0
    %927 = vmatprep.subr.bf16.mxu0 0
    %928 = vmatpush1.bf16.xpose.msra.mxu0 0
    %929 = vmatprep.subr.bf16.mxu0 0
    %930 = vmatpush1.bf16.xpose.msra.mxu0 0
    %931 = vmatprep.subr.bf16.mxu0 0
    %932 = vmatpush1.bf16.xpose.msra.mxu0 0
    %933 = vmatprep.subr.bf16.mxu0 0
    %934 = vmatpush1.bf16.xpose.msra.mxu0 0
    %935 = vmatprep.subr.bf16.mxu0 0
    %936 = vmatpush1.bf16.xpose.msra.mxu0 0
    %937 = vmatprep.subr.bf16.mxu0 0
    %938 = vmatpush1.bf16.xpose.msra.mxu0 0
    %939 = vmatprep.subr.bf16.mxu0 0
    %940 = vmatpush1.bf16.xpose.msra.mxu0 0
    %941 = vmatprep.subr.bf16.mxu0 0
    %942 = vmatpush1.bf16.xpose.msra.mxu0 0
    %943 = vmatprep.subr.bf16.mxu0 0
    %944 = vmatpush1.bf16.xpose.msra.mxu0 0
    %945 = vmatprep.subr.bf16.mxu0 0
    %946 = vmatpush1.bf16.xpose.msra.mxu0 0
    %947 = vmatprep.subr.bf16.mxu0 0
    %948 = vmatpush1.bf16.xpose.msra.mxu0 0
    %949 = vmatprep.subr.bf16.mxu0 0
    %950 = vmatpush1.bf16.xpose.msra.mxu0 0
    %951 = vmatprep.subr.bf16.mxu0 0
    %952 = vmatpush1.bf16.xpose.msra.mxu0 0
    %953 = vmatprep.subr.bf16.mxu0 0
    %954 = vmatpush1.bf16.xpose.msra.mxu0 0
    %955 = vmatprep.mubr.bf16.mxu0 0
    %956 = vmatmul.mubr.bf16.gmra.mrb[0].mxu0 %v918
    %v957 = vpop.f32.mrb[0].mxu0
    %v958 = vadd.f32 0.0, %v957
    %v959 = vpop.f32.mrb[0].mxu0
    %v960 = vpop.f32.mrb[0].mxu0
    %v961 = vpop.f32.mrb[0].mxu0
    %962 = vdwg.mxu0
    %v963 = vsel %vm115, %v958, -inf
    %964 = vmax.xlane.f32.xlu0 %v963
    %v965 = vpop.xlane.xlu0 %964
    %v966 = vsub.f32 %v958, %v965
    %v967 = vmul.f32 %v966, 1.442695
    %v968 = vpow.pop %v967
    %v969 = vsel %vm115, %v968, 0.0
    %970 = vadd.xlane.f32.xlu0 %v969
    %v971 = vpop.xlane.xlu0 %970
    %v972 = vpack.c.bf16 %v968, %v968
    %973 = vrot.lane.b32.xlu0 %v572, 40
    %v974 = vpop.permute.xlu0 %973
    %v976 = vsel %vm115, %v972, 0
    %v979 = vsel %vm177, %v974, 0
    %981 = vmatprep.subr.bf16.mxu0 0
    %982 = vmatpush1.bf16.msra.mxu0 %v979
    %983 = vmatprep.subr.bf16.mxu0 0
    %984 = vmatpush1.bf16.msra.mxu0 0
    %985 = vmatprep.subr.bf16.mxu0 0
    %986 = vmatpush1.bf16.msra.mxu0 0
    %987 = vmatprep.subr.bf16.mxu0 0
    %988 = vmatpush1.bf16.msra.mxu0 0
    %989 = vmatprep.subr.bf16.mxu0 0
    %990 = vmatpush1.bf16.msra.mxu0 0
    %991 = vmatprep.subr.bf16.mxu0 0
    %992 = vmatpush1.bf16.msra.mxu0 0
    %993 = vmatprep.subr.bf16.mxu0 0
    %994 = vmatpush1.bf16.msra.mxu0 0
    %995 = vmatprep.subr.bf16.mxu0 0
    %996 = vmatpush1.bf16.msra.mxu0 0
    %997 = vmatprep.subr.bf16.mxu0 0
    %998 = vmatpush1.bf16.msra.mxu0 0
    %999 = vmatprep.subr.bf16.mxu0 0
    %1000 = vmatpush1.bf16.msra.mxu0 0
    %1001 = vmatprep.subr.bf16.mxu0 0
    %1002 = vmatpush1.bf16.msra.mxu0 0
    %1003 = vmatprep.subr.bf16.mxu0 0
    %1004 = vmatpush1.bf16.msra.mxu0 0
    %1005 = vmatprep.subr.bf16.mxu0 0
    %1006 = vmatpush1.bf16.msra.mxu0 0
    %1007 = vmatprep.subr.bf16.mxu0 0
    %1008 = vmatpush1.bf16.msra.mxu0 0
    %1009 = vmatprep.subr.bf16.mxu0 0
    %1010 = vmatpush1.bf16.msra.mxu0 0
    %1011 = vmatprep.subr.bf16.mxu0 0
    %1012 = vmatpush1.bf16.msra.mxu0 0
    %1013 = vmatprep.mubr.bf16.mxu0 0
    %1014 = vmatmul.mubr.bf16.gmra.mrb[0].mxu0 %v976
    %v1015 = vpop.f32.mrb[0].mxu0
    %v1016 = vadd.f32 0.0, %v1015
    %v1017 = vpop.f32.mrb[0].mxu0
    %v1018 = vpop.f32.mrb[0].mxu0
    %v1019 = vpop.f32.mrb[0].mxu0
    %1020 = vdwg.mxu0
    %v1021 = vrcp.pop %v971
    %v1022 = vmul.f32 %v1016, %v1021
    %1024 = vrot.lane.b32.xlu0 %v1022, 24
    %v1025 = vpop.permute.xlu0 %1024
    %1027 = vst.msk [vmem:[#allocation2 + $0x8] sm:$0xff] %vm570, %v1025
    %v1028 = vld [vmem:[#allocation2] sm:$0xff]
    %v1029 = vld [vmem:[#allocation2 + $0x8] sm:$0xff]
    %v1030 = vadd.f32 %v1028, %v40
    %v1031 = vadd.f32 %v1029, %v41
    %v1032 = vld [vmem:[%s3] sm:$0x1]
    %v1033 = vld [vmem:[%s4] sm:$0x1]
    %v1034 = vsel %vm66, %v1030, 0.0
    %1035 = vadd.xlane.f32.xlu0 %v1034
    %v1036 = vpop.xlane.xlu0 %1035
    %v1037 = vsel %vm66, %v1031, 0.0
    %1038 = vadd.xlane.f32.xlu0 %v1037
    %v1039 = vpop.xlane.xlu0 %1038
    %v1040 = vrcp.pop 32.0
    %v1041 = vmul.f32 %v1036, %v1040
    %v1042 = vmul.f32 %v1039, %v1040
    %v1043 = vsub.f32 %v1030, %v1041
    %v1044 = vsub.f32 %v1031, %v1042
    %v1045 = vmul.f32 %v1043, %v1043
    %v1046 = vmul.f32 %v1044, %v1044
    %v1047 = vsel %vm66, %v1045, 0.0
    %1048 = vadd.xlane.f32.xlu0 %v1047
    %v1049 = vpop.xlane.xlu0 %1048
    %v1050 = vsel %vm66, %v1046, 0.0
    %1051 = vadd.xlane.f32.xlu0 %v1050
    %v1052 = vpop.xlane.xlu0 %1051
    %v1053 = vmul.f32 %v1049, %v1040
    %v1054 = vmul.f32 %v1052, %v1040
    %v1055 = vadd.f32 %v1053, 1e-05
    %v1056 = vadd.f32 %v1054, 1e-05
    %v1057 = vrsqrt.pop %v1055
    %v1058 = vrsqrt.pop %v1056
    %v1059 = vmul.f32 %v1043, %v1057
    %v1060 = vmul.f32 %v1044, %v1058
    %v1062 = vlaneseq
    %v1063 = vshrl.u32 %v1062, 7
    %v1064 = vsub.s32 0, %v1063
    %v1065 = vrot.slane %v1032, %v1064
    %v1067 = vmul.f32 %v1059, %v1065
    %v1068 = vmul.f32 %v1060, %v1065
    %v1070 = vlaneseq
    %v1071 = vshrl.u32 %v1070, 7
    %v1072 = vsub.s32 0, %v1071
    %v1073 = vrot.slane %v1033, %v1072
    %v1075 = vadd.f32 %v1067, %v1073
    %v1076 = vadd.f32 %v1068, %v1073
    %v1077 = vpack.c.bf16 %v1076, %v1075
    %v1078 = vld [vmem:[%s5] sm:$0xf]
    %v1079 = vld [vmem:[%s5 + $0x4] sm:$0xf]
    %v1080 = vld [vmem:[%s5 + $0x8] sm:$0xf]
    %v1081 = vld [vmem:[%s5 + $0xc] sm:$0xf]
    %v1082 = vld [vmem:[%s6] sm:$0x1]
    %v1084 = vlaneseq
    %v1085 = vshrl.u32 %v1084, 7
    %v1086 = vsub.s32 0, %v1085
    %v1087 = vrot.slane %v1082, %v1086
    %v1093 = vunpack.c.l.b16 %v1078
    %v1094 = vunpack.c.l.b16 %v1079
    %v1095 = vunpack.c.l.b16 %v1080
    %v1096 = vunpack.c.l.b16 %v1081
    %v1097 = vpack.c.b16 %v1094, %v1093
    %v1098 = vpack.c.b16 %v1096, %v1095
    %v1102 = vsel %vm66, %v1077, 0
    %1104 = vmatprep.subr.bf16.mxu0 0
    %1105 = vmatpush1.bf16.msra.mxu0 %v1097
    %1106 = vmatprep.subr.bf16.mxu0 0
    %1107 = vmatpush1.bf16.msra.mxu0 %v1098
    %1108 = vmatprep.subr.bf16.mxu0 0
    %1109 = vmatpush1.bf16.msra.mxu0 0
    %1110 = vmatprep.subr.bf16.mxu0 0
    %1111 = vmatpush1.bf16.msra.mxu0 0
    %1112 = vmatprep.subr.bf16.mxu0 0
    %1113 = vmatpush1.bf16.msra.mxu0 0
    %1114 = vmatprep.subr.bf16.mxu0 0
    %1115 = vmatpush1.bf16.msra.mxu0 0
    %1116 = vmatprep.subr.bf16.mxu0 0
    %1117 = vmatpush1.bf16.msra.mxu0 0
    %1118 = vmatprep.subr.bf16.mxu0 0
    %1119 = vmatpush1.bf16.msra.mxu0 0
    %1120 = vmatprep.subr.bf16.mxu0 0
    %1121 = vmatpush1.bf16.msra.mxu0 0
    %1122 = vmatprep.subr.bf16.mxu0 0
    %1123 = vmatpush1.bf16.msra.mxu0 0
    %1124 = vmatprep.subr.bf16.mxu0 0
    %1125 = vmatpush1.bf16.msra.mxu0 0
    %1126 = vmatprep.subr.bf16.mxu0 0
    %1127 = vmatpush1.bf16.msra.mxu0 0
    %1128 = vmatprep.subr.bf16.mxu0 0
    %1129 = vmatpush1.bf16.msra.mxu0 0
    %1130 = vmatprep.subr.bf16.mxu0 0
    %1131 = vmatpush1.bf16.msra.mxu0 0
    %1132 = vmatprep.subr.bf16.mxu0 0
    %1133 = vmatpush1.bf16.msra.mxu0 0
    %1134 = vmatprep.subr.bf16.mxu0 0
    %1135 = vmatpush1.bf16.msra.mxu0 0
    %1136 = vmatprep.mubr.bf16.mxu0 0
    %1137 = vmatmul.mubr.bf16.gmra.mrb[0].mxu0 %v1102
    %v1138 = vpop.f32.mrb[0].mxu0
    %v1139 = vadd.f32 %v1087, %v1138
    %v1140 = vpop.f32.mrb[0].mxu0
    %v1141 = vpop.f32.mrb[0].mxu0
    %v1142 = vadd.f32 %v1087, %v1141
    %v1143 = vpop.f32.mrb[0].mxu0
    %1144 = vdwg.mxu0
    %v1145 = vmax.f32 %v1139, 0.0
    %v1146 = vmax.f32 %v1142, 0.0
    %v1147 = vpack.c.bf16 %v1146, %v1145
    %v1148 = vld [vmem:[%s7] sm:$0xf]
    %v1149 = vld [vmem:[%s7 + $0x4] sm:$0xf]
    %v1150 = vld [vmem:[%s7 + $0x8] sm:$0xf]
    %v1151 = vld [vmem:[%s7 + $0xc] sm:$0xf]
    %v1152 = vld [vmem:[%s7 + $0x10] sm:$0xf]
    %v1153 = vld [vmem:[%s7 + $0x14] sm:$0xf]
    %v1154 = vld [vmem:[%s7 + $0x18] sm:$0xf]
    %v1155 = vld [vmem:[%s7 + $0x1c] sm:$0xf]
    %v1156 = vld [vmem:[%s7 + $0x20] sm:$0xf]
    %v1157 = vld [vmem:[%s7 + $0x24] sm:$0xf]
    %v1158 = vld [vmem:[%s7 + $0x28] sm:$0xf]
    %v1159 = vld [vmem:[%s7 + $0x2c] sm:$0xf]
    %v1160 = vld [vmem:[%s7 + $0x30] sm:$0xf]
    %v1161 = vld [vmem:[%s7 + $0x34] sm:$0xf]
    %v1162 = vld [vmem:[%s7 + $0x38] sm:$0xf]
    %v1163 = vld [vmem:[%s7 + $0x3c] sm:$0xf]
    %v1164 = vld [vmem:[%s8] sm:$0x1]
    %v1166 = vlaneseq
    %v1167 = vshrl.u32 %v1166, 7
    %v1168 = vsub.s32 0, %v1167
    %v1169 = vrot.slane %v1164, %v1168
    %v1187 = vunpack.c.l.b16 %v1148
    %v1188 = vunpack.c.l.b16 %v1149
    %v1189 = vunpack.c.l.b16 %v1150
    %v1190 = vunpack.c.l.b16 %v1151
    %v1191 = vunpack.c.l.b16 %v1152
    %v1192 = vunpack.c.l.b16 %v1153
    %v1193 = vunpack.c.l.b16 %v1154
    %v1194 = vunpack.c.l.b16 %v1155
    %v1195 = vunpack.c.l.b16 %v1156
    %v1196 = vunpack.c.l.b16 %v1157
    %v1197 = vunpack.c.l.b16 %v1158
    %v1198 = vunpack.c.l.b16 %v1159
    %v1199 = vunpack.c.l.b16 %v1160
    %v1200 = vunpack.c.l.b16 %v1161
    %v1201 = vunpack.c.l.b16 %v1162
    %v1202 = vunpack.c.l.b16 %v1163
    %v1203 = vpack.c.b16 %v1188, %v1187
    %v1204 = vpack.c.b16 %v1190, %v1189
    %v1205 = vpack.c.b16 %v1192, %v1191
    %v1206 = vpack.c.b16 %v1194, %v1193
    %v1207 = vpack.c.b16 %v1196, %v1195
    %v1208 = vpack.c.b16 %v1198, %v1197
    %v1209 = vpack.c.b16 %v1200, %v1199
    %v1210 = vpack.c.b16 %v1202, %v1201
    %1219 = vmatprep.subr.bf16.mxu0 0
    %1220 = vmatpush1.bf16.msra.mxu0 %v1203
    %1221 = vmatprep.subr.bf16.mxu0 0
    %1222 = vmatpush1.bf16.msra.mxu0 %v1204
    %1223 = vmatprep.subr.bf16.mxu0 0
    %1224 = vmatpush1.bf16.msra.mxu0 %v1205
    %1225 = vmatprep.subr.bf16.mxu0 0
    %1226 = vmatpush1.bf16.msra.mxu0 %v1206
    %1227 = vmatprep.subr.bf16.mxu0 0
    %1228 = vmatpush1.bf16.msra.mxu0 %v1207
    %1229 = vmatprep.subr.bf16.mxu0 0
    %1230 = vmatpush1.bf16.msra.mxu0 %v1208
    %1231 = vmatprep.subr.bf16.mxu0 0
    %1232 = vmatpush1.bf16.msra.mxu0 %v1209
    %1233 = vmatprep.subr.bf16.mxu0 0
    %1234 = vmatpush1.bf16.msra.mxu0 %v1210
    %1235 = vmatprep.subr.bf16.mxu0 0
    %1236 = vmatpush1.bf16.msra.mxu0 0
    %1237 = vmatprep.subr.bf16.mxu0 0
    %1238 = vmatpush1.bf16.msra.mxu0 0
    %1239 = vmatprep.subr.bf16.mxu0 0
    %1240 = vmatpush1.bf16.msra.mxu0 0
    %1241 = vmatprep.subr.bf16.mxu0 0
    %1242 = vmatpush1.bf16.msra.mxu0 0
    %1243 = vmatprep.subr.bf16.mxu0 0
    %1244 = vmatpush1.bf16.msra.mxu0 0
    %1245 = vmatprep.subr.bf16.mxu0 0
    %1246 = vmatpush1.bf16.msra.mxu0 0
    %1247 = vmatprep.subr.bf16.mxu0 0
    %1248 = vmatpush1.bf16.msra.mxu0 0
    %1249 = vmatprep.subr.bf16.mxu0 0
    %1250 = vmatpush1.bf16.msra.mxu0 0
    %1251 = vmatprep.mubr.bf16.mxu0 0
    %1252 = vmatmul.mubr.bf16.gmra.mrb[0].mxu0 %v1147
    %v1253 = vpop.f32.mrb[0].mxu0
    %v1254 = vadd.f32 %v1169, %v1253
    %v1255 = vpop.f32.mrb[0].mxu0
    %v1256 = vpop.f32.mrb[0].mxu0
    %v1257 = vadd.f32 %v1169, %v1256
    %v1258 = vpop.f32.mrb[0].mxu0
    %1259 = vdwg.mxu0
    %v1260 = vadd.f32 %v1254, %v1075
    %v1261 = vadd.f32 %v1257, %v1076
    %v1262 = vld [vmem:[%s9] sm:$0x1]
    %v1263 = vld [vmem:[%s10] sm:$0x1]
    %v1264 = vsel %vm66, %v1260, 0.0
    %1265 = vadd.xlane.f32.xlu0 %v1264
    %v1266 = vpop.xlane.xlu0 %1265
    %v1267 = vsel %vm66, %v1261, 0.0
    %1268 = vadd.xlane.f32.xlu0 %v1267
    %v1269 = vpop.xlane.xlu0 %1268
    %v1270 = vmul.f32 %v1266, %v1040
    %v1271 = vmul.f32 %v1269, %v1040
    %v1272 = vsub.f32 %v1260, %v1270
    %v1273 = vsub.f32 %v1261, %v1271
    %v1274 = vmul.f32 %v1272, %v1272
    %v1275 = vmul.f32 %v1273, %v1273
    %v1276 = vsel %vm66, %v1274, 0.0
    %1277 = vadd.xlane.f32.xlu0 %v1276
    %v1278 = vpop.xlane.xlu0 %1277
    %v1279 = vsel %vm66, %v1275, 0.0
    %1280 = vadd.xlane.f32.xlu0 %v1279
    %v1281 = vpop.xlane.xlu0 %1280
    %v1282 = vmul.f32 %v1278, %v1040
    %v1283 = vmul.f32 %v1281, %v1040
    %v1284 = vadd.f32 %v1282, 1e-05
    %v1285 = vadd.f32 %v1283, 1e-05
    %v1286 = vrsqrt.pop %v1284
    %v1287 = vrsqrt.pop %v1285
    %v1288 = vmul.f32 %v1272, %v1286
    %v1289 = vmul.f32 %v1273, %v1287
    %v1291 = vlaneseq
    %v1292 = vshrl.u32 %v1291, 7
    %v1293 = vsub.s32 0, %v1292
    %v1294 = vrot.slane %v1262, %v1293
    %v1296 = vmul.f32 %v1288, %v1294
    %v1297 = vmul.f32 %v1289, %v1294
    %v1299 = vlaneseq
    %v1300 = vshrl.u32 %v1299, 7
    %v1301 = vsub.s32 0, %v1300
    %v1302 = vrot.slane %v1263, %v1301
    %v1304 = vadd.f32 %v1296, %v1302
    %v1305 = vadd.f32 %v1297, %v1302
    %1306 = vst.msk [vmem:[#allocation3] sm:$0xff] %vm66, %v1304
    %1307 = vst.msk [vmem:[#allocation3 + $0x8] sm:$0xff] %vm66, %v1305
    // Predicated region
    $region46: #{tpu_custom_call.1} parent=1 // pred_check
      _
    $region47: #{tpu_custom_call.1} parent=1 // pred_check_branch
      %1309 = sbr.rel (0) target = $region49
    $region48: #{tpu_custom_call.1} parent=1 // pred_region
      %s1311 = ssub.s32 256, 256
      %1312 = vsyncadd [#allocation4], %s1311
      %s1313 = sshll.u32 [#allocation3], 4
      %s1314 = int_to_ptr.vmem [resolvable:$true] %s1313
      %1319 = dma.vmem_to_hbm [thread:$0]  %s1314, 256, %s11, [#allocation4], 128, 128, 8
    $region49: #{tpu_custom_call.1} parent=1 // pred_fallthru
      _
    // Predicated region
    $region50: #{tpu_custom_call.1} parent=1 // pred_check
      _
    $region51: #{tpu_custom_call.1} parent=1 // pred_check_branch
      %1321 = sbr.rel (0) target = $region53
    $region52: #{tpu_custom_call.1} parent=1 // pred_region
      %1322 = dma.done [#allocation4], 256
    $region53: #{tpu_custom_call.1} parent=1 // pred_fallthru
      _
    %1323 = vsyncpa [#allocation4], 1

</llo_original>
